<compile_context>
chip_gen: v6e
topology: v6e:2x2x1
jax: 0.10.0
libtpu: 0.0.40
codegen_flags: <defaults>
</compile_context>

<pallas_src>
import functools
import math

import jax
import jax.numpy as jnp
import numpy as np
from jax.experimental import pallas as pl
from jax.experimental.pallas import tpu as pltpu


# ----------------------------------------------------------------------------
# Fused kernel: one (batch, time-tile) step of
#   Conv2d(1,C,3,2) + ReLU -> depthwise Conv2d(C,C,3,2,groups=C)
#   -> pointwise Conv2d(C,C,1) + ReLU -> Linear(C*F2 -> O) -> x*sqrt(O) + PE
# ----------------------------------------------------------------------------
def _fused_kernel(xw_ref, w1_ref, b1_ref, wd_ref, bd_ref, wp_ref, bp_ref,
                  wl_ref, bl_ref, pe_ref, o_ref, *, t_tile, f1_used, f2_dim, xscale):
    # xw_ref : (1, 1, 4, t_tile+2, idim)  time-mod-4 planes of the input window
    # w1/b1  : (9, C) / (1, C)   first conv          wd/bd : (9, C) / (1, C) depthwise
    # wp/bp  : (C, C) / (1, C)   pointwise           wl/bl : (F2, C, O) / (1, O)
    # pe_ref : (1, t_tile, O)    o_ref : (1, 1, t_tile, O)
    C = w1_ref.shape[1]
    O = o_ref.shape[3]
    A = t_tile + 1                       # rows per time-parity column of y1

    # Hoisted single loads (JAX does not CSE repeated loads / broadcasts).
    w1 = w1_ref[...]
    b1 = b1_ref[...]
    wd = wd_ref[...]
    bd = bd_ref[...]
    wp = wp_ref[...]
    bp = bp_ref[...]
    wl = wl_ref[...]
    bl = bl_ref[...]
    pe = pe_ref[...]

    xw = xw_ref[...]                     # (1, 1, 4, Tq, idim)
    xq0, xq1, xq2, xq3 = xw[0, 0, 0], xw[0, 0, 1], xw[0, 0, 2], xw[0, 0, 3]

    # ---- stage 1: Conv2d(1, C, 3, stride 2) + ReLU on the VPU (MXU stays free).
    # Computed per frequency column and split by output-time parity so the
    # stride-2 depthwise conv below only needs contiguous slices.
    #   y1 row 2a   uses x rows 4a + kh1      -> planes (0, 1, 2), offset 0
    #   y1 row 2a+1 uses x rows 4a + 2 + kh1  -> planes (2, 3, 0), offsets (0, 0, 1)
    even_src = (xq0, xq1, xq2)
    odd_src = (xq2, xq3, xq0)
    odd_off = (0, 0, 1)

    y1_even = []
    y1_odd = []
    for f1 in range(f1_used):
        acc_e = jnp.zeros((A, C), jnp.float32)
        acc_o = jnp.zeros((A, C), jnp.float32)
        for kh1 in range(3):
            xe = even_src[kh1]
            xo = odd_src[kh1]
            oo = odd_off[kh1]
            for kw1 in range(3):
                col = 2 * f1 + kw1
                wtap = w1[kh1 * 3 + kw1][None, :]                    # (1, C)
                acc_e = acc_e + xe[0:A, col:col + 1] * wtap          # (A,1)*(1,C)
                acc_o = acc_o + xo[oo:oo + A, col:col + 1] * wtap
        y1_even.append(jnp.maximum(acc_e + b1, 0.0))
        y1_odd.append(jnp.maximum(acc_o + b1, 0.0))

    # ---- stage 2 per output frequency column: depthwise 3x3 stride-2 conv (VPU),
    # pointwise 1x1 conv + ReLU (MXU, K=C) and its Linear contribution (MXU, K=C),
    # accumulated into a single (t_tile, O) output tile.
    out_acc = jnp.zeros((t_tile, O), jnp.float32)
    for f2 in range(f2_dim):
        yd = jnp.zeros((t_tile, C), jnp.float32)
        for kh2 in range(3):
            for kw2 in range(3):
                j1 = 2 * f2 + kw2
                wtap = wd[kh2 * 3 + kw2][None, :]                    # (1, C)
                if kh2 == 0:
                    src = y1_even[j1][0:t_tile]
                elif kh2 == 1:
                    src = y1_odd[j1][0:t_tile]
                else:
                    src = y1_even[j1][1:t_tile + 1]
                yd = yd + src * wtap
        yd = yd + bd
        yp = jnp.dot(yd, wp, preferred_element_type=jnp.float32) + bp
        yp = jnp.maximum(yp, 0.0)                                    # (t_tile, C)
        out_acc = out_acc + jnp.dot(yp, wl[f2], preferred_element_type=jnp.float32)

    out = (out_acc + bl) * xscale + pe[0]
    o_ref[...] = out[None, None]


# ----------------------------------------------------------------------------
# Wrapper: glue (cheap re-layouts of x / weights) + fused pallas_call
# ----------------------------------------------------------------------------
def depthwise_conv2d_subsampling_forward(x, x_mask, params, pe, xscale, t_tile=None):
    W1, b1, Wd, bd, Wp, bp, Wl, bl = params
    B, T, idim = x.shape
    C = W1.shape[0]                       # odim (conv channels)
    O = Wl.shape[0]                       # Linear output dim
    T1 = (T - 3) // 2 + 1
    F1 = (idim - 3) // 2 + 1
    T2 = (T1 - 3) // 2 + 1
    F2 = (F1 - 3) // 2 + 1
    assert pe.shape[0] >= T2, "positional-encoding table shorter than output length"

    if t_tile is None:
        t_tile = max(1, min(64, T2))
    nT2 = pl.cdiv(T2, t_tile)
    Tq = t_tile + 2                       # quarter-rows per plane per tile (with halo)

    # glue: zero-pad time, split into time-mod-4 planes, window per time tile.
    # Total activation bytes DMA'd ~= 1x input (vs 9x im2col before).
    T_need = 4 * nT2 * t_tile + 8
    x_pad = jnp.pad(x, ((0, 0), (0, max(0, T_need - T)), (0, 0)))
    planes = jnp.stack(
        [x_pad[:, r::4, :][:, :nT2 * t_tile + 2, :] for r in range(4)], axis=1)
    xw = jnp.stack(
        [planes[:, :, i * t_tile:i * t_tile + Tq, :] for i in range(nT2)], axis=1)
    # xw: (B, nT2, 4, Tq, idim)

    # glue: weight re-layouts (channels-last, lanes = C / O).
    w1r = jnp.transpose(W1.reshape(C, 9))                 # (9, C)
    wdr = jnp.transpose(Wd.reshape(C, 9))                 # (9, C)
    wpr = jnp.transpose(Wp[:, :, 0, 0])                   # (Cin, Cout)
    # PyTorch flattens (c, f) channel-major: Linear input index = c*F2 + f.
    wlr = jnp.transpose(Wl.reshape(O, C, F2), (2, 1, 0))  # (F2, C, O)

    # glue: PE rows padded to a whole number of time tiles.
    pe_r = jnp.pad(pe[:T2].astype(jnp.float32), ((0, nT2 * t_tile - T2), (0, 0)))
    pe_r = pe_r.reshape(nT2, t_tile, O)

    kern = functools.partial(_fused_kernel, t_tile=t_tile, f1_used=2 * F2 + 1,
                             f2_dim=F2, xscale=float(xscale))
    out = pl.pallas_call(
        kern,
        out_shape=jax.ShapeDtypeStruct((B, nT2, t_tile, O), jnp.float32),
        grid=(B, nT2),
        in_specs=[
            pl.BlockSpec((1, 1, 4, Tq, idim), lambda b, i: (b, i, 0, 0, 0)),
            pl.BlockSpec((9, C), lambda b, i: (0, 0)),
            pl.BlockSpec((1, C), lambda b, i: (0, 0)),
            pl.BlockSpec((9, C), lambda b, i: (0, 0)),
            pl.BlockSpec((1, C), lambda b, i: (0, 0)),
            pl.BlockSpec((C, C), lambda b, i: (0, 0)),
            pl.BlockSpec((1, C), lambda b, i: (0, 0)),
            pl.BlockSpec((F2, C, O), lambda b, i: (0, 0, 0)),
            pl.BlockSpec((1, O), lambda b, i: (0, 0)),
            pl.BlockSpec((1, t_tile, O), lambda b, i: (i, 0, 0)),
        ],
        out_specs=pl.BlockSpec((1, 1, t_tile, O), lambda b, i: (b, i, 0, 0)),
        compiler_params=pltpu.CompilerParams(
            dimension_semantics=("parallel", "parallel"),
            vmem_limit_bytes=48 * 1024 * 1024,
        ),
    )(xw, w1r, b1.reshape(1, C), wdr, bd.reshape(1, C), wpr, bp.reshape(1, C),
      wlr, bl.reshape(1, O), pe_r)

    out = out.reshape(B, nT2 * t_tile, O)[:, :T2, :]
    if x_mask is None:
        return out, None
    return out, x_mask[:, :, :-2:2][:, :, :-2:2]


# ----------------------------------------------------------------------------
# Pure-JAX reference (NCHW, mirrors the PyTorch module exactly)
# ----------------------------------------------------------------------------
def reference_forward(x, x_mask, params, pe, xscale):
    W1, b1, Wd, bd, Wp, bp, Wl, bl = params
    dn = ("NCHW", "OIHW", "NCHW")
    prec = jax.lax.Precision.HIGHEST
    h = x[:, None, :, :]
    h = jax.lax.conv_general_dilated(h, W1, (2, 2), "VALID",
                                     dimension_numbers=dn, precision=prec)
    h = jnp.maximum(h + b1[None, :, None, None], 0.0)
    h = jax.lax.conv_general_dilated(h, Wd, (2, 2), "VALID", dimension_numbers=dn,
                                     feature_group_count=W1.shape[0], precision=prec)
    h = h + bd[None, :, None, None]
    h = jax.lax.conv_general_dilated(h, Wp, (1, 1), "VALID",
                                     dimension_numbers=dn, precision=prec)
    h = jnp.maximum(h + bp[None, :, None, None], 0.0)
    B, C, Tt, Ff = h.shape
    hf = jnp.transpose(h, (0, 2, 1, 3)).reshape(B, Tt, C * Ff)
    out = jnp.dot(hf, Wl.T, precision=prec) + bl
    out = out * xscale + pe[None, :Tt]
    if x_mask is None:
        return out, None
    return out, x_mask[:, :, :-2:2][:, :, :-2:2]


def sinusoidal_pe(length, d_model):
    position = jnp.arange(length, dtype=jnp.float32)[:, None]
    div_term = jnp.exp(jnp.arange(0, d_model, 2, dtype=jnp.float32)
                       * -(math.log(10000.0) / d_model))
    pe = jnp.zeros((length, d_model), dtype=jnp.float32)
    pe = pe.at[:, 0::2].set(jnp.sin(position * div_term))
    pe = pe.at[:, 1::2].set(jnp.cos(position * div_term))
    return pe


if __name__ == "__main__":
    B, T, idim, odim = 2, 16, 16, 32
    T1, F1 = (T - 3) // 2 + 1, (idim - 3) // 2 + 1
    T2, F2 = (T1 - 3) // 2 + 1, (F1 - 3) // 2 + 1
    xscale = math.sqrt(odim)

    key = jax.random.PRNGKey(0)
    ks = jax.random.split(key, 10)
    W1 = jax.random.normal(ks[0], (odim, 1, 3, 3), jnp.float32) * (1.0 / 3.0)
    b1 = jax.random.normal(ks[1], (odim,), jnp.float32) * 0.01
    Wd = jax.random.normal(ks[2], (odim, 1, 3, 3), jnp.float32) * (1.0 / 3.0)
    bd = jax.random.normal(ks[3], (odim,), jnp.float32) * 0.01
    Wp = jax.random.normal(ks[4], (odim, odim, 1, 1), jnp.float32) * (1.0 / math.sqrt(odim))
    bp = jax.random.normal(ks[5], (odim,), jnp.float32) * 0.01
    Wl = jax.random.normal(ks[6], (odim, odim * F2), jnp.float32) * (1.0 / math.sqrt(odim * F2))
    bl = jax.random.normal(ks[7], (odim,), jnp.float32) * 0.01
    params = (W1, b1, Wd, bd, Wp, bp, Wl, bl)

    x = jax.random.normal(ks[8], (B, T, idim), jnp.float32)
    x_mask = jnp.ones((B, 1, T), dtype=bool)
    pe = sinusoidal_pe(64, odim)

    # t_tile=2 exercises multiple time tiles (nT2=2) + the padded remainder path.
    out, mask = depthwise_conv2d_subsampling_forward(x, x_mask, params, pe, xscale,
                                                     t_tile=2)
    out = jax.block_until_ready(out)
    mask = jax.block_until_ready(mask)

    out_ref, mask_ref = reference_forward(x, x_mask, params, pe, xscale)
    assert out.shape == (B, T2, odim), out.shape
    assert mask.shape == (B, 1, T2), mask.shape
    np.testing.assert_allclose(np.asarray(out), np.asarray(out_ref),
                               rtol=2e-3, atol=2e-3)
    np.testing.assert_array_equal(np.asarray(mask), np.asarray(mask_ref))

    print("KERNEL_OK")
</pallas_src>

<mosaic_0001>
module attributes {stable_mosaic.version = 11 : i64} {
  func.func @_fused_kernel(%arg0: i32, %arg1: i32, %arg2: memref<1x1x4x4x16xf32, #tpu.memory_space<vmem>>, %arg3: memref<9x32xf32, #tpu.memory_space<vmem>>, %arg4: memref<1x32xf32, #tpu.memory_space<vmem>>, %arg5: memref<9x32xf32, #tpu.memory_space<vmem>>, %arg6: memref<1x32xf32, #tpu.memory_space<vmem>>, %arg7: memref<32x32xf32, #tpu.memory_space<vmem>>, %arg8: memref<1x32xf32, #tpu.memory_space<vmem>>, %arg9: memref<3x32x32xf32, #tpu.memory_space<vmem>>, %arg10: memref<1x32xf32, #tpu.memory_space<vmem>>, %arg11: memref<1x2x32xf32, #tpu.memory_space<vmem>>, %arg12: memref<1x1x2x32xf32, #tpu.memory_space<vmem>>) attributes {dimension_semantics = [#tpu.dimension_semantics<parallel>, #tpu.dimension_semantics<parallel>], iteration_bounds = array<i64: 2, 2>, scalar_prefetch = 0 : i64, scratch_operands = 0 : i64, tpu.core_type = #tpu.core_type<tc>, window_params = [{transform_indices = @transform_0, window_bounds = array<i64: 1, 1, 4, 4, 16>}, {pipeline_mode = #tpu.pipeline_mode<synchronous>, transform_indices = @transform_1, window_bounds = array<i64: 9, 32>}, {pipeline_mode = #tpu.pipeline_mode<synchronous>, transform_indices = @transform_2, window_bounds = array<i64: 1, 32>}, {pipeline_mode = #tpu.pipeline_mode<synchronous>, transform_indices = @transform_3, window_bounds = array<i64: 9, 32>}, {pipeline_mode = #tpu.pipeline_mode<synchronous>, transform_indices = @transform_4, window_bounds = array<i64: 1, 32>}, {pipeline_mode = #tpu.pipeline_mode<synchronous>, transform_indices = @transform_5, window_bounds = array<i64: 32, 32>}, {pipeline_mode = #tpu.pipeline_mode<synchronous>, transform_indices = @transform_6, window_bounds = array<i64: 1, 32>}, {pipeline_mode = #tpu.pipeline_mode<synchronous>, transform_indices = @transform_7, window_bounds = array<i64: 3, 32, 32>}, {pipeline_mode = #tpu.pipeline_mode<synchronous>, transform_indices = @transform_8, window_bounds = array<i64: 1, 32>}, {transform_indices = @transform_9, window_bounds = array<i64: 1, 2, 32>}, {transform_indices = @transform_10, window_bounds = array<i64: 1, 1, 2, 32>}]} {
    %c0 = arith.constant 0 : index
    %c0_0 = arith.constant 0 : index
    %0 = vector.load %arg3[%c0, %c0_0] : memref<9x32xf32, #tpu.memory_space<vmem>>, vector<9x32xf32>
    %c0_1 = arith.constant 0 : index
    %c0_2 = arith.constant 0 : index
    %1 = vector.load %arg4[%c0_1, %c0_2] : memref<1x32xf32, #tpu.memory_space<vmem>>, vector<1x32xf32>
    %c0_3 = arith.constant 0 : index
    %c0_4 = arith.constant 0 : index
    %2 = vector.load %arg5[%c0_3, %c0_4] : memref<9x32xf32, #tpu.memory_space<vmem>>, vector<9x32xf32>
    %c0_5 = arith.constant 0 : index
    %c0_6 = arith.constant 0 : index
    %3 = vector.load %arg6[%c0_5, %c0_6] : memref<1x32xf32, #tpu.memory_space<vmem>>, vector<1x32xf32>
    %c0_7 = arith.constant 0 : index
    %c0_8 = arith.constant 0 : index
    %4 = vector.load %arg7[%c0_7, %c0_8] : memref<32x32xf32, #tpu.memory_space<vmem>>, vector<32x32xf32>
    %c0_9 = arith.constant 0 : index
    %c0_10 = arith.constant 0 : index
    %5 = vector.load %arg8[%c0_9, %c0_10] : memref<1x32xf32, #tpu.memory_space<vmem>>, vector<1x32xf32>
    %c0_11 = arith.constant 0 : index
    %c0_12 = arith.constant 0 : index
    %c0_13 = arith.constant 0 : index
    %6 = vector.load %arg9[%c0_11, %c0_12, %c0_13] : memref<3x32x32xf32, #tpu.memory_space<vmem>>, vector<3x32x32xf32>
    %c0_14 = arith.constant 0 : index
    %c0_15 = arith.constant 0 : index
    %7 = vector.load %arg10[%c0_14, %c0_15] : memref<1x32xf32, #tpu.memory_space<vmem>>, vector<1x32xf32>
    %c0_16 = arith.constant 0 : index
    %c0_17 = arith.constant 0 : index
    %c0_18 = arith.constant 0 : index
    %8 = vector.load %arg11[%c0_16, %c0_17, %c0_18] : memref<1x2x32xf32, #tpu.memory_space<vmem>>, vector<1x2x32xf32>
    %c0_19 = arith.constant 0 : index
    %c0_20 = arith.constant 0 : index
    %c0_21 = arith.constant 0 : index
    %c0_22 = arith.constant 0 : index
    %c0_23 = arith.constant 0 : index
    %9 = vector.load %arg2[%c0_19, %c0_20, %c0_21, %c0_22, %c0_23] : memref<1x1x4x4x16xf32, #tpu.memory_space<vmem>>, vector<1x1x4x4x16xf32>
    %10 = vector.extract_strided_slice %9 {offsets = [0, 0, 0, 0, 0], sizes = [1, 1, 1, 4, 16], strides = [1, 1, 1, 1, 1]} : vector<1x1x4x4x16xf32> to vector<1x1x1x4x16xf32>
    %11 = vector.shape_cast %10 : vector<1x1x1x4x16xf32> to vector<4x16xf32>
    %12 = vector.extract_strided_slice %9 {offsets = [0, 0, 1, 0, 0], sizes = [1, 1, 1, 4, 16], strides = [1, 1, 1, 1, 1]} : vector<1x1x4x4x16xf32> to vector<1x1x1x4x16xf32>
    %13 = vector.shape_cast %12 : vector<1x1x1x4x16xf32> to vector<4x16xf32>
    %14 = vector.extract_strided_slice %9 {offsets = [0, 0, 2, 0, 0], sizes = [1, 1, 1, 4, 16], strides = [1, 1, 1, 1, 1]} : vector<1x1x4x4x16xf32> to vector<1x1x1x4x16xf32>
    %15 = vector.shape_cast %14 : vector<1x1x1x4x16xf32> to vector<4x16xf32>
    %16 = vector.extract_strided_slice %9 {offsets = [0, 0, 3, 0, 0], sizes = [1, 1, 1, 4, 16], strides = [1, 1, 1, 1, 1]} : vector<1x1x4x4x16xf32> to vector<1x1x1x4x16xf32>
    %17 = vector.shape_cast %16 : vector<1x1x1x4x16xf32> to vector<4x16xf32>
    %cst = arith.constant 0.000000e+00 : f32
    %18 = vector.broadcast %cst : f32 to vector<3x32xf32>
    %cst_24 = arith.constant 0.000000e+00 : f32
    %19 = vector.broadcast %cst_24 : f32 to vector<3x32xf32>
    %20 = vector.extract_strided_slice %0 {offsets = [0, 0], sizes = [1, 32], strides = [1, 1]} : vector<9x32xf32> to vector<1x32xf32>
    %21 = vector.shape_cast %20 : vector<1x32xf32> to vector<32xf32>
    %22 = vector.shape_cast %21 : vector<32xf32> to vector<1x32xf32>
    %23 = vector.extract_strided_slice %11 {offsets = [0, 0], sizes = [3, 1], strides = [1, 1]} : vector<4x16xf32> to vector<3x1xf32>
    %24 = vector.broadcast %23 : vector<3x1xf32> to vector<3x32xf32>
    %25 = vector.broadcast %22 : vector<1x32xf32> to vector<3x32xf32>
    %26 = arith.mulf %24, %25 : vector<3x32xf32>
    %27 = arith.addf %18, %26 : vector<3x32xf32>
    %28 = vector.extract_strided_slice %15 {offsets = [0, 0], sizes = [3, 1], strides = [1, 1]} : vector<4x16xf32> to vector<3x1xf32>
    %29 = vector.broadcast %28 : vector<3x1xf32> to vector<3x32xf32>
    %30 = vector.broadcast %22 : vector<1x32xf32> to vector<3x32xf32>
    %31 = arith.mulf %29, %30 : vector<3x32xf32>
    %32 = arith.addf %19, %31 : vector<3x32xf32>
    %33 = vector.extract_strided_slice %0 {offsets = [1, 0], sizes = [1, 32], strides = [1, 1]} : vector<9x32xf32> to vector<1x32xf32>
    %34 = vector.shape_cast %33 : vector<1x32xf32> to vector<32xf32>
    %35 = vector.shape_cast %34 : vector<32xf32> to vector<1x32xf32>
    %36 = vector.extract_strided_slice %11 {offsets = [0, 1], sizes = [3, 1], strides = [1, 1]} : vector<4x16xf32> to vector<3x1xf32>
    %37 = vector.broadcast %36 : vector<3x1xf32> to vector<3x32xf32>
    %38 = vector.broadcast %35 : vector<1x32xf32> to vector<3x32xf32>
    %39 = arith.mulf %37, %38 : vector<3x32xf32>
    %40 = arith.addf %27, %39 : vector<3x32xf32>
    %41 = vector.extract_strided_slice %15 {offsets = [0, 1], sizes = [3, 1], strides = [1, 1]} : vector<4x16xf32> to vector<3x1xf32>
    %42 = vector.broadcast %41 : vector<3x1xf32> to vector<3x32xf32>
    %43 = vector.broadcast %35 : vector<1x32xf32> to vector<3x32xf32>
    %44 = arith.mulf %42, %43 : vector<3x32xf32>
    %45 = arith.addf %32, %44 : vector<3x32xf32>
    %46 = vector.extract_strided_slice %0 {offsets = [2, 0], sizes = [1, 32], strides = [1, 1]} : vector<9x32xf32> to vector<1x32xf32>
    %47 = vector.shape_cast %46 : vector<1x32xf32> to vector<32xf32>
    %48 = vector.shape_cast %47 : vector<32xf32> to vector<1x32xf32>
    %49 = vector.extract_strided_slice %11 {offsets = [0, 2], sizes = [3, 1], strides = [1, 1]} : vector<4x16xf32> to vector<3x1xf32>
    %50 = vector.broadcast %49 : vector<3x1xf32> to vector<3x32xf32>
    %51 = vector.broadcast %48 : vector<1x32xf32> to vector<3x32xf32>
    %52 = arith.mulf %50, %51 : vector<3x32xf32>
    %53 = arith.addf %40, %52 : vector<3x32xf32>
    %54 = vector.extract_strided_slice %15 {offsets = [0, 2], sizes = [3, 1], strides = [1, 1]} : vector<4x16xf32> to vector<3x1xf32>
    %55 = vector.broadcast %54 : vector<3x1xf32> to vector<3x32xf32>
    %56 = vector.broadcast %48 : vector<1x32xf32> to vector<3x32xf32>
    %57 = arith.mulf %55, %56 : vector<3x32xf32>
    %58 = arith.addf %45, %57 : vector<3x32xf32>
    %59 = vector.extract_strided_slice %0 {offsets = [3, 0], sizes = [1, 32], strides = [1, 1]} : vector<9x32xf32> to vector<1x32xf32>
    %60 = vector.shape_cast %59 : vector<1x32xf32> to vector<32xf32>
    %61 = vector.shape_cast %60 : vector<32xf32> to vector<1x32xf32>
    %62 = vector.extract_strided_slice %13 {offsets = [0, 0], sizes = [3, 1], strides = [1, 1]} : vector<4x16xf32> to vector<3x1xf32>
    %63 = vector.broadcast %62 : vector<3x1xf32> to vector<3x32xf32>
    %64 = vector.broadcast %61 : vector<1x32xf32> to vector<3x32xf32>
    %65 = arith.mulf %63, %64 : vector<3x32xf32>
    %66 = arith.addf %53, %65 : vector<3x32xf32>
    %67 = vector.extract_strided_slice %17 {offsets = [0, 0], sizes = [3, 1], strides = [1, 1]} : vector<4x16xf32> to vector<3x1xf32>
    %68 = vector.broadcast %67 : vector<3x1xf32> to vector<3x32xf32>
    %69 = vector.broadcast %61 : vector<1x32xf32> to vector<3x32xf32>
    %70 = arith.mulf %68, %69 : vector<3x32xf32>
    %71 = arith.addf %58, %70 : vector<3x32xf32>
    %72 = vector.extract_strided_slice %0 {offsets = [4, 0], sizes = [1, 32], strides = [1, 1]} : vector<9x32xf32> to vector<1x32xf32>
    %73 = vector.shape_cast %72 : vector<1x32xf32> to vector<32xf32>
    %74 = vector.shape_cast %73 : vector<32xf32> to vector<1x32xf32>
    %75 = vector.extract_strided_slice %13 {offsets = [0, 1], sizes = [3, 1], strides = [1, 1]} : vector<4x16xf32> to vector<3x1xf32>
    %76 = vector.broadcast %75 : vector<3x1xf32> to vector<3x32xf32>
    %77 = vector.broadcast %74 : vector<1x32xf32> to vector<3x32xf32>
    %78 = arith.mulf %76, %77 : vector<3x32xf32>
    %79 = arith.addf %66, %78 : vector<3x32xf32>
    %80 = vector.extract_strided_slice %17 {offsets = [0, 1], sizes = [3, 1], strides = [1, 1]} : vector<4x16xf32> to vector<3x1xf32>
    %81 = vector.broadcast %80 : vector<3x1xf32> to vector<3x32xf32>
    %82 = vector.broadcast %74 : vector<1x32xf32> to vector<3x32xf32>
    %83 = arith.mulf %81, %82 : vector<3x32xf32>
    %84 = arith.addf %71, %83 : vector<3x32xf32>
    %85 = vector.extract_strided_slice %0 {offsets = [5, 0], sizes = [1, 32], strides = [1, 1]} : vector<9x32xf32> to vector<1x32xf32>
    %86 = vector.shape_cast %85 : vector<1x32xf32> to vector<32xf32>
    %87 = vector.shape_cast %86 : vector<32xf32> to vector<1x32xf32>
    %88 = vector.extract_strided_slice %13 {offsets = [0, 2], sizes = [3, 1], strides = [1, 1]} : vector<4x16xf32> to vector<3x1xf32>
    %89 = vector.broadcast %88 : vector<3x1xf32> to vector<3x32xf32>
    %90 = vector.broadcast %87 : vector<1x32xf32> to vector<3x32xf32>
    %91 = arith.mulf %89, %90 : vector<3x32xf32>
    %92 = arith.addf %79, %91 : vector<3x32xf32>
    %93 = vector.extract_strided_slice %17 {offsets = [0, 2], sizes = [3, 1], strides = [1, 1]} : vector<4x16xf32> to vector<3x1xf32>
    %94 = vector.broadcast %93 : vector<3x1xf32> to vector<3x32xf32>
    %95 = vector.broadcast %87 : vector<1x32xf32> to vector<3x32xf32>
    %96 = arith.mulf %94, %95 : vector<3x32xf32>
    %97 = arith.addf %84, %96 : vector<3x32xf32>
    %98 = vector.extract_strided_slice %0 {offsets = [6, 0], sizes = [1, 32], strides = [1, 1]} : vector<9x32xf32> to vector<1x32xf32>
    %99 = vector.shape_cast %98 : vector<1x32xf32> to vector<32xf32>
    %100 = vector.shape_cast %99 : vector<32xf32> to vector<1x32xf32>
    %101 = vector.extract_strided_slice %15 {offsets = [0, 0], sizes = [3, 1], strides = [1, 1]} : vector<4x16xf32> to vector<3x1xf32>
    %102 = vector.broadcast %101 : vector<3x1xf32> to vector<3x32xf32>
    %103 = vector.broadcast %100 : vector<1x32xf32> to vector<3x32xf32>
    %104 = arith.mulf %102, %103 : vector<3x32xf32>
    %105 = arith.addf %92, %104 : vector<3x32xf32>
    %106 = vector.extract_strided_slice %11 {offsets = [1, 0], sizes = [3, 1], strides = [1, 1]} : vector<4x16xf32> to vector<3x1xf32>
    %107 = vector.broadcast %106 : vector<3x1xf32> to vector<3x32xf32>
    %108 = vector.broadcast %100 : vector<1x32xf32> to vector<3x32xf32>
    %109 = arith.mulf %107, %108 : vector<3x32xf32>
    %110 = arith.addf %97, %109 : vector<3x32xf32>
    %111 = vector.extract_strided_slice %0 {offsets = [7, 0], sizes = [1, 32], strides = [1, 1]} : vector<9x32xf32> to vector<1x32xf32>
    %112 = vector.shape_cast %111 : vector<1x32xf32> to vector<32xf32>
    %113 = vector.shape_cast %112 : vector<32xf32> to vector<1x32xf32>
    %114 = vector.extract_strided_slice %15 {offsets = [0, 1], sizes = [3, 1], strides = [1, 1]} : vector<4x16xf32> to vector<3x1xf32>
    %115 = vector.broadcast %114 : vector<3x1xf32> to vector<3x32xf32>
    %116 = vector.broadcast %113 : vector<1x32xf32> to vector<3x32xf32>
    %117 = arith.mulf %115, %116 : vector<3x32xf32>
    %118 = arith.addf %105, %117 : vector<3x32xf32>
    %119 = vector.extract_strided_slice %11 {offsets = [1, 1], sizes = [3, 1], strides = [1, 1]} : vector<4x16xf32> to vector<3x1xf32>
    %120 = vector.broadcast %119 : vector<3x1xf32> to vector<3x32xf32>
    %121 = vector.broadcast %113 : vector<1x32xf32> to vector<3x32xf32>
    %122 = arith.mulf %120, %121 : vector<3x32xf32>
    %123 = arith.addf %110, %122 : vector<3x32xf32>
    %124 = vector.extract_strided_slice %0 {offsets = [8, 0], sizes = [1, 32], strides = [1, 1]} : vector<9x32xf32> to vector<1x32xf32>
    %125 = vector.shape_cast %124 : vector<1x32xf32> to vector<32xf32>
    %126 = vector.shape_cast %125 : vector<32xf32> to vector<1x32xf32>
    %127 = vector.extract_strided_slice %15 {offsets = [0, 2], sizes = [3, 1], strides = [1, 1]} : vector<4x16xf32> to vector<3x1xf32>
    %128 = vector.broadcast %127 : vector<3x1xf32> to vector<3x32xf32>
    %129 = vector.broadcast %126 : vector<1x32xf32> to vector<3x32xf32>
    %130 = arith.mulf %128, %129 : vector<3x32xf32>
    %131 = arith.addf %118, %130 : vector<3x32xf32>
    %132 = vector.extract_strided_slice %11 {offsets = [1, 2], sizes = [3, 1], strides = [1, 1]} : vector<4x16xf32> to vector<3x1xf32>
    %133 = vector.broadcast %132 : vector<3x1xf32> to vector<3x32xf32>
    %134 = vector.broadcast %126 : vector<1x32xf32> to vector<3x32xf32>
    %135 = arith.mulf %133, %134 : vector<3x32xf32>
    %136 = arith.addf %123, %135 : vector<3x32xf32>
    %137 = vector.broadcast %1 : vector<1x32xf32> to vector<3x32xf32>
    %138 = arith.addf %131, %137 : vector<3x32xf32>
    %cst_25 = arith.constant 0.000000e+00 : f32
    %139 = vector.broadcast %cst_25 : f32 to vector<3x32xf32>
    %140 = arith.maximumf %138, %139 : vector<3x32xf32>
    %141 = vector.broadcast %1 : vector<1x32xf32> to vector<3x32xf32>
    %142 = arith.addf %136, %141 : vector<3x32xf32>
    %cst_26 = arith.constant 0.000000e+00 : f32
    %143 = vector.broadcast %cst_26 : f32 to vector<3x32xf32>
    %144 = arith.maximumf %142, %143 : vector<3x32xf32>
    %cst_27 = arith.constant 0.000000e+00 : f32
    %145 = vector.broadcast %cst_27 : f32 to vector<3x32xf32>
    %cst_28 = arith.constant 0.000000e+00 : f32
    %146 = vector.broadcast %cst_28 : f32 to vector<3x32xf32>
    %147 = vector.extract_strided_slice %0 {offsets = [0, 0], sizes = [1, 32], strides = [1, 1]} : vector<9x32xf32> to vector<1x32xf32>
    %148 = vector.shape_cast %147 : vector<1x32xf32> to vector<32xf32>
    %149 = vector.shape_cast %148 : vector<32xf32> to vector<1x32xf32>
    %150 = vector.extract_strided_slice %11 {offsets = [0, 2], sizes = [3, 1], strides = [1, 1]} : vector<4x16xf32> to vector<3x1xf32>
    %151 = vector.broadcast %150 : vector<3x1xf32> to vector<3x32xf32>
    %152 = vector.broadcast %149 : vector<1x32xf32> to vector<3x32xf32>
    %153 = arith.mulf %151, %152 : vector<3x32xf32>
    %154 = arith.addf %145, %153 : vector<3x32xf32>
    %155 = vector.extract_strided_slice %15 {offsets = [0, 2], sizes = [3, 1], strides = [1, 1]} : vector<4x16xf32> to vector<3x1xf32>
    %156 = vector.broadcast %155 : vector<3x1xf32> to vector<3x32xf32>
    %157 = vector.broadcast %149 : vector<1x32xf32> to vector<3x32xf32>
    %158 = arith.mulf %156, %157 : vector<3x32xf32>
    %159 = arith.addf %146, %158 : vector<3x32xf32>
    %160 = vector.extract_strided_slice %0 {offsets = [1, 0], sizes = [1, 32], strides = [1, 1]} : vector<9x32xf32> to vector<1x32xf32>
    %161 = vector.shape_cast %160 : vector<1x32xf32> to vector<32xf32>
    %162 = vector.shape_cast %161 : vector<32xf32> to vector<1x32xf32>
    %163 = vector.extract_strided_slice %11 {offsets = [0, 3], sizes = [3, 1], strides = [1, 1]} : vector<4x16xf32> to vector<3x1xf32>
    %164 = vector.broadcast %163 : vector<3x1xf32> to vector<3x32xf32>
    %165 = vector.broadcast %162 : vector<1x32xf32> to vector<3x32xf32>
    %166 = arith.mulf %164, %165 : vector<3x32xf32>
    %167 = arith.addf %154, %166 : vector<3x32xf32>
    %168 = vector.extract_strided_slice %15 {offsets = [0, 3], sizes = [3, 1], strides = [1, 1]} : vector<4x16xf32> to vector<3x1xf32>
    %169 = vector.broadcast %168 : vector<3x1xf32> to vector<3x32xf32>
    %170 = vector.broadcast %162 : vector<1x32xf32> to vector<3x32xf32>
    %171 = arith.mulf %169, %170 : vector<3x32xf32>
    %172 = arith.addf %159, %171 : vector<3x32xf32>
    %173 = vector.extract_strided_slice %0 {offsets = [2, 0], sizes = [1, 32], strides = [1, 1]} : vector<9x32xf32> to vector<1x32xf32>
    %174 = vector.shape_cast %173 : vector<1x32xf32> to vector<32xf32>
    %175 = vector.shape_cast %174 : vector<32xf32> to vector<1x32xf32>
    %176 = vector.extract_strided_slice %11 {offsets = [0, 4], sizes = [3, 1], strides = [1, 1]} : vector<4x16xf32> to vector<3x1xf32>
    %177 = vector.broadcast %176 : vector<3x1xf32> to vector<3x32xf32>
    %178 = vector.broadcast %175 : vector<1x32xf32> to vector<3x32xf32>
    %179 = arith.mulf %177, %178 : vector<3x32xf32>
    %180 = arith.addf %167, %179 : vector<3x32xf32>
    %181 = vector.extract_strided_slice %15 {offsets = [0, 4], sizes = [3, 1], strides = [1, 1]} : vector<4x16xf32> to vector<3x1xf32>
    %182 = vector.broadcast %181 : vector<3x1xf32> to vector<3x32xf32>
    %183 = vector.broadcast %175 : vector<1x32xf32> to vector<3x32xf32>
    %184 = arith.mulf %182, %183 : vector<3x32xf32>
    %185 = arith.addf %172, %184 : vector<3x32xf32>
    %186 = vector.extract_strided_slice %0 {offsets = [3, 0], sizes = [1, 32], strides = [1, 1]} : vector<9x32xf32> to vector<1x32xf32>
    %187 = vector.shape_cast %186 : vector<1x32xf32> to vector<32xf32>
    %188 = vector.shape_cast %187 : vector<32xf32> to vector<1x32xf32>
    %189 = vector.extract_strided_slice %13 {offsets = [0, 2], sizes = [3, 1], strides = [1, 1]} : vector<4x16xf32> to vector<3x1xf32>
    %190 = vector.broadcast %189 : vector<3x1xf32> to vector<3x32xf32>
    %191 = vector.broadcast %188 : vector<1x32xf32> to vector<3x32xf32>
    %192 = arith.mulf %190, %191 : vector<3x32xf32>
    %193 = arith.addf %180, %192 : vector<3x32xf32>
    %194 = vector.extract_strided_slice %17 {offsets = [0, 2], sizes = [3, 1], strides = [1, 1]} : vector<4x16xf32> to vector<3x1xf32>
    %195 = vector.broadcast %194 : vector<3x1xf32> to vector<3x32xf32>
    %196 = vector.broadcast %188 : vector<1x32xf32> to vector<3x32xf32>
    %197 = arith.mulf %195, %196 : vector<3x32xf32>
    %198 = arith.addf %185, %197 : vector<3x32xf32>
    %199 = vector.extract_strided_slice %0 {offsets = [4, 0], sizes = [1, 32], strides = [1, 1]} : vector<9x32xf32> to vector<1x32xf32>
    %200 = vector.shape_cast %199 : vector<1x32xf32> to vector<32xf32>
    %201 = vector.shape_cast %200 : vector<32xf32> to vector<1x32xf32>
    %202 = vector.extract_strided_slice %13 {offsets = [0, 3], sizes = [3, 1], strides = [1, 1]} : vector<4x16xf32> to vector<3x1xf32>
    %203 = vector.broadcast %202 : vector<3x1xf32> to vector<3x32xf32>
    %204 = vector.broadcast %201 : vector<1x32xf32> to vector<3x32xf32>
    %205 = arith.mulf %203, %204 : vector<3x32xf32>
    %206 = arith.addf %193, %205 : vector<3x32xf32>
    %207 = vector.extract_strided_slice %17 {offsets = [0, 3], sizes = [3, 1], strides = [1, 1]} : vector<4x16xf32> to vector<3x1xf32>
    %208 = vector.broadcast %207 : vector<3x1xf32> to vector<3x32xf32>
    %209 = vector.broadcast %201 : vector<1x32xf32> to vector<3x32xf32>
    %210 = arith.mulf %208, %209 : vector<3x32xf32>
    %211 = arith.addf %198, %210 : vector<3x32xf32>
    %212 = vector.extract_strided_slice %0 {offsets = [5, 0], sizes = [1, 32], strides = [1, 1]} : vector<9x32xf32> to vector<1x32xf32>
    %213 = vector.shape_cast %212 : vector<1x32xf32> to vector<32xf32>
    %214 = vector.shape_cast %213 : vector<32xf32> to vector<1x32xf32>
    %215 = vector.extract_strided_slice %13 {offsets = [0, 4], sizes = [3, 1], strides = [1, 1]} : vector<4x16xf32> to vector<3x1xf32>
    %216 = vector.broadcast %215 : vector<3x1xf32> to vector<3x32xf32>
    %217 = vector.broadcast %214 : vector<1x32xf32> to vector<3x32xf32>
    %218 = arith.mulf %216, %217 : vector<3x32xf32>
    %219 = arith.addf %206, %218 : vector<3x32xf32>
    %220 = vector.extract_strided_slice %17 {offsets = [0, 4], sizes = [3, 1], strides = [1, 1]} : vector<4x16xf32> to vector<3x1xf32>
    %221 = vector.broadcast %220 : vector<3x1xf32> to vector<3x32xf32>
    %222 = vector.broadcast %214 : vector<1x32xf32> to vector<3x32xf32>
    %223 = arith.mulf %221, %222 : vector<3x32xf32>
    %224 = arith.addf %211, %223 : vector<3x32xf32>
    %225 = vector.extract_strided_slice %0 {offsets = [6, 0], sizes = [1, 32], strides = [1, 1]} : vector<9x32xf32> to vector<1x32xf32>
    %226 = vector.shape_cast %225 : vector<1x32xf32> to vector<32xf32>
    %227 = vector.shape_cast %226 : vector<32xf32> to vector<1x32xf32>
    %228 = vector.extract_strided_slice %15 {offsets = [0, 2], sizes = [3, 1], strides = [1, 1]} : vector<4x16xf32> to vector<3x1xf32>
    %229 = vector.broadcast %228 : vector<3x1xf32> to vector<3x32xf32>
    %230 = vector.broadcast %227 : vector<1x32xf32> to vector<3x32xf32>
    %231 = arith.mulf %229, %230 : vector<3x32xf32>
    %232 = arith.addf %219, %231 : vector<3x32xf32>
    %233 = vector.extract_strided_slice %11 {offsets = [1, 2], sizes = [3, 1], strides = [1, 1]} : vector<4x16xf32> to vector<3x1xf32>
    %234 = vector.broadcast %233 : vector<3x1xf32> to vector<3x32xf32>
    %235 = vector.broadcast %227 : vector<1x32xf32> to vector<3x32xf32>
    %236 = arith.mulf %234, %235 : vector<3x32xf32>
    %237 = arith.addf %224, %236 : vector<3x32xf32>
    %238 = vector.extract_strided_slice %0 {offsets = [7, 0], sizes = [1, 32], strides = [1, 1]} : vector<9x32xf32> to vector<1x32xf32>
    %239 = vector.shape_cast %238 : vector<1x32xf32> to vector<32xf32>
    %240 = vector.shape_cast %239 : vector<32xf32> to vector<1x32xf32>
    %241 = vector.extract_strided_slice %15 {offsets = [0, 3], sizes = [3, 1], strides = [1, 1]} : vector<4x16xf32> to vector<3x1xf32>
    %242 = vector.broadcast %241 : vector<3x1xf32> to vector<3x32xf32>
    %243 = vector.broadcast %240 : vector<1x32xf32> to vector<3x32xf32>
    %244 = arith.mulf %242, %243 : vector<3x32xf32>
    %245 = arith.addf %232, %244 : vector<3x32xf32>
    %246 = vector.extract_strided_slice %11 {offsets = [1, 3], sizes = [3, 1], strides = [1, 1]} : vector<4x16xf32> to vector<3x1xf32>
    %247 = vector.broadcast %246 : vector<3x1xf32> to vector<3x32xf32>
    %248 = vector.broadcast %240 : vector<1x32xf32> to vector<3x32xf32>
    %249 = arith.mulf %247, %248 : vector<3x32xf32>
    %250 = arith.addf %237, %249 : vector<3x32xf32>
    %251 = vector.extract_strided_slice %0 {offsets = [8, 0], sizes = [1, 32], strides = [1, 1]} : vector<9x32xf32> to vector<1x32xf32>
    %252 = vector.shape_cast %251 : vector<1x32xf32> to vector<32xf32>
    %253 = vector.shape_cast %252 : vector<32xf32> to vector<1x32xf32>
    %254 = vector.extract_strided_slice %15 {offsets = [0, 4], sizes = [3, 1], strides = [1, 1]} : vector<4x16xf32> to vector<3x1xf32>
    %255 = vector.broadcast %254 : vector<3x1xf32> to vector<3x32xf32>
    %256 = vector.broadcast %253 : vector<1x32xf32> to vector<3x32xf32>
    %257 = arith.mulf %255, %256 : vector<3x32xf32>
    %258 = arith.addf %245, %257 : vector<3x32xf32>
    %259 = vector.extract_strided_slice %11 {offsets = [1, 4], sizes = [3, 1], strides = [1, 1]} : vector<4x16xf32> to vector<3x1xf32>
    %260 = vector.broadcast %259 : vector<3x1xf32> to vector<3x32xf32>
    %261 = vector.broadcast %253 : vector<1x32xf32> to vector<3x32xf32>
    %262 = arith.mulf %260, %261 : vector<3x32xf32>
    %263 = arith.addf %250, %262 : vector<3x32xf32>
    %264 = vector.broadcast %1 : vector<1x32xf32> to vector<3x32xf32>
    %265 = arith.addf %258, %264 : vector<3x32xf32>
    %cst_29 = arith.constant 0.000000e+00 : f32
    %266 = vector.broadcast %cst_29 : f32 to vector<3x32xf32>
    %267 = arith.maximumf %265, %266 : vector<3x32xf32>
    %268 = vector.broadcast %1 : vector<1x32xf32> to vector<3x32xf32>
    %269 = arith.addf %263, %268 : vector<3x32xf32>
    %cst_30 = arith.constant 0.000000e+00 : f32
    %270 = vector.broadcast %cst_30 : f32 to vector<3x32xf32>
    %271 = arith.maximumf %269, %270 : vector<3x32xf32>
    %cst_31 = arith.constant 0.000000e+00 : f32
    %272 = vector.broadcast %cst_31 : f32 to vector<3x32xf32>
    %cst_32 = arith.constant 0.000000e+00 : f32
    %273 = vector.broadcast %cst_32 : f32 to vector<3x32xf32>
    %274 = vector.extract_strided_slice %0 {offsets = [0, 0], sizes = [1, 32], strides = [1, 1]} : vector<9x32xf32> to vector<1x32xf32>
    %275 = vector.shape_cast %274 : vector<1x32xf32> to vector<32xf32>
    %276 = vector.shape_cast %275 : vector<32xf32> to vector<1x32xf32>
    %277 = vector.extract_strided_slice %11 {offsets = [0, 4], sizes = [3, 1], strides = [1, 1]} : vector<4x16xf32> to vector<3x1xf32>
    %278 = vector.broadcast %277 : vector<3x1xf32> to vector<3x32xf32>
    %279 = vector.broadcast %276 : vector<1x32xf32> to vector<3x32xf32>
    %280 = arith.mulf %278, %279 : vector<3x32xf32>
    %281 = arith.addf %272, %280 : vector<3x32xf32>
    %282 = vector.extract_strided_slice %15 {offsets = [0, 4], sizes = [3, 1], strides = [1, 1]} : vector<4x16xf32> to vector<3x1xf32>
    %283 = vector.broadcast %282 : vector<3x1xf32> to vector<3x32xf32>
    %284 = vector.broadcast %276 : vector<1x32xf32> to vector<3x32xf32>
    %285 = arith.mulf %283, %284 : vector<3x32xf32>
    %286 = arith.addf %273, %285 : vector<3x32xf32>
    %287 = vector.extract_strided_slice %0 {offsets = [1, 0], sizes = [1, 32], strides = [1, 1]} : vector<9x32xf32> to vector<1x32xf32>
    %288 = vector.shape_cast %287 : vector<1x32xf32> to vector<32xf32>
    %289 = vector.shape_cast %288 : vector<32xf32> to vector<1x32xf32>
    %290 = vector.extract_strided_slice %11 {offsets = [0, 5], sizes = [3, 1], strides = [1, 1]} : vector<4x16xf32> to vector<3x1xf32>
    %291 = vector.broadcast %290 : vector<3x1xf32> to vector<3x32xf32>
    %292 = vector.broadcast %289 : vector<1x32xf32> to vector<3x32xf32>
    %293 = arith.mulf %291, %292 : vector<3x32xf32>
    %294 = arith.addf %281, %293 : vector<3x32xf32>
    %295 = vector.extract_strided_slice %15 {offsets = [0, 5], sizes = [3, 1], strides = [1, 1]} : vector<4x16xf32> to vector<3x1xf32>
    %296 = vector.broadcast %295 : vector<3x1xf32> to vector<3x32xf32>
    %297 = vector.broadcast %289 : vector<1x32xf32> to vector<3x32xf32>
    %298 = arith.mulf %296, %297 : vector<3x32xf32>
    %299 = arith.addf %286, %298 : vector<3x32xf32>
    %300 = vector.extract_strided_slice %0 {offsets = [2, 0], sizes = [1, 32], strides = [1, 1]} : vector<9x32xf32> to vector<1x32xf32>
    %301 = vector.shape_cast %300 : vector<1x32xf32> to vector<32xf32>
    %302 = vector.shape_cast %301 : vector<32xf32> to vector<1x32xf32>
    %303 = vector.extract_strided_slice %11 {offsets = [0, 6], sizes = [3, 1], strides = [1, 1]} : vector<4x16xf32> to vector<3x1xf32>
    %304 = vector.broadcast %303 : vector<3x1xf32> to vector<3x32xf32>
    %305 = vector.broadcast %302 : vector<1x32xf32> to vector<3x32xf32>
    %306 = arith.mulf %304, %305 : vector<3x32xf32>
    %307 = arith.addf %294, %306 : vector<3x32xf32>
    %308 = vector.extract_strided_slice %15 {offsets = [0, 6], sizes = [3, 1], strides = [1, 1]} : vector<4x16xf32> to vector<3x1xf32>
    %309 = vector.broadcast %308 : vector<3x1xf32> to vector<3x32xf32>
    %310 = vector.broadcast %302 : vector<1x32xf32> to vector<3x32xf32>
    %311 = arith.mulf %309, %310 : vector<3x32xf32>
    %312 = arith.addf %299, %311 : vector<3x32xf32>
    %313 = vector.extract_strided_slice %0 {offsets = [3, 0], sizes = [1, 32], strides = [1, 1]} : vector<9x32xf32> to vector<1x32xf32>
    %314 = vector.shape_cast %313 : vector<1x32xf32> to vector<32xf32>
    %315 = vector.shape_cast %314 : vector<32xf32> to vector<1x32xf32>
    %316 = vector.extract_strided_slice %13 {offsets = [0, 4], sizes = [3, 1], strides = [1, 1]} : vector<4x16xf32> to vector<3x1xf32>
    %317 = vector.broadcast %316 : vector<3x1xf32> to vector<3x32xf32>
    %318 = vector.broadcast %315 : vector<1x32xf32> to vector<3x32xf32>
    %319 = arith.mulf %317, %318 : vector<3x32xf32>
    %320 = arith.addf %307, %319 : vector<3x32xf32>
    %321 = vector.extract_strided_slice %17 {offsets = [0, 4], sizes = [3, 1], strides = [1, 1]} : vector<4x16xf32> to vector<3x1xf32>
    %322 = vector.broadcast %321 : vector<3x1xf32> to vector<3x32xf32>
    %323 = vector.broadcast %315 : vector<1x32xf32> to vector<3x32xf32>
    %324 = arith.mulf %322, %323 : vector<3x32xf32>
    %325 = arith.addf %312, %324 : vector<3x32xf32>
    %326 = vector.extract_strided_slice %0 {offsets = [4, 0], sizes = [1, 32], strides = [1, 1]} : vector<9x32xf32> to vector<1x32xf32>
    %327 = vector.shape_cast %326 : vector<1x32xf32> to vector<32xf32>
    %328 = vector.shape_cast %327 : vector<32xf32> to vector<1x32xf32>
    %329 = vector.extract_strided_slice %13 {offsets = [0, 5], sizes = [3, 1], strides = [1, 1]} : vector<4x16xf32> to vector<3x1xf32>
    %330 = vector.broadcast %329 : vector<3x1xf32> to vector<3x32xf32>
    %331 = vector.broadcast %328 : vector<1x32xf32> to vector<3x32xf32>
    %332 = arith.mulf %330, %331 : vector<3x32xf32>
    %333 = arith.addf %320, %332 : vector<3x32xf32>
    %334 = vector.extract_strided_slice %17 {offsets = [0, 5], sizes = [3, 1], strides = [1, 1]} : vector<4x16xf32> to vector<3x1xf32>
    %335 = vector.broadcast %334 : vector<3x1xf32> to vector<3x32xf32>
    %336 = vector.broadcast %328 : vector<1x32xf32> to vector<3x32xf32>
    %337 = arith.mulf %335, %336 : vector<3x32xf32>
    %338 = arith.addf %325, %337 : vector<3x32xf32>
    %339 = vector.extract_strided_slice %0 {offsets = [5, 0], sizes = [1, 32], strides = [1, 1]} : vector<9x32xf32> to vector<1x32xf32>
    %340 = vector.shape_cast %339 : vector<1x32xf32> to vector<32xf32>
    %341 = vector.shape_cast %340 : vector<32xf32> to vector<1x32xf32>
    %342 = vector.extract_strided_slice %13 {offsets = [0, 6], sizes = [3, 1], strides = [1, 1]} : vector<4x16xf32> to vector<3x1xf32>
    %343 = vector.broadcast %342 : vector<3x1xf32> to vector<3x32xf32>
    %344 = vector.broadcast %341 : vector<1x32xf32> to vector<3x32xf32>
    %345 = arith.mulf %343, %344 : vector<3x32xf32>
    %346 = arith.addf %333, %345 : vector<3x32xf32>
    %347 = vector.extract_strided_slice %17 {offsets = [0, 6], sizes = [3, 1], strides = [1, 1]} : vector<4x16xf32> to vector<3x1xf32>
    %348 = vector.broadcast %347 : vector<3x1xf32> to vector<3x32xf32>
    %349 = vector.broadcast %341 : vector<1x32xf32> to vector<3x32xf32>
    %350 = arith.mulf %348, %349 : vector<3x32xf32>
    %351 = arith.addf %338, %350 : vector<3x32xf32>
    %352 = vector.extract_strided_slice %0 {offsets = [6, 0], sizes = [1, 32], strides = [1, 1]} : vector<9x32xf32> to vector<1x32xf32>
    %353 = vector.shape_cast %352 : vector<1x32xf32> to vector<32xf32>
    %354 = vector.shape_cast %353 : vector<32xf32> to vector<1x32xf32>
    %355 = vector.extract_strided_slice %15 {offsets = [0, 4], sizes = [3, 1], strides = [1, 1]} : vector<4x16xf32> to vector<3x1xf32>
    %356 = vector.broadcast %355 : vector<3x1xf32> to vector<3x32xf32>
    %357 = vector.broadcast %354 : vector<1x32xf32> to vector<3x32xf32>
    %358 = arith.mulf %356, %357 : vector<3x32xf32>
    %359 = arith.addf %346, %358 : vector<3x32xf32>
    %360 = vector.extract_strided_slice %11 {offsets = [1, 4], sizes = [3, 1], strides = [1, 1]} : vector<4x16xf32> to vector<3x1xf32>
    %361 = vector.broadcast %360 : vector<3x1xf32> to vector<3x32xf32>
    %362 = vector.broadcast %354 : vector<1x32xf32> to vector<3x32xf32>
    %363 = arith.mulf %361, %362 : vector<3x32xf32>
    %364 = arith.addf %351, %363 : vector<3x32xf32>
    %365 = vector.extract_strided_slice %0 {offsets = [7, 0], sizes = [1, 32], strides = [1, 1]} : vector<9x32xf32> to vector<1x32xf32>
    %366 = vector.shape_cast %365 : vector<1x32xf32> to vector<32xf32>
    %367 = vector.shape_cast %366 : vector<32xf32> to vector<1x32xf32>
    %368 = vector.extract_strided_slice %15 {offsets = [0, 5], sizes = [3, 1], strides = [1, 1]} : vector<4x16xf32> to vector<3x1xf32>
    %369 = vector.broadcast %368 : vector<3x1xf32> to vector<3x32xf32>
    %370 = vector.broadcast %367 : vector<1x32xf32> to vector<3x32xf32>
    %371 = arith.mulf %369, %370 : vector<3x32xf32>
    %372 = arith.addf %359, %371 : vector<3x32xf32>
    %373 = vector.extract_strided_slice %11 {offsets = [1, 5], sizes = [3, 1], strides = [1, 1]} : vector<4x16xf32> to vector<3x1xf32>
    %374 = vector.broadcast %373 : vector<3x1xf32> to vector<3x32xf32>
    %375 = vector.broadcast %367 : vector<1x32xf32> to vector<3x32xf32>
    %376 = arith.mulf %374, %375 : vector<3x32xf32>
    %377 = arith.addf %364, %376 : vector<3x32xf32>
    %378 = vector.extract_strided_slice %0 {offsets = [8, 0], sizes = [1, 32], strides = [1, 1]} : vector<9x32xf32> to vector<1x32xf32>
    %379 = vector.shape_cast %378 : vector<1x32xf32> to vector<32xf32>
    %380 = vector.shape_cast %379 : vector<32xf32> to vector<1x32xf32>
    %381 = vector.extract_strided_slice %15 {offsets = [0, 6], sizes = [3, 1], strides = [1, 1]} : vector<4x16xf32> to vector<3x1xf32>
    %382 = vector.broadcast %381 : vector<3x1xf32> to vector<3x32xf32>
    %383 = vector.broadcast %380 : vector<1x32xf32> to vector<3x32xf32>
    %384 = arith.mulf %382, %383 : vector<3x32xf32>
    %385 = arith.addf %372, %384 : vector<3x32xf32>
    %386 = vector.extract_strided_slice %11 {offsets = [1, 6], sizes = [3, 1], strides = [1, 1]} : vector<4x16xf32> to vector<3x1xf32>
    %387 = vector.broadcast %386 : vector<3x1xf32> to vector<3x32xf32>
    %388 = vector.broadcast %380 : vector<1x32xf32> to vector<3x32xf32>
    %389 = arith.mulf %387, %388 : vector<3x32xf32>
    %390 = arith.addf %377, %389 : vector<3x32xf32>
    %391 = vector.broadcast %1 : vector<1x32xf32> to vector<3x32xf32>
    %392 = arith.addf %385, %391 : vector<3x32xf32>
    %cst_33 = arith.constant 0.000000e+00 : f32
    %393 = vector.broadcast %cst_33 : f32 to vector<3x32xf32>
    %394 = arith.maximumf %392, %393 : vector<3x32xf32>
    %395 = vector.broadcast %1 : vector<1x32xf32> to vector<3x32xf32>
    %396 = arith.addf %390, %395 : vector<3x32xf32>
    %cst_34 = arith.constant 0.000000e+00 : f32
    %397 = vector.broadcast %cst_34 : f32 to vector<3x32xf32>
    %398 = arith.maximumf %396, %397 : vector<3x32xf32>
    %cst_35 = arith.constant 0.000000e+00 : f32
    %399 = vector.broadcast %cst_35 : f32 to vector<3x32xf32>
    %cst_36 = arith.constant 0.000000e+00 : f32
    %400 = vector.broadcast %cst_36 : f32 to vector<3x32xf32>
    %401 = vector.extract_strided_slice %0 {offsets = [0, 0], sizes = [1, 32], strides = [1, 1]} : vector<9x32xf32> to vector<1x32xf32>
    %402 = vector.shape_cast %401 : vector<1x32xf32> to vector<32xf32>
    %403 = vector.shape_cast %402 : vector<32xf32> to vector<1x32xf32>
    %404 = vector.extract_strided_slice %11 {offsets = [0, 6], sizes = [3, 1], strides = [1, 1]} : vector<4x16xf32> to vector<3x1xf32>
    %405 = vector.broadcast %404 : vector<3x1xf32> to vector<3x32xf32>
    %406 = vector.broadcast %403 : vector<1x32xf32> to vector<3x32xf32>
    %407 = arith.mulf %405, %406 : vector<3x32xf32>
    %408 = arith.addf %399, %407 : vector<3x32xf32>
    %409 = vector.extract_strided_slice %15 {offsets = [0, 6], sizes = [3, 1], strides = [1, 1]} : vector<4x16xf32> to vector<3x1xf32>
    %410 = vector.broadcast %409 : vector<3x1xf32> to vector<3x32xf32>
    %411 = vector.broadcast %403 : vector<1x32xf32> to vector<3x32xf32>
    %412 = arith.mulf %410, %411 : vector<3x32xf32>
    %413 = arith.addf %400, %412 : vector<3x32xf32>
    %414 = vector.extract_strided_slice %0 {offsets = [1, 0], sizes = [1, 32], strides = [1, 1]} : vector<9x32xf32> to vector<1x32xf32>
    %415 = vector.shape_cast %414 : vector<1x32xf32> to vector<32xf32>
    %416 = vector.shape_cast %415 : vector<32xf32> to vector<1x32xf32>
    %417 = vector.extract_strided_slice %11 {offsets = [0, 7], sizes = [3, 1], strides = [1, 1]} : vector<4x16xf32> to vector<3x1xf32>
    %418 = vector.broadcast %417 : vector<3x1xf32> to vector<3x32xf32>
    %419 = vector.broadcast %416 : vector<1x32xf32> to vector<3x32xf32>
    %420 = arith.mulf %418, %419 : vector<3x32xf32>
    %421 = arith.addf %408, %420 : vector<3x32xf32>
    %422 = vector.extract_strided_slice %15 {offsets = [0, 7], sizes = [3, 1], strides = [1, 1]} : vector<4x16xf32> to vector<3x1xf32>
    %423 = vector.broadcast %422 : vector<3x1xf32> to vector<3x32xf32>
    %424 = vector.broadcast %416 : vector<1x32xf32> to vector<3x32xf32>
    %425 = arith.mulf %423, %424 : vector<3x32xf32>
    %426 = arith.addf %413, %425 : vector<3x32xf32>
    %427 = vector.extract_strided_slice %0 {offsets = [2, 0], sizes = [1, 32], strides = [1, 1]} : vector<9x32xf32> to vector<1x32xf32>
    %428 = vector.shape_cast %427 : vector<1x32xf32> to vector<32xf32>
    %429 = vector.shape_cast %428 : vector<32xf32> to vector<1x32xf32>
    %430 = vector.extract_strided_slice %11 {offsets = [0, 8], sizes = [3, 1], strides = [1, 1]} : vector<4x16xf32> to vector<3x1xf32>
    %431 = vector.broadcast %430 : vector<3x1xf32> to vector<3x32xf32>
    %432 = vector.broadcast %429 : vector<1x32xf32> to vector<3x32xf32>
    %433 = arith.mulf %431, %432 : vector<3x32xf32>
    %434 = arith.addf %421, %433 : vector<3x32xf32>
    %435 = vector.extract_strided_slice %15 {offsets = [0, 8], sizes = [3, 1], strides = [1, 1]} : vector<4x16xf32> to vector<3x1xf32>
    %436 = vector.broadcast %435 : vector<3x1xf32> to vector<3x32xf32>
    %437 = vector.broadcast %429 : vector<1x32xf32> to vector<3x32xf32>
    %438 = arith.mulf %436, %437 : vector<3x32xf32>
    %439 = arith.addf %426, %438 : vector<3x32xf32>
    %440 = vector.extract_strided_slice %0 {offsets = [3, 0], sizes = [1, 32], strides = [1, 1]} : vector<9x32xf32> to vector<1x32xf32>
    %441 = vector.shape_cast %440 : vector<1x32xf32> to vector<32xf32>
    %442 = vector.shape_cast %441 : vector<32xf32> to vector<1x32xf32>
    %443 = vector.extract_strided_slice %13 {offsets = [0, 6], sizes = [3, 1], strides = [1, 1]} : vector<4x16xf32> to vector<3x1xf32>
    %444 = vector.broadcast %443 : vector<3x1xf32> to vector<3x32xf32>
    %445 = vector.broadcast %442 : vector<1x32xf32> to vector<3x32xf32>
    %446 = arith.mulf %444, %445 : vector<3x32xf32>
    %447 = arith.addf %434, %446 : vector<3x32xf32>
    %448 = vector.extract_strided_slice %17 {offsets = [0, 6], sizes = [3, 1], strides = [1, 1]} : vector<4x16xf32> to vector<3x1xf32>
    %449 = vector.broadcast %448 : vector<3x1xf32> to vector<3x32xf32>
    %450 = vector.broadcast %442 : vector<1x32xf32> to vector<3x32xf32>
    %451 = arith.mulf %449, %450 : vector<3x32xf32>
    %452 = arith.addf %439, %451 : vector<3x32xf32>
    %453 = vector.extract_strided_slice %0 {offsets = [4, 0], sizes = [1, 32], strides = [1, 1]} : vector<9x32xf32> to vector<1x32xf32>
    %454 = vector.shape_cast %453 : vector<1x32xf32> to vector<32xf32>
    %455 = vector.shape_cast %454 : vector<32xf32> to vector<1x32xf32>
    %456 = vector.extract_strided_slice %13 {offsets = [0, 7], sizes = [3, 1], strides = [1, 1]} : vector<4x16xf32> to vector<3x1xf32>
    %457 = vector.broadcast %456 : vector<3x1xf32> to vector<3x32xf32>
    %458 = vector.broadcast %455 : vector<1x32xf32> to vector<3x32xf32>
    %459 = arith.mulf %457, %458 : vector<3x32xf32>
    %460 = arith.addf %447, %459 : vector<3x32xf32>
    %461 = vector.extract_strided_slice %17 {offsets = [0, 7], sizes = [3, 1], strides = [1, 1]} : vector<4x16xf32> to vector<3x1xf32>
    %462 = vector.broadcast %461 : vector<3x1xf32> to vector<3x32xf32>
    %463 = vector.broadcast %455 : vector<1x32xf32> to vector<3x32xf32>
    %464 = arith.mulf %462, %463 : vector<3x32xf32>
    %465 = arith.addf %452, %464 : vector<3x32xf32>
    %466 = vector.extract_strided_slice %0 {offsets = [5, 0], sizes = [1, 32], strides = [1, 1]} : vector<9x32xf32> to vector<1x32xf32>
    %467 = vector.shape_cast %466 : vector<1x32xf32> to vector<32xf32>
    %468 = vector.shape_cast %467 : vector<32xf32> to vector<1x32xf32>
    %469 = vector.extract_strided_slice %13 {offsets = [0, 8], sizes = [3, 1], strides = [1, 1]} : vector<4x16xf32> to vector<3x1xf32>
    %470 = vector.broadcast %469 : vector<3x1xf32> to vector<3x32xf32>
    %471 = vector.broadcast %468 : vector<1x32xf32> to vector<3x32xf32>
    %472 = arith.mulf %470, %471 : vector<3x32xf32>
    %473 = arith.addf %460, %472 : vector<3x32xf32>
    %474 = vector.extract_strided_slice %17 {offsets = [0, 8], sizes = [3, 1], strides = [1, 1]} : vector<4x16xf32> to vector<3x1xf32>
    %475 = vector.broadcast %474 : vector<3x1xf32> to vector<3x32xf32>
    %476 = vector.broadcast %468 : vector<1x32xf32> to vector<3x32xf32>
    %477 = arith.mulf %475, %476 : vector<3x32xf32>
    %478 = arith.addf %465, %477 : vector<3x32xf32>
    %479 = vector.extract_strided_slice %0 {offsets = [6, 0], sizes = [1, 32], strides = [1, 1]} : vector<9x32xf32> to vector<1x32xf32>
    %480 = vector.shape_cast %479 : vector<1x32xf32> to vector<32xf32>
    %481 = vector.shape_cast %480 : vector<32xf32> to vector<1x32xf32>
    %482 = vector.extract_strided_slice %15 {offsets = [0, 6], sizes = [3, 1], strides = [1, 1]} : vector<4x16xf32> to vector<3x1xf32>
    %483 = vector.broadcast %482 : vector<3x1xf32> to vector<3x32xf32>
    %484 = vector.broadcast %481 : vector<1x32xf32> to vector<3x32xf32>
    %485 = arith.mulf %483, %484 : vector<3x32xf32>
    %486 = arith.addf %473, %485 : vector<3x32xf32>
    %487 = vector.extract_strided_slice %11 {offsets = [1, 6], sizes = [3, 1], strides = [1, 1]} : vector<4x16xf32> to vector<3x1xf32>
    %488 = vector.broadcast %487 : vector<3x1xf32> to vector<3x32xf32>
    %489 = vector.broadcast %481 : vector<1x32xf32> to vector<3x32xf32>
    %490 = arith.mulf %488, %489 : vector<3x32xf32>
    %491 = arith.addf %478, %490 : vector<3x32xf32>
    %492 = vector.extract_strided_slice %0 {offsets = [7, 0], sizes = [1, 32], strides = [1, 1]} : vector<9x32xf32> to vector<1x32xf32>
    %493 = vector.shape_cast %492 : vector<1x32xf32> to vector<32xf32>
    %494 = vector.shape_cast %493 : vector<32xf32> to vector<1x32xf32>
    %495 = vector.extract_strided_slice %15 {offsets = [0, 7], sizes = [3, 1], strides = [1, 1]} : vector<4x16xf32> to vector<3x1xf32>
    %496 = vector.broadcast %495 : vector<3x1xf32> to vector<3x32xf32>
    %497 = vector.broadcast %494 : vector<1x32xf32> to vector<3x32xf32>
    %498 = arith.mulf %496, %497 : vector<3x32xf32>
    %499 = arith.addf %486, %498 : vector<3x32xf32>
    %500 = vector.extract_strided_slice %11 {offsets = [1, 7], sizes = [3, 1], strides = [1, 1]} : vector<4x16xf32> to vector<3x1xf32>
    %501 = vector.broadcast %500 : vector<3x1xf32> to vector<3x32xf32>
    %502 = vector.broadcast %494 : vector<1x32xf32> to vector<3x32xf32>
    %503 = arith.mulf %501, %502 : vector<3x32xf32>
    %504 = arith.addf %491, %503 : vector<3x32xf32>
    %505 = vector.extract_strided_slice %0 {offsets = [8, 0], sizes = [1, 32], strides = [1, 1]} : vector<9x32xf32> to vector<1x32xf32>
    %506 = vector.shape_cast %505 : vector<1x32xf32> to vector<32xf32>
    %507 = vector.shape_cast %506 : vector<32xf32> to vector<1x32xf32>
    %508 = vector.extract_strided_slice %15 {offsets = [0, 8], sizes = [3, 1], strides = [1, 1]} : vector<4x16xf32> to vector<3x1xf32>
    %509 = vector.broadcast %508 : vector<3x1xf32> to vector<3x32xf32>
    %510 = vector.broadcast %507 : vector<1x32xf32> to vector<3x32xf32>
    %511 = arith.mulf %509, %510 : vector<3x32xf32>
    %512 = arith.addf %499, %511 : vector<3x32xf32>
    %513 = vector.extract_strided_slice %11 {offsets = [1, 8], sizes = [3, 1], strides = [1, 1]} : vector<4x16xf32> to vector<3x1xf32>
    %514 = vector.broadcast %513 : vector<3x1xf32> to vector<3x32xf32>
    %515 = vector.broadcast %507 : vector<1x32xf32> to vector<3x32xf32>
    %516 = arith.mulf %514, %515 : vector<3x32xf32>
    %517 = arith.addf %504, %516 : vector<3x32xf32>
    %518 = vector.broadcast %1 : vector<1x32xf32> to vector<3x32xf32>
    %519 = arith.addf %512, %518 : vector<3x32xf32>
    %cst_37 = arith.constant 0.000000e+00 : f32
    %520 = vector.broadcast %cst_37 : f32 to vector<3x32xf32>
    %521 = arith.maximumf %519, %520 : vector<3x32xf32>
    %522 = vector.broadcast %1 : vector<1x32xf32> to vector<3x32xf32>
    %523 = arith.addf %517, %522 : vector<3x32xf32>
    %cst_38 = arith.constant 0.000000e+00 : f32
    %524 = vector.broadcast %cst_38 : f32 to vector<3x32xf32>
    %525 = arith.maximumf %523, %524 : vector<3x32xf32>
    %cst_39 = arith.constant 0.000000e+00 : f32
    %526 = vector.broadcast %cst_39 : f32 to vector<3x32xf32>
    %cst_40 = arith.constant 0.000000e+00 : f32
    %527 = vector.broadcast %cst_40 : f32 to vector<3x32xf32>
    %528 = vector.extract_strided_slice %0 {offsets = [0, 0], sizes = [1, 32], strides = [1, 1]} : vector<9x32xf32> to vector<1x32xf32>
    %529 = vector.shape_cast %528 : vector<1x32xf32> to vector<32xf32>
    %530 = vector.shape_cast %529 : vector<32xf32> to vector<1x32xf32>
    %531 = vector.extract_strided_slice %11 {offsets = [0, 8], sizes = [3, 1], strides = [1, 1]} : vector<4x16xf32> to vector<3x1xf32>
    %532 = vector.broadcast %531 : vector<3x1xf32> to vector<3x32xf32>
    %533 = vector.broadcast %530 : vector<1x32xf32> to vector<3x32xf32>
    %534 = arith.mulf %532, %533 : vector<3x32xf32>
    %535 = arith.addf %526, %534 : vector<3x32xf32>
    %536 = vector.extract_strided_slice %15 {offsets = [0, 8], sizes = [3, 1], strides = [1, 1]} : vector<4x16xf32> to vector<3x1xf32>
    %537 = vector.broadcast %536 : vector<3x1xf32> to vector<3x32xf32>
    %538 = vector.broadcast %530 : vector<1x32xf32> to vector<3x32xf32>
    %539 = arith.mulf %537, %538 : vector<3x32xf32>
    %540 = arith.addf %527, %539 : vector<3x32xf32>
    %541 = vector.extract_strided_slice %0 {offsets = [1, 0], sizes = [1, 32], strides = [1, 1]} : vector<9x32xf32> to vector<1x32xf32>
    %542 = vector.shape_cast %541 : vector<1x32xf32> to vector<32xf32>
    %543 = vector.shape_cast %542 : vector<32xf32> to vector<1x32xf32>
    %544 = vector.extract_strided_slice %11 {offsets = [0, 9], sizes = [3, 1], strides = [1, 1]} : vector<4x16xf32> to vector<3x1xf32>
    %545 = vector.broadcast %544 : vector<3x1xf32> to vector<3x32xf32>
    %546 = vector.broadcast %543 : vector<1x32xf32> to vector<3x32xf32>
    %547 = arith.mulf %545, %546 : vector<3x32xf32>
    %548 = arith.addf %535, %547 : vector<3x32xf32>
    %549 = vector.extract_strided_slice %15 {offsets = [0, 9], sizes = [3, 1], strides = [1, 1]} : vector<4x16xf32> to vector<3x1xf32>
    %550 = vector.broadcast %549 : vector<3x1xf32> to vector<3x32xf32>
    %551 = vector.broadcast %543 : vector<1x32xf32> to vector<3x32xf32>
    %552 = arith.mulf %550, %551 : vector<3x32xf32>
    %553 = arith.addf %540, %552 : vector<3x32xf32>
    %554 = vector.extract_strided_slice %0 {offsets = [2, 0], sizes = [1, 32], strides = [1, 1]} : vector<9x32xf32> to vector<1x32xf32>
    %555 = vector.shape_cast %554 : vector<1x32xf32> to vector<32xf32>
    %556 = vector.shape_cast %555 : vector<32xf32> to vector<1x32xf32>
    %557 = vector.extract_strided_slice %11 {offsets = [0, 10], sizes = [3, 1], strides = [1, 1]} : vector<4x16xf32> to vector<3x1xf32>
    %558 = vector.broadcast %557 : vector<3x1xf32> to vector<3x32xf32>
    %559 = vector.broadcast %556 : vector<1x32xf32> to vector<3x32xf32>
    %560 = arith.mulf %558, %559 : vector<3x32xf32>
    %561 = arith.addf %548, %560 : vector<3x32xf32>
    %562 = vector.extract_strided_slice %15 {offsets = [0, 10], sizes = [3, 1], strides = [1, 1]} : vector<4x16xf32> to vector<3x1xf32>
    %563 = vector.broadcast %562 : vector<3x1xf32> to vector<3x32xf32>
    %564 = vector.broadcast %556 : vector<1x32xf32> to vector<3x32xf32>
    %565 = arith.mulf %563, %564 : vector<3x32xf32>
    %566 = arith.addf %553, %565 : vector<3x32xf32>
    %567 = vector.extract_strided_slice %0 {offsets = [3, 0], sizes = [1, 32], strides = [1, 1]} : vector<9x32xf32> to vector<1x32xf32>
    %568 = vector.shape_cast %567 : vector<1x32xf32> to vector<32xf32>
    %569 = vector.shape_cast %568 : vector<32xf32> to vector<1x32xf32>
    %570 = vector.extract_strided_slice %13 {offsets = [0, 8], sizes = [3, 1], strides = [1, 1]} : vector<4x16xf32> to vector<3x1xf32>
    %571 = vector.broadcast %570 : vector<3x1xf32> to vector<3x32xf32>
    %572 = vector.broadcast %569 : vector<1x32xf32> to vector<3x32xf32>
    %573 = arith.mulf %571, %572 : vector<3x32xf32>
    %574 = arith.addf %561, %573 : vector<3x32xf32>
    %575 = vector.extract_strided_slice %17 {offsets = [0, 8], sizes = [3, 1], strides = [1, 1]} : vector<4x16xf32> to vector<3x1xf32>
    %576 = vector.broadcast %575 : vector<3x1xf32> to vector<3x32xf32>
    %577 = vector.broadcast %569 : vector<1x32xf32> to vector<3x32xf32>
    %578 = arith.mulf %576, %577 : vector<3x32xf32>
    %579 = arith.addf %566, %578 : vector<3x32xf32>
    %580 = vector.extract_strided_slice %0 {offsets = [4, 0], sizes = [1, 32], strides = [1, 1]} : vector<9x32xf32> to vector<1x32xf32>
    %581 = vector.shape_cast %580 : vector<1x32xf32> to vector<32xf32>
    %582 = vector.shape_cast %581 : vector<32xf32> to vector<1x32xf32>
    %583 = vector.extract_strided_slice %13 {offsets = [0, 9], sizes = [3, 1], strides = [1, 1]} : vector<4x16xf32> to vector<3x1xf32>
    %584 = vector.broadcast %583 : vector<3x1xf32> to vector<3x32xf32>
    %585 = vector.broadcast %582 : vector<1x32xf32> to vector<3x32xf32>
    %586 = arith.mulf %584, %585 : vector<3x32xf32>
    %587 = arith.addf %574, %586 : vector<3x32xf32>
    %588 = vector.extract_strided_slice %17 {offsets = [0, 9], sizes = [3, 1], strides = [1, 1]} : vector<4x16xf32> to vector<3x1xf32>
    %589 = vector.broadcast %588 : vector<3x1xf32> to vector<3x32xf32>
    %590 = vector.broadcast %582 : vector<1x32xf32> to vector<3x32xf32>
    %591 = arith.mulf %589, %590 : vector<3x32xf32>
    %592 = arith.addf %579, %591 : vector<3x32xf32>
    %593 = vector.extract_strided_slice %0 {offsets = [5, 0], sizes = [1, 32], strides = [1, 1]} : vector<9x32xf32> to vector<1x32xf32>
    %594 = vector.shape_cast %593 : vector<1x32xf32> to vector<32xf32>
    %595 = vector.shape_cast %594 : vector<32xf32> to vector<1x32xf32>
    %596 = vector.extract_strided_slice %13 {offsets = [0, 10], sizes = [3, 1], strides = [1, 1]} : vector<4x16xf32> to vector<3x1xf32>
    %597 = vector.broadcast %596 : vector<3x1xf32> to vector<3x32xf32>
    %598 = vector.broadcast %595 : vector<1x32xf32> to vector<3x32xf32>
    %599 = arith.mulf %597, %598 : vector<3x32xf32>
    %600 = arith.addf %587, %599 : vector<3x32xf32>
    %601 = vector.extract_strided_slice %17 {offsets = [0, 10], sizes = [3, 1], strides = [1, 1]} : vector<4x16xf32> to vector<3x1xf32>
    %602 = vector.broadcast %601 : vector<3x1xf32> to vector<3x32xf32>
    %603 = vector.broadcast %595 : vector<1x32xf32> to vector<3x32xf32>
    %604 = arith.mulf %602, %603 : vector<3x32xf32>
    %605 = arith.addf %592, %604 : vector<3x32xf32>
    %606 = vector.extract_strided_slice %0 {offsets = [6, 0], sizes = [1, 32], strides = [1, 1]} : vector<9x32xf32> to vector<1x32xf32>
    %607 = vector.shape_cast %606 : vector<1x32xf32> to vector<32xf32>
    %608 = vector.shape_cast %607 : vector<32xf32> to vector<1x32xf32>
    %609 = vector.extract_strided_slice %15 {offsets = [0, 8], sizes = [3, 1], strides = [1, 1]} : vector<4x16xf32> to vector<3x1xf32>
    %610 = vector.broadcast %609 : vector<3x1xf32> to vector<3x32xf32>
    %611 = vector.broadcast %608 : vector<1x32xf32> to vector<3x32xf32>
    %612 = arith.mulf %610, %611 : vector<3x32xf32>
    %613 = arith.addf %600, %612 : vector<3x32xf32>
    %614 = vector.extract_strided_slice %11 {offsets = [1, 8], sizes = [3, 1], strides = [1, 1]} : vector<4x16xf32> to vector<3x1xf32>
    %615 = vector.broadcast %614 : vector<3x1xf32> to vector<3x32xf32>
    %616 = vector.broadcast %608 : vector<1x32xf32> to vector<3x32xf32>
    %617 = arith.mulf %615, %616 : vector<3x32xf32>
    %618 = arith.addf %605, %617 : vector<3x32xf32>
    %619 = vector.extract_strided_slice %0 {offsets = [7, 0], sizes = [1, 32], strides = [1, 1]} : vector<9x32xf32> to vector<1x32xf32>
    %620 = vector.shape_cast %619 : vector<1x32xf32> to vector<32xf32>
    %621 = vector.shape_cast %620 : vector<32xf32> to vector<1x32xf32>
    %622 = vector.extract_strided_slice %15 {offsets = [0, 9], sizes = [3, 1], strides = [1, 1]} : vector<4x16xf32> to vector<3x1xf32>
    %623 = vector.broadcast %622 : vector<3x1xf32> to vector<3x32xf32>
    %624 = vector.broadcast %621 : vector<1x32xf32> to vector<3x32xf32>
    %625 = arith.mulf %623, %624 : vector<3x32xf32>
    %626 = arith.addf %613, %625 : vector<3x32xf32>
    %627 = vector.extract_strided_slice %11 {offsets = [1, 9], sizes = [3, 1], strides = [1, 1]} : vector<4x16xf32> to vector<3x1xf32>
    %628 = vector.broadcast %627 : vector<3x1xf32> to vector<3x32xf32>
    %629 = vector.broadcast %621 : vector<1x32xf32> to vector<3x32xf32>
    %630 = arith.mulf %628, %629 : vector<3x32xf32>
    %631 = arith.addf %618, %630 : vector<3x32xf32>
    %632 = vector.extract_strided_slice %0 {offsets = [8, 0], sizes = [1, 32], strides = [1, 1]} : vector<9x32xf32> to vector<1x32xf32>
    %633 = vector.shape_cast %632 : vector<1x32xf32> to vector<32xf32>
    %634 = vector.shape_cast %633 : vector<32xf32> to vector<1x32xf32>
    %635 = vector.extract_strided_slice %15 {offsets = [0, 10], sizes = [3, 1], strides = [1, 1]} : vector<4x16xf32> to vector<3x1xf32>
    %636 = vector.broadcast %635 : vector<3x1xf32> to vector<3x32xf32>
    %637 = vector.broadcast %634 : vector<1x32xf32> to vector<3x32xf32>
    %638 = arith.mulf %636, %637 : vector<3x32xf32>
    %639 = arith.addf %626, %638 : vector<3x32xf32>
    %640 = vector.extract_strided_slice %11 {offsets = [1, 10], sizes = [3, 1], strides = [1, 1]} : vector<4x16xf32> to vector<3x1xf32>
    %641 = vector.broadcast %640 : vector<3x1xf32> to vector<3x32xf32>
    %642 = vector.broadcast %634 : vector<1x32xf32> to vector<3x32xf32>
    %643 = arith.mulf %641, %642 : vector<3x32xf32>
    %644 = arith.addf %631, %643 : vector<3x32xf32>
    %645 = vector.broadcast %1 : vector<1x32xf32> to vector<3x32xf32>
    %646 = arith.addf %639, %645 : vector<3x32xf32>
    %cst_41 = arith.constant 0.000000e+00 : f32
    %647 = vector.broadcast %cst_41 : f32 to vector<3x32xf32>
    %648 = arith.maximumf %646, %647 : vector<3x32xf32>
    %649 = vector.broadcast %1 : vector<1x32xf32> to vector<3x32xf32>
    %650 = arith.addf %644, %649 : vector<3x32xf32>
    %cst_42 = arith.constant 0.000000e+00 : f32
    %651 = vector.broadcast %cst_42 : f32 to vector<3x32xf32>
    %652 = arith.maximumf %650, %651 : vector<3x32xf32>
    %cst_43 = arith.constant 0.000000e+00 : f32
    %653 = vector.broadcast %cst_43 : f32 to vector<3x32xf32>
    %cst_44 = arith.constant 0.000000e+00 : f32
    %654 = vector.broadcast %cst_44 : f32 to vector<3x32xf32>
    %655 = vector.extract_strided_slice %0 {offsets = [0, 0], sizes = [1, 32], strides = [1, 1]} : vector<9x32xf32> to vector<1x32xf32>
    %656 = vector.shape_cast %655 : vector<1x32xf32> to vector<32xf32>
    %657 = vector.shape_cast %656 : vector<32xf32> to vector<1x32xf32>
    %658 = vector.extract_strided_slice %11 {offsets = [0, 10], sizes = [3, 1], strides = [1, 1]} : vector<4x16xf32> to vector<3x1xf32>
    %659 = vector.broadcast %658 : vector<3x1xf32> to vector<3x32xf32>
    %660 = vector.broadcast %657 : vector<1x32xf32> to vector<3x32xf32>
    %661 = arith.mulf %659, %660 : vector<3x32xf32>
    %662 = arith.addf %653, %661 : vector<3x32xf32>
    %663 = vector.extract_strided_slice %15 {offsets = [0, 10], sizes = [3, 1], strides = [1, 1]} : vector<4x16xf32> to vector<3x1xf32>
    %664 = vector.broadcast %663 : vector<3x1xf32> to vector<3x32xf32>
    %665 = vector.broadcast %657 : vector<1x32xf32> to vector<3x32xf32>
    %666 = arith.mulf %664, %665 : vector<3x32xf32>
    %667 = arith.addf %654, %666 : vector<3x32xf32>
    %668 = vector.extract_strided_slice %0 {offsets = [1, 0], sizes = [1, 32], strides = [1, 1]} : vector<9x32xf32> to vector<1x32xf32>
    %669 = vector.shape_cast %668 : vector<1x32xf32> to vector<32xf32>
    %670 = vector.shape_cast %669 : vector<32xf32> to vector<1x32xf32>
    %671 = vector.extract_strided_slice %11 {offsets = [0, 11], sizes = [3, 1], strides = [1, 1]} : vector<4x16xf32> to vector<3x1xf32>
    %672 = vector.broadcast %671 : vector<3x1xf32> to vector<3x32xf32>
    %673 = vector.broadcast %670 : vector<1x32xf32> to vector<3x32xf32>
    %674 = arith.mulf %672, %673 : vector<3x32xf32>
    %675 = arith.addf %662, %674 : vector<3x32xf32>
    %676 = vector.extract_strided_slice %15 {offsets = [0, 11], sizes = [3, 1], strides = [1, 1]} : vector<4x16xf32> to vector<3x1xf32>
    %677 = vector.broadcast %676 : vector<3x1xf32> to vector<3x32xf32>
    %678 = vector.broadcast %670 : vector<1x32xf32> to vector<3x32xf32>
    %679 = arith.mulf %677, %678 : vector<3x32xf32>
    %680 = arith.addf %667, %679 : vector<3x32xf32>
    %681 = vector.extract_strided_slice %0 {offsets = [2, 0], sizes = [1, 32], strides = [1, 1]} : vector<9x32xf32> to vector<1x32xf32>
    %682 = vector.shape_cast %681 : vector<1x32xf32> to vector<32xf32>
    %683 = vector.shape_cast %682 : vector<32xf32> to vector<1x32xf32>
    %684 = vector.extract_strided_slice %11 {offsets = [0, 12], sizes = [3, 1], strides = [1, 1]} : vector<4x16xf32> to vector<3x1xf32>
    %685 = vector.broadcast %684 : vector<3x1xf32> to vector<3x32xf32>
    %686 = vector.broadcast %683 : vector<1x32xf32> to vector<3x32xf32>
    %687 = arith.mulf %685, %686 : vector<3x32xf32>
    %688 = arith.addf %675, %687 : vector<3x32xf32>
    %689 = vector.extract_strided_slice %15 {offsets = [0, 12], sizes = [3, 1], strides = [1, 1]} : vector<4x16xf32> to vector<3x1xf32>
    %690 = vector.broadcast %689 : vector<3x1xf32> to vector<3x32xf32>
    %691 = vector.broadcast %683 : vector<1x32xf32> to vector<3x32xf32>
    %692 = arith.mulf %690, %691 : vector<3x32xf32>
    %693 = arith.addf %680, %692 : vector<3x32xf32>
    %694 = vector.extract_strided_slice %0 {offsets = [3, 0], sizes = [1, 32], strides = [1, 1]} : vector<9x32xf32> to vector<1x32xf32>
    %695 = vector.shape_cast %694 : vector<1x32xf32> to vector<32xf32>
    %696 = vector.shape_cast %695 : vector<32xf32> to vector<1x32xf32>
    %697 = vector.extract_strided_slice %13 {offsets = [0, 10], sizes = [3, 1], strides = [1, 1]} : vector<4x16xf32> to vector<3x1xf32>
    %698 = vector.broadcast %697 : vector<3x1xf32> to vector<3x32xf32>
    %699 = vector.broadcast %696 : vector<1x32xf32> to vector<3x32xf32>
    %700 = arith.mulf %698, %699 : vector<3x32xf32>
    %701 = arith.addf %688, %700 : vector<3x32xf32>
    %702 = vector.extract_strided_slice %17 {offsets = [0, 10], sizes = [3, 1], strides = [1, 1]} : vector<4x16xf32> to vector<3x1xf32>
    %703 = vector.broadcast %702 : vector<3x1xf32> to vector<3x32xf32>
    %704 = vector.broadcast %696 : vector<1x32xf32> to vector<3x32xf32>
    %705 = arith.mulf %703, %704 : vector<3x32xf32>
    %706 = arith.addf %693, %705 : vector<3x32xf32>
    %707 = vector.extract_strided_slice %0 {offsets = [4, 0], sizes = [1, 32], strides = [1, 1]} : vector<9x32xf32> to vector<1x32xf32>
    %708 = vector.shape_cast %707 : vector<1x32xf32> to vector<32xf32>
    %709 = vector.shape_cast %708 : vector<32xf32> to vector<1x32xf32>
    %710 = vector.extract_strided_slice %13 {offsets = [0, 11], sizes = [3, 1], strides = [1, 1]} : vector<4x16xf32> to vector<3x1xf32>
    %711 = vector.broadcast %710 : vector<3x1xf32> to vector<3x32xf32>
    %712 = vector.broadcast %709 : vector<1x32xf32> to vector<3x32xf32>
    %713 = arith.mulf %711, %712 : vector<3x32xf32>
    %714 = arith.addf %701, %713 : vector<3x32xf32>
    %715 = vector.extract_strided_slice %17 {offsets = [0, 11], sizes = [3, 1], strides = [1, 1]} : vector<4x16xf32> to vector<3x1xf32>
    %716 = vector.broadcast %715 : vector<3x1xf32> to vector<3x32xf32>
    %717 = vector.broadcast %709 : vector<1x32xf32> to vector<3x32xf32>
    %718 = arith.mulf %716, %717 : vector<3x32xf32>
    %719 = arith.addf %706, %718 : vector<3x32xf32>
    %720 = vector.extract_strided_slice %0 {offsets = [5, 0], sizes = [1, 32], strides = [1, 1]} : vector<9x32xf32> to vector<1x32xf32>
    %721 = vector.shape_cast %720 : vector<1x32xf32> to vector<32xf32>
    %722 = vector.shape_cast %721 : vector<32xf32> to vector<1x32xf32>
    %723 = vector.extract_strided_slice %13 {offsets = [0, 12], sizes = [3, 1], strides = [1, 1]} : vector<4x16xf32> to vector<3x1xf32>
    %724 = vector.broadcast %723 : vector<3x1xf32> to vector<3x32xf32>
    %725 = vector.broadcast %722 : vector<1x32xf32> to vector<3x32xf32>
    %726 = arith.mulf %724, %725 : vector<3x32xf32>
    %727 = arith.addf %714, %726 : vector<3x32xf32>
    %728 = vector.extract_strided_slice %17 {offsets = [0, 12], sizes = [3, 1], strides = [1, 1]} : vector<4x16xf32> to vector<3x1xf32>
    %729 = vector.broadcast %728 : vector<3x1xf32> to vector<3x32xf32>
    %730 = vector.broadcast %722 : vector<1x32xf32> to vector<3x32xf32>
    %731 = arith.mulf %729, %730 : vector<3x32xf32>
    %732 = arith.addf %719, %731 : vector<3x32xf32>
    %733 = vector.extract_strided_slice %0 {offsets = [6, 0], sizes = [1, 32], strides = [1, 1]} : vector<9x32xf32> to vector<1x32xf32>
    %734 = vector.shape_cast %733 : vector<1x32xf32> to vector<32xf32>
    %735 = vector.shape_cast %734 : vector<32xf32> to vector<1x32xf32>
    %736 = vector.extract_strided_slice %15 {offsets = [0, 10], sizes = [3, 1], strides = [1, 1]} : vector<4x16xf32> to vector<3x1xf32>
    %737 = vector.broadcast %736 : vector<3x1xf32> to vector<3x32xf32>
    %738 = vector.broadcast %735 : vector<1x32xf32> to vector<3x32xf32>
    %739 = arith.mulf %737, %738 : vector<3x32xf32>
    %740 = arith.addf %727, %739 : vector<3x32xf32>
    %741 = vector.extract_strided_slice %11 {offsets = [1, 10], sizes = [3, 1], strides = [1, 1]} : vector<4x16xf32> to vector<3x1xf32>
    %742 = vector.broadcast %741 : vector<3x1xf32> to vector<3x32xf32>
    %743 = vector.broadcast %735 : vector<1x32xf32> to vector<3x32xf32>
    %744 = arith.mulf %742, %743 : vector<3x32xf32>
    %745 = arith.addf %732, %744 : vector<3x32xf32>
    %746 = vector.extract_strided_slice %0 {offsets = [7, 0], sizes = [1, 32], strides = [1, 1]} : vector<9x32xf32> to vector<1x32xf32>
    %747 = vector.shape_cast %746 : vector<1x32xf32> to vector<32xf32>
    %748 = vector.shape_cast %747 : vector<32xf32> to vector<1x32xf32>
    %749 = vector.extract_strided_slice %15 {offsets = [0, 11], sizes = [3, 1], strides = [1, 1]} : vector<4x16xf32> to vector<3x1xf32>
    %750 = vector.broadcast %749 : vector<3x1xf32> to vector<3x32xf32>
    %751 = vector.broadcast %748 : vector<1x32xf32> to vector<3x32xf32>
    %752 = arith.mulf %750, %751 : vector<3x32xf32>
    %753 = arith.addf %740, %752 : vector<3x32xf32>
    %754 = vector.extract_strided_slice %11 {offsets = [1, 11], sizes = [3, 1], strides = [1, 1]} : vector<4x16xf32> to vector<3x1xf32>
    %755 = vector.broadcast %754 : vector<3x1xf32> to vector<3x32xf32>
    %756 = vector.broadcast %748 : vector<1x32xf32> to vector<3x32xf32>
    %757 = arith.mulf %755, %756 : vector<3x32xf32>
    %758 = arith.addf %745, %757 : vector<3x32xf32>
    %759 = vector.extract_strided_slice %0 {offsets = [8, 0], sizes = [1, 32], strides = [1, 1]} : vector<9x32xf32> to vector<1x32xf32>
    %760 = vector.shape_cast %759 : vector<1x32xf32> to vector<32xf32>
    %761 = vector.shape_cast %760 : vector<32xf32> to vector<1x32xf32>
    %762 = vector.extract_strided_slice %15 {offsets = [0, 12], sizes = [3, 1], strides = [1, 1]} : vector<4x16xf32> to vector<3x1xf32>
    %763 = vector.broadcast %762 : vector<3x1xf32> to vector<3x32xf32>
    %764 = vector.broadcast %761 : vector<1x32xf32> to vector<3x32xf32>
    %765 = arith.mulf %763, %764 : vector<3x32xf32>
    %766 = arith.addf %753, %765 : vector<3x32xf32>
    %767 = vector.extract_strided_slice %11 {offsets = [1, 12], sizes = [3, 1], strides = [1, 1]} : vector<4x16xf32> to vector<3x1xf32>
    %768 = vector.broadcast %767 : vector<3x1xf32> to vector<3x32xf32>
    %769 = vector.broadcast %761 : vector<1x32xf32> to vector<3x32xf32>
    %770 = arith.mulf %768, %769 : vector<3x32xf32>
    %771 = arith.addf %758, %770 : vector<3x32xf32>
    %772 = vector.broadcast %1 : vector<1x32xf32> to vector<3x32xf32>
    %773 = arith.addf %766, %772 : vector<3x32xf32>
    %cst_45 = arith.constant 0.000000e+00 : f32
    %774 = vector.broadcast %cst_45 : f32 to vector<3x32xf32>
    %775 = arith.maximumf %773, %774 : vector<3x32xf32>
    %776 = vector.broadcast %1 : vector<1x32xf32> to vector<3x32xf32>
    %777 = arith.addf %771, %776 : vector<3x32xf32>
    %cst_46 = arith.constant 0.000000e+00 : f32
    %778 = vector.broadcast %cst_46 : f32 to vector<3x32xf32>
    %779 = arith.maximumf %777, %778 : vector<3x32xf32>
    %cst_47 = arith.constant 0.000000e+00 : f32
    %780 = vector.broadcast %cst_47 : f32 to vector<3x32xf32>
    %cst_48 = arith.constant 0.000000e+00 : f32
    %781 = vector.broadcast %cst_48 : f32 to vector<3x32xf32>
    %782 = vector.extract_strided_slice %0 {offsets = [0, 0], sizes = [1, 32], strides = [1, 1]} : vector<9x32xf32> to vector<1x32xf32>
    %783 = vector.shape_cast %782 : vector<1x32xf32> to vector<32xf32>
    %784 = vector.shape_cast %783 : vector<32xf32> to vector<1x32xf32>
    %785 = vector.extract_strided_slice %11 {offsets = [0, 12], sizes = [3, 1], strides = [1, 1]} : vector<4x16xf32> to vector<3x1xf32>
    %786 = vector.broadcast %785 : vector<3x1xf32> to vector<3x32xf32>
    %787 = vector.broadcast %784 : vector<1x32xf32> to vector<3x32xf32>
    %788 = arith.mulf %786, %787 : vector<3x32xf32>
    %789 = arith.addf %780, %788 : vector<3x32xf32>
    %790 = vector.extract_strided_slice %15 {offsets = [0, 12], sizes = [3, 1], strides = [1, 1]} : vector<4x16xf32> to vector<3x1xf32>
    %791 = vector.broadcast %790 : vector<3x1xf32> to vector<3x32xf32>
    %792 = vector.broadcast %784 : vector<1x32xf32> to vector<3x32xf32>
    %793 = arith.mulf %791, %792 : vector<3x32xf32>
    %794 = arith.addf %781, %793 : vector<3x32xf32>
    %795 = vector.extract_strided_slice %0 {offsets = [1, 0], sizes = [1, 32], strides = [1, 1]} : vector<9x32xf32> to vector<1x32xf32>
    %796 = vector.shape_cast %795 : vector<1x32xf32> to vector<32xf32>
    %797 = vector.shape_cast %796 : vector<32xf32> to vector<1x32xf32>
    %798 = vector.extract_strided_slice %11 {offsets = [0, 13], sizes = [3, 1], strides = [1, 1]} : vector<4x16xf32> to vector<3x1xf32>
    %799 = vector.broadcast %798 : vector<3x1xf32> to vector<3x32xf32>
    %800 = vector.broadcast %797 : vector<1x32xf32> to vector<3x32xf32>
    %801 = arith.mulf %799, %800 : vector<3x32xf32>
    %802 = arith.addf %789, %801 : vector<3x32xf32>
    %803 = vector.extract_strided_slice %15 {offsets = [0, 13], sizes = [3, 1], strides = [1, 1]} : vector<4x16xf32> to vector<3x1xf32>
    %804 = vector.broadcast %803 : vector<3x1xf32> to vector<3x32xf32>
    %805 = vector.broadcast %797 : vector<1x32xf32> to vector<3x32xf32>
    %806 = arith.mulf %804, %805 : vector<3x32xf32>
    %807 = arith.addf %794, %806 : vector<3x32xf32>
    %808 = vector.extract_strided_slice %0 {offsets = [2, 0], sizes = [1, 32], strides = [1, 1]} : vector<9x32xf32> to vector<1x32xf32>
    %809 = vector.shape_cast %808 : vector<1x32xf32> to vector<32xf32>
    %810 = vector.shape_cast %809 : vector<32xf32> to vector<1x32xf32>
    %811 = vector.extract_strided_slice %11 {offsets = [0, 14], sizes = [3, 1], strides = [1, 1]} : vector<4x16xf32> to vector<3x1xf32>
    %812 = vector.broadcast %811 : vector<3x1xf32> to vector<3x32xf32>
    %813 = vector.broadcast %810 : vector<1x32xf32> to vector<3x32xf32>
    %814 = arith.mulf %812, %813 : vector<3x32xf32>
    %815 = arith.addf %802, %814 : vector<3x32xf32>
    %816 = vector.extract_strided_slice %15 {offsets = [0, 14], sizes = [3, 1], strides = [1, 1]} : vector<4x16xf32> to vector<3x1xf32>
    %817 = vector.broadcast %816 : vector<3x1xf32> to vector<3x32xf32>
    %818 = vector.broadcast %810 : vector<1x32xf32> to vector<3x32xf32>
    %819 = arith.mulf %817, %818 : vector<3x32xf32>
    %820 = arith.addf %807, %819 : vector<3x32xf32>
    %821 = vector.extract_strided_slice %0 {offsets = [3, 0], sizes = [1, 32], strides = [1, 1]} : vector<9x32xf32> to vector<1x32xf32>
    %822 = vector.shape_cast %821 : vector<1x32xf32> to vector<32xf32>
    %823 = vector.shape_cast %822 : vector<32xf32> to vector<1x32xf32>
    %824 = vector.extract_strided_slice %13 {offsets = [0, 12], sizes = [3, 1], strides = [1, 1]} : vector<4x16xf32> to vector<3x1xf32>
    %825 = vector.broadcast %824 : vector<3x1xf32> to vector<3x32xf32>
    %826 = vector.broadcast %823 : vector<1x32xf32> to vector<3x32xf32>
    %827 = arith.mulf %825, %826 : vector<3x32xf32>
    %828 = arith.addf %815, %827 : vector<3x32xf32>
    %829 = vector.extract_strided_slice %17 {offsets = [0, 12], sizes = [3, 1], strides = [1, 1]} : vector<4x16xf32> to vector<3x1xf32>
    %830 = vector.broadcast %829 : vector<3x1xf32> to vector<3x32xf32>
    %831 = vector.broadcast %823 : vector<1x32xf32> to vector<3x32xf32>
    %832 = arith.mulf %830, %831 : vector<3x32xf32>
    %833 = arith.addf %820, %832 : vector<3x32xf32>
    %834 = vector.extract_strided_slice %0 {offsets = [4, 0], sizes = [1, 32], strides = [1, 1]} : vector<9x32xf32> to vector<1x32xf32>
    %835 = vector.shape_cast %834 : vector<1x32xf32> to vector<32xf32>
    %836 = vector.shape_cast %835 : vector<32xf32> to vector<1x32xf32>
    %837 = vector.extract_strided_slice %13 {offsets = [0, 13], sizes = [3, 1], strides = [1, 1]} : vector<4x16xf32> to vector<3x1xf32>
    %838 = vector.broadcast %837 : vector<3x1xf32> to vector<3x32xf32>
    %839 = vector.broadcast %836 : vector<1x32xf32> to vector<3x32xf32>
    %840 = arith.mulf %838, %839 : vector<3x32xf32>
    %841 = arith.addf %828, %840 : vector<3x32xf32>
    %842 = vector.extract_strided_slice %17 {offsets = [0, 13], sizes = [3, 1], strides = [1, 1]} : vector<4x16xf32> to vector<3x1xf32>
    %843 = vector.broadcast %842 : vector<3x1xf32> to vector<3x32xf32>
    %844 = vector.broadcast %836 : vector<1x32xf32> to vector<3x32xf32>
    %845 = arith.mulf %843, %844 : vector<3x32xf32>
    %846 = arith.addf %833, %845 : vector<3x32xf32>
    %847 = vector.extract_strided_slice %0 {offsets = [5, 0], sizes = [1, 32], strides = [1, 1]} : vector<9x32xf32> to vector<1x32xf32>
    %848 = vector.shape_cast %847 : vector<1x32xf32> to vector<32xf32>
    %849 = vector.shape_cast %848 : vector<32xf32> to vector<1x32xf32>
    %850 = vector.extract_strided_slice %13 {offsets = [0, 14], sizes = [3, 1], strides = [1, 1]} : vector<4x16xf32> to vector<3x1xf32>
    %851 = vector.broadcast %850 : vector<3x1xf32> to vector<3x32xf32>
    %852 = vector.broadcast %849 : vector<1x32xf32> to vector<3x32xf32>
    %853 = arith.mulf %851, %852 : vector<3x32xf32>
    %854 = arith.addf %841, %853 : vector<3x32xf32>
    %855 = vector.extract_strided_slice %17 {offsets = [0, 14], sizes = [3, 1], strides = [1, 1]} : vector<4x16xf32> to vector<3x1xf32>
    %856 = vector.broadcast %855 : vector<3x1xf32> to vector<3x32xf32>
    %857 = vector.broadcast %849 : vector<1x32xf32> to vector<3x32xf32>
    %858 = arith.mulf %856, %857 : vector<3x32xf32>
    %859 = arith.addf %846, %858 : vector<3x32xf32>
    %860 = vector.extract_strided_slice %0 {offsets = [6, 0], sizes = [1, 32], strides = [1, 1]} : vector<9x32xf32> to vector<1x32xf32>
    %861 = vector.shape_cast %860 : vector<1x32xf32> to vector<32xf32>
    %862 = vector.shape_cast %861 : vector<32xf32> to vector<1x32xf32>
    %863 = vector.extract_strided_slice %15 {offsets = [0, 12], sizes = [3, 1], strides = [1, 1]} : vector<4x16xf32> to vector<3x1xf32>
    %864 = vector.broadcast %863 : vector<3x1xf32> to vector<3x32xf32>
    %865 = vector.broadcast %862 : vector<1x32xf32> to vector<3x32xf32>
    %866 = arith.mulf %864, %865 : vector<3x32xf32>
    %867 = arith.addf %854, %866 : vector<3x32xf32>
    %868 = vector.extract_strided_slice %11 {offsets = [1, 12], sizes = [3, 1], strides = [1, 1]} : vector<4x16xf32> to vector<3x1xf32>
    %869 = vector.broadcast %868 : vector<3x1xf32> to vector<3x32xf32>
    %870 = vector.broadcast %862 : vector<1x32xf32> to vector<3x32xf32>
    %871 = arith.mulf %869, %870 : vector<3x32xf32>
    %872 = arith.addf %859, %871 : vector<3x32xf32>
    %873 = vector.extract_strided_slice %0 {offsets = [7, 0], sizes = [1, 32], strides = [1, 1]} : vector<9x32xf32> to vector<1x32xf32>
    %874 = vector.shape_cast %873 : vector<1x32xf32> to vector<32xf32>
    %875 = vector.shape_cast %874 : vector<32xf32> to vector<1x32xf32>
    %876 = vector.extract_strided_slice %15 {offsets = [0, 13], sizes = [3, 1], strides = [1, 1]} : vector<4x16xf32> to vector<3x1xf32>
    %877 = vector.broadcast %876 : vector<3x1xf32> to vector<3x32xf32>
    %878 = vector.broadcast %875 : vector<1x32xf32> to vector<3x32xf32>
    %879 = arith.mulf %877, %878 : vector<3x32xf32>
    %880 = arith.addf %867, %879 : vector<3x32xf32>
    %881 = vector.extract_strided_slice %11 {offsets = [1, 13], sizes = [3, 1], strides = [1, 1]} : vector<4x16xf32> to vector<3x1xf32>
    %882 = vector.broadcast %881 : vector<3x1xf32> to vector<3x32xf32>
    %883 = vector.broadcast %875 : vector<1x32xf32> to vector<3x32xf32>
    %884 = arith.mulf %882, %883 : vector<3x32xf32>
    %885 = arith.addf %872, %884 : vector<3x32xf32>
    %886 = vector.extract_strided_slice %0 {offsets = [8, 0], sizes = [1, 32], strides = [1, 1]} : vector<9x32xf32> to vector<1x32xf32>
    %887 = vector.shape_cast %886 : vector<1x32xf32> to vector<32xf32>
    %888 = vector.shape_cast %887 : vector<32xf32> to vector<1x32xf32>
    %889 = vector.extract_strided_slice %15 {offsets = [0, 14], sizes = [3, 1], strides = [1, 1]} : vector<4x16xf32> to vector<3x1xf32>
    %890 = vector.broadcast %889 : vector<3x1xf32> to vector<3x32xf32>
    %891 = vector.broadcast %888 : vector<1x32xf32> to vector<3x32xf32>
    %892 = arith.mulf %890, %891 : vector<3x32xf32>
    %893 = arith.addf %880, %892 : vector<3x32xf32>
    %894 = vector.extract_strided_slice %11 {offsets = [1, 14], sizes = [3, 1], strides = [1, 1]} : vector<4x16xf32> to vector<3x1xf32>
    %895 = vector.broadcast %894 : vector<3x1xf32> to vector<3x32xf32>
    %896 = vector.broadcast %888 : vector<1x32xf32> to vector<3x32xf32>
    %897 = arith.mulf %895, %896 : vector<3x32xf32>
    %898 = arith.addf %885, %897 : vector<3x32xf32>
    %899 = vector.broadcast %1 : vector<1x32xf32> to vector<3x32xf32>
    %900 = arith.addf %893, %899 : vector<3x32xf32>
    %cst_49 = arith.constant 0.000000e+00 : f32
    %901 = vector.broadcast %cst_49 : f32 to vector<3x32xf32>
    %902 = arith.maximumf %900, %901 : vector<3x32xf32>
    %903 = vector.broadcast %1 : vector<1x32xf32> to vector<3x32xf32>
    %904 = arith.addf %898, %903 : vector<3x32xf32>
    %cst_50 = arith.constant 0.000000e+00 : f32
    %905 = vector.broadcast %cst_50 : f32 to vector<3x32xf32>
    %906 = arith.maximumf %904, %905 : vector<3x32xf32>
    %cst_51 = arith.constant 0.000000e+00 : f32
    %907 = vector.broadcast %cst_51 : f32 to vector<2x32xf32>
    %cst_52 = arith.constant 0.000000e+00 : f32
    %908 = vector.broadcast %cst_52 : f32 to vector<2x32xf32>
    %909 = vector.extract_strided_slice %2 {offsets = [0, 0], sizes = [1, 32], strides = [1, 1]} : vector<9x32xf32> to vector<1x32xf32>
    %910 = vector.shape_cast %909 : vector<1x32xf32> to vector<32xf32>
    %911 = vector.shape_cast %910 : vector<32xf32> to vector<1x32xf32>
    %912 = vector.extract_strided_slice %140 {offsets = [0, 0], sizes = [2, 32], strides = [1, 1]} : vector<3x32xf32> to vector<2x32xf32>
    %913 = vector.broadcast %911 : vector<1x32xf32> to vector<2x32xf32>
    %914 = arith.mulf %912, %913 : vector<2x32xf32>
    %915 = arith.addf %908, %914 : vector<2x32xf32>
    %916 = vector.extract_strided_slice %2 {offsets = [1, 0], sizes = [1, 32], strides = [1, 1]} : vector<9x32xf32> to vector<1x32xf32>
    %917 = vector.shape_cast %916 : vector<1x32xf32> to vector<32xf32>
    %918 = vector.shape_cast %917 : vector<32xf32> to vector<1x32xf32>
    %919 = vector.extract_strided_slice %267 {offsets = [0, 0], sizes = [2, 32], strides = [1, 1]} : vector<3x32xf32> to vector<2x32xf32>
    %920 = vector.broadcast %918 : vector<1x32xf32> to vector<2x32xf32>
    %921 = arith.mulf %919, %920 : vector<2x32xf32>
    %922 = arith.addf %915, %921 : vector<2x32xf32>
    %923 = vector.extract_strided_slice %2 {offsets = [2, 0], sizes = [1, 32], strides = [1, 1]} : vector<9x32xf32> to vector<1x32xf32>
    %924 = vector.shape_cast %923 : vector<1x32xf32> to vector<32xf32>
    %925 = vector.shape_cast %924 : vector<32xf32> to vector<1x32xf32>
    %926 = vector.extract_strided_slice %394 {offsets = [0, 0], sizes = [2, 32], strides = [1, 1]} : vector<3x32xf32> to vector<2x32xf32>
    %927 = vector.broadcast %925 : vector<1x32xf32> to vector<2x32xf32>
    %928 = arith.mulf %926, %927 : vector<2x32xf32>
    %929 = arith.addf %922, %928 : vector<2x32xf32>
    %930 = vector.extract_strided_slice %2 {offsets = [3, 0], sizes = [1, 32], strides = [1, 1]} : vector<9x32xf32> to vector<1x32xf32>
    %931 = vector.shape_cast %930 : vector<1x32xf32> to vector<32xf32>
    %932 = vector.shape_cast %931 : vector<32xf32> to vector<1x32xf32>
    %933 = vector.extract_strided_slice %144 {offsets = [0, 0], sizes = [2, 32], strides = [1, 1]} : vector<3x32xf32> to vector<2x32xf32>
    %934 = vector.broadcast %932 : vector<1x32xf32> to vector<2x32xf32>
    %935 = arith.mulf %933, %934 : vector<2x32xf32>
    %936 = arith.addf %929, %935 : vector<2x32xf32>
    %937 = vector.extract_strided_slice %2 {offsets = [4, 0], sizes = [1, 32], strides = [1, 1]} : vector<9x32xf32> to vector<1x32xf32>
    %938 = vector.shape_cast %937 : vector<1x32xf32> to vector<32xf32>
    %939 = vector.shape_cast %938 : vector<32xf32> to vector<1x32xf32>
    %940 = vector.extract_strided_slice %271 {offsets = [0, 0], sizes = [2, 32], strides = [1, 1]} : vector<3x32xf32> to vector<2x32xf32>
    %941 = vector.broadcast %939 : vector<1x32xf32> to vector<2x32xf32>
    %942 = arith.mulf %940, %941 : vector<2x32xf32>
    %943 = arith.addf %936, %942 : vector<2x32xf32>
    %944 = vector.extract_strided_slice %2 {offsets = [5, 0], sizes = [1, 32], strides = [1, 1]} : vector<9x32xf32> to vector<1x32xf32>
    %945 = vector.shape_cast %944 : vector<1x32xf32> to vector<32xf32>
    %946 = vector.shape_cast %945 : vector<32xf32> to vector<1x32xf32>
    %947 = vector.extract_strided_slice %398 {offsets = [0, 0], sizes = [2, 32], strides = [1, 1]} : vector<3x32xf32> to vector<2x32xf32>
    %948 = vector.broadcast %946 : vector<1x32xf32> to vector<2x32xf32>
    %949 = arith.mulf %947, %948 : vector<2x32xf32>
    %950 = arith.addf %943, %949 : vector<2x32xf32>
    %951 = vector.extract_strided_slice %2 {offsets = [6, 0], sizes = [1, 32], strides = [1, 1]} : vector<9x32xf32> to vector<1x32xf32>
    %952 = vector.shape_cast %951 : vector<1x32xf32> to vector<32xf32>
    %953 = vector.shape_cast %952 : vector<32xf32> to vector<1x32xf32>
    %954 = vector.extract_strided_slice %140 {offsets = [1, 0], sizes = [2, 32], strides = [1, 1]} : vector<3x32xf32> to vector<2x32xf32>
    %955 = vector.broadcast %953 : vector<1x32xf32> to vector<2x32xf32>
    %956 = arith.mulf %954, %955 : vector<2x32xf32>
    %957 = arith.addf %950, %956 : vector<2x32xf32>
    %958 = vector.extract_strided_slice %2 {offsets = [7, 0], sizes = [1, 32], strides = [1, 1]} : vector<9x32xf32> to vector<1x32xf32>
    %959 = vector.shape_cast %958 : vector<1x32xf32> to vector<32xf32>
    %960 = vector.shape_cast %959 : vector<32xf32> to vector<1x32xf32>
    %961 = vector.extract_strided_slice %267 {offsets = [1, 0], sizes = [2, 32], strides = [1, 1]} : vector<3x32xf32> to vector<2x32xf32>
    %962 = vector.broadcast %960 : vector<1x32xf32> to vector<2x32xf32>
    %963 = arith.mulf %961, %962 : vector<2x32xf32>
    %964 = arith.addf %957, %963 : vector<2x32xf32>
    %965 = vector.extract_strided_slice %2 {offsets = [8, 0], sizes = [1, 32], strides = [1, 1]} : vector<9x32xf32> to vector<1x32xf32>
    %966 = vector.shape_cast %965 : vector<1x32xf32> to vector<32xf32>
    %967 = vector.shape_cast %966 : vector<32xf32> to vector<1x32xf32>
    %968 = vector.extract_strided_slice %394 {offsets = [1, 0], sizes = [2, 32], strides = [1, 1]} : vector<3x32xf32> to vector<2x32xf32>
    %969 = vector.broadcast %967 : vector<1x32xf32> to vector<2x32xf32>
    %970 = arith.mulf %968, %969 : vector<2x32xf32>
    %971 = arith.addf %964, %970 : vector<2x32xf32>
    %972 = vector.broadcast %3 : vector<1x32xf32> to vector<2x32xf32>
    %973 = arith.addf %971, %972 : vector<2x32xf32>
    %cst_53 = arith.constant dense<0.000000e+00> : vector<2x32xf32>
    %974 = tpu.matmul %973, %4, %cst_53 {dimension_numbers = #tpu.dot_dimension_numbers<[1], [0], [0], [1], [0, 0, 1, 1], [], []>} : vector<2x32xf32>, vector<32x32xf32>, vector<2x32xf32> -> vector<2x32xf32>
    %975 = vector.broadcast %5 : vector<1x32xf32> to vector<2x32xf32>
    %976 = arith.addf %974, %975 : vector<2x32xf32>
    %cst_54 = arith.constant 0.000000e+00 : f32
    %977 = vector.broadcast %cst_54 : f32 to vector<2x32xf32>
    %978 = arith.maximumf %976, %977 : vector<2x32xf32>
    %979 = vector.extract_strided_slice %6 {offsets = [0, 0, 0], sizes = [1, 32, 32], strides = [1, 1, 1]} : vector<3x32x32xf32> to vector<1x32x32xf32>
    %980 = vector.shape_cast %979 : vector<1x32x32xf32> to vector<32x32xf32>
    %cst_55 = arith.constant dense<0.000000e+00> : vector<2x32xf32>
    %981 = tpu.matmul %978, %980, %cst_55 {dimension_numbers = #tpu.dot_dimension_numbers<[1], [0], [0], [1], [0, 0, 1, 1], [], []>} : vector<2x32xf32>, vector<32x32xf32>, vector<2x32xf32> -> vector<2x32xf32>
    %982 = arith.addf %907, %981 : vector<2x32xf32>
    %cst_56 = arith.constant 0.000000e+00 : f32
    %983 = vector.broadcast %cst_56 : f32 to vector<2x32xf32>
    %984 = vector.extract_strided_slice %2 {offsets = [0, 0], sizes = [1, 32], strides = [1, 1]} : vector<9x32xf32> to vector<1x32xf32>
    %985 = vector.shape_cast %984 : vector<1x32xf32> to vector<32xf32>
    %986 = vector.shape_cast %985 : vector<32xf32> to vector<1x32xf32>
    %987 = vector.extract_strided_slice %394 {offsets = [0, 0], sizes = [2, 32], strides = [1, 1]} : vector<3x32xf32> to vector<2x32xf32>
    %988 = vector.broadcast %986 : vector<1x32xf32> to vector<2x32xf32>
    %989 = arith.mulf %987, %988 : vector<2x32xf32>
    %990 = arith.addf %983, %989 : vector<2x32xf32>
    %991 = vector.extract_strided_slice %2 {offsets = [1, 0], sizes = [1, 32], strides = [1, 1]} : vector<9x32xf32> to vector<1x32xf32>
    %992 = vector.shape_cast %991 : vector<1x32xf32> to vector<32xf32>
    %993 = vector.shape_cast %992 : vector<32xf32> to vector<1x32xf32>
    %994 = vector.extract_strided_slice %521 {offsets = [0, 0], sizes = [2, 32], strides = [1, 1]} : vector<3x32xf32> to vector<2x32xf32>
    %995 = vector.broadcast %993 : vector<1x32xf32> to vector<2x32xf32>
    %996 = arith.mulf %994, %995 : vector<2x32xf32>
    %997 = arith.addf %990, %996 : vector<2x32xf32>
    %998 = vector.extract_strided_slice %2 {offsets = [2, 0], sizes = [1, 32], strides = [1, 1]} : vector<9x32xf32> to vector<1x32xf32>
    %999 = vector.shape_cast %998 : vector<1x32xf32> to vector<32xf32>
    %1000 = vector.shape_cast %999 : vector<32xf32> to vector<1x32xf32>
    %1001 = vector.extract_strided_slice %648 {offsets = [0, 0], sizes = [2, 32], strides = [1, 1]} : vector<3x32xf32> to vector<2x32xf32>
    %1002 = vector.broadcast %1000 : vector<1x32xf32> to vector<2x32xf32>
    %1003 = arith.mulf %1001, %1002 : vector<2x32xf32>
    %1004 = arith.addf %997, %1003 : vector<2x32xf32>
    %1005 = vector.extract_strided_slice %2 {offsets = [3, 0], sizes = [1, 32], strides = [1, 1]} : vector<9x32xf32> to vector<1x32xf32>
    %1006 = vector.shape_cast %1005 : vector<1x32xf32> to vector<32xf32>
    %1007 = vector.shape_cast %1006 : vector<32xf32> to vector<1x32xf32>
    %1008 = vector.extract_strided_slice %398 {offsets = [0, 0], sizes = [2, 32], strides = [1, 1]} : vector<3x32xf32> to vector<2x32xf32>
    %1009 = vector.broadcast %1007 : vector<1x32xf32> to vector<2x32xf32>
    %1010 = arith.mulf %1008, %1009 : vector<2x32xf32>
    %1011 = arith.addf %1004, %1010 : vector<2x32xf32>
    %1012 = vector.extract_strided_slice %2 {offsets = [4, 0], sizes = [1, 32], strides = [1, 1]} : vector<9x32xf32> to vector<1x32xf32>
    %1013 = vector.shape_cast %1012 : vector<1x32xf32> to vector<32xf32>
    %1014 = vector.shape_cast %1013 : vector<32xf32> to vector<1x32xf32>
    %1015 = vector.extract_strided_slice %525 {offsets = [0, 0], sizes = [2, 32], strides = [1, 1]} : vector<3x32xf32> to vector<2x32xf32>
    %1016 = vector.broadcast %1014 : vector<1x32xf32> to vector<2x32xf32>
    %1017 = arith.mulf %1015, %1016 : vector<2x32xf32>
    %1018 = arith.addf %1011, %1017 : vector<2x32xf32>
    %1019 = vector.extract_strided_slice %2 {offsets = [5, 0], sizes = [1, 32], strides = [1, 1]} : vector<9x32xf32> to vector<1x32xf32>
    %1020 = vector.shape_cast %1019 : vector<1x32xf32> to vector<32xf32>
    %1021 = vector.shape_cast %1020 : vector<32xf32> to vector<1x32xf32>
    %1022 = vector.extract_strided_slice %652 {offsets = [0, 0], sizes = [2, 32], strides = [1, 1]} : vector<3x32xf32> to vector<2x32xf32>
    %1023 = vector.broadcast %1021 : vector<1x32xf32> to vector<2x32xf32>
    %1024 = arith.mulf %1022, %1023 : vector<2x32xf32>
    %1025 = arith.addf %1018, %1024 : vector<2x32xf32>
    %1026 = vector.extract_strided_slice %2 {offsets = [6, 0], sizes = [1, 32], strides = [1, 1]} : vector<9x32xf32> to vector<1x32xf32>
    %1027 = vector.shape_cast %1026 : vector<1x32xf32> to vector<32xf32>
    %1028 = vector.shape_cast %1027 : vector<32xf32> to vector<1x32xf32>
    %1029 = vector.extract_strided_slice %394 {offsets = [1, 0], sizes = [2, 32], strides = [1, 1]} : vector<3x32xf32> to vector<2x32xf32>
    %1030 = vector.broadcast %1028 : vector<1x32xf32> to vector<2x32xf32>
    %1031 = arith.mulf %1029, %1030 : vector<2x32xf32>
    %1032 = arith.addf %1025, %1031 : vector<2x32xf32>
    %1033 = vector.extract_strided_slice %2 {offsets = [7, 0], sizes = [1, 32], strides = [1, 1]} : vector<9x32xf32> to vector<1x32xf32>
    %1034 = vector.shape_cast %1033 : vector<1x32xf32> to vector<32xf32>
    %1035 = vector.shape_cast %1034 : vector<32xf32> to vector<1x32xf32>
    %1036 = vector.extract_strided_slice %521 {offsets = [1, 0], sizes = [2, 32], strides = [1, 1]} : vector<3x32xf32> to vector<2x32xf32>
    %1037 = vector.broadcast %1035 : vector<1x32xf32> to vector<2x32xf32>
    %1038 = arith.mulf %1036, %1037 : vector<2x32xf32>
    %1039 = arith.addf %1032, %1038 : vector<2x32xf32>
    %1040 = vector.extract_strided_slice %2 {offsets = [8, 0], sizes = [1, 32], strides = [1, 1]} : vector<9x32xf32> to vector<1x32xf32>
    %1041 = vector.shape_cast %1040 : vector<1x32xf32> to vector<32xf32>
    %1042 = vector.shape_cast %1041 : vector<32xf32> to vector<1x32xf32>
    %1043 = vector.extract_strided_slice %648 {offsets = [1, 0], sizes = [2, 32], strides = [1, 1]} : vector<3x32xf32> to vector<2x32xf32>
    %1044 = vector.broadcast %1042 : vector<1x32xf32> to vector<2x32xf32>
    %1045 = arith.mulf %1043, %1044 : vector<2x32xf32>
    %1046 = arith.addf %1039, %1045 : vector<2x32xf32>
    %1047 = vector.broadcast %3 : vector<1x32xf32> to vector<2x32xf32>
    %1048 = arith.addf %1046, %1047 : vector<2x32xf32>
    %cst_57 = arith.constant dense<0.000000e+00> : vector<2x32xf32>
    %1049 = tpu.matmul %1048, %4, %cst_57 {dimension_numbers = #tpu.dot_dimension_numbers<[1], [0], [0], [1], [0, 0, 1, 1], [], []>} : vector<2x32xf32>, vector<32x32xf32>, vector<2x32xf32> -> vector<2x32xf32>
    %1050 = vector.broadcast %5 : vector<1x32xf32> to vector<2x32xf32>
    %1051 = arith.addf %1049, %1050 : vector<2x32xf32>
    %cst_58 = arith.constant 0.000000e+00 : f32
    %1052 = vector.broadcast %cst_58 : f32 to vector<2x32xf32>
    %1053 = arith.maximumf %1051, %1052 : vector<2x32xf32>
    %1054 = vector.extract_strided_slice %6 {offsets = [1, 0, 0], sizes = [1, 32, 32], strides = [1, 1, 1]} : vector<3x32x32xf32> to vector<1x32x32xf32>
    %1055 = vector.shape_cast %1054 : vector<1x32x32xf32> to vector<32x32xf32>
    %cst_59 = arith.constant dense<0.000000e+00> : vector<2x32xf32>
    %1056 = tpu.matmul %1053, %1055, %cst_59 {dimension_numbers = #tpu.dot_dimension_numbers<[1], [0], [0], [1], [0, 0, 1, 1], [], []>} : vector<2x32xf32>, vector<32x32xf32>, vector<2x32xf32> -> vector<2x32xf32>
    %1057 = arith.addf %982, %1056 : vector<2x32xf32>
    %cst_60 = arith.constant 0.000000e+00 : f32
    %1058 = vector.broadcast %cst_60 : f32 to vector<2x32xf32>
    %1059 = vector.extract_strided_slice %2 {offsets = [0, 0], sizes = [1, 32], strides = [1, 1]} : vector<9x32xf32> to vector<1x32xf32>
    %1060 = vector.shape_cast %1059 : vector<1x32xf32> to vector<32xf32>
    %1061 = vector.shape_cast %1060 : vector<32xf32> to vector<1x32xf32>
    %1062 = vector.extract_strided_slice %648 {offsets = [0, 0], sizes = [2, 32], strides = [1, 1]} : vector<3x32xf32> to vector<2x32xf32>
    %1063 = vector.broadcast %1061 : vector<1x32xf32> to vector<2x32xf32>
    %1064 = arith.mulf %1062, %1063 : vector<2x32xf32>
    %1065 = arith.addf %1058, %1064 : vector<2x32xf32>
    %1066 = vector.extract_strided_slice %2 {offsets = [1, 0], sizes = [1, 32], strides = [1, 1]} : vector<9x32xf32> to vector<1x32xf32>
    %1067 = vector.shape_cast %1066 : vector<1x32xf32> to vector<32xf32>
    %1068 = vector.shape_cast %1067 : vector<32xf32> to vector<1x32xf32>
    %1069 = vector.extract_strided_slice %775 {offsets = [0, 0], sizes = [2, 32], strides = [1, 1]} : vector<3x32xf32> to vector<2x32xf32>
    %1070 = vector.broadcast %1068 : vector<1x32xf32> to vector<2x32xf32>
    %1071 = arith.mulf %1069, %1070 : vector<2x32xf32>
    %1072 = arith.addf %1065, %1071 : vector<2x32xf32>
    %1073 = vector.extract_strided_slice %2 {offsets = [2, 0], sizes = [1, 32], strides = [1, 1]} : vector<9x32xf32> to vector<1x32xf32>
    %1074 = vector.shape_cast %1073 : vector<1x32xf32> to vector<32xf32>
    %1075 = vector.shape_cast %1074 : vector<32xf32> to vector<1x32xf32>
    %1076 = vector.extract_strided_slice %902 {offsets = [0, 0], sizes = [2, 32], strides = [1, 1]} : vector<3x32xf32> to vector<2x32xf32>
    %1077 = vector.broadcast %1075 : vector<1x32xf32> to vector<2x32xf32>
    %1078 = arith.mulf %1076, %1077 : vector<2x32xf32>
    %1079 = arith.addf %1072, %1078 : vector<2x32xf32>
    %1080 = vector.extract_strided_slice %2 {offsets = [3, 0], sizes = [1, 32], strides = [1, 1]} : vector<9x32xf32> to vector<1x32xf32>
    %1081 = vector.shape_cast %1080 : vector<1x32xf32> to vector<32xf32>
    %1082 = vector.shape_cast %1081 : vector<32xf32> to vector<1x32xf32>
    %1083 = vector.extract_strided_slice %652 {offsets = [0, 0], sizes = [2, 32], strides = [1, 1]} : vector<3x32xf32> to vector<2x32xf32>
    %1084 = vector.broadcast %1082 : vector<1x32xf32> to vector<2x32xf32>
    %1085 = arith.mulf %1083, %1084 : vector<2x32xf32>
    %1086 = arith.addf %1079, %1085 : vector<2x32xf32>
    %1087 = vector.extract_strided_slice %2 {offsets = [4, 0], sizes = [1, 32], strides = [1, 1]} : vector<9x32xf32> to vector<1x32xf32>
    %1088 = vector.shape_cast %1087 : vector<1x32xf32> to vector<32xf32>
    %1089 = vector.shape_cast %1088 : vector<32xf32> to vector<1x32xf32>
    %1090 = vector.extract_strided_slice %779 {offsets = [0, 0], sizes = [2, 32], strides = [1, 1]} : vector<3x32xf32> to vector<2x32xf32>
    %1091 = vector.broadcast %1089 : vector<1x32xf32> to vector<2x32xf32>
    %1092 = arith.mulf %1090, %1091 : vector<2x32xf32>
    %1093 = arith.addf %1086, %1092 : vector<2x32xf32>
    %1094 = vector.extract_strided_slice %2 {offsets = [5, 0], sizes = [1, 32], strides = [1, 1]} : vector<9x32xf32> to vector<1x32xf32>
    %1095 = vector.shape_cast %1094 : vector<1x32xf32> to vector<32xf32>
    %1096 = vector.shape_cast %1095 : vector<32xf32> to vector<1x32xf32>
    %1097 = vector.extract_strided_slice %906 {offsets = [0, 0], sizes = [2, 32], strides = [1, 1]} : vector<3x32xf32> to vector<2x32xf32>
    %1098 = vector.broadcast %1096 : vector<1x32xf32> to vector<2x32xf32>
    %1099 = arith.mulf %1097, %1098 : vector<2x32xf32>
    %1100 = arith.addf %1093, %1099 : vector<2x32xf32>
    %1101 = vector.extract_strided_slice %2 {offsets = [6, 0], sizes = [1, 32], strides = [1, 1]} : vector<9x32xf32> to vector<1x32xf32>
    %1102 = vector.shape_cast %1101 : vector<1x32xf32> to vector<32xf32>
    %1103 = vector.shape_cast %1102 : vector<32xf32> to vector<1x32xf32>
    %1104 = vector.extract_strided_slice %648 {offsets = [1, 0], sizes = [2, 32], strides = [1, 1]} : vector<3x32xf32> to vector<2x32xf32>
    %1105 = vector.broadcast %1103 : vector<1x32xf32> to vector<2x32xf32>
    %1106 = arith.mulf %1104, %1105 : vector<2x32xf32>
    %1107 = arith.addf %1100, %1106 : vector<2x32xf32>
    %1108 = vector.extract_strided_slice %2 {offsets = [7, 0], sizes = [1, 32], strides = [1, 1]} : vector<9x32xf32> to vector<1x32xf32>
    %1109 = vector.shape_cast %1108 : vector<1x32xf32> to vector<32xf32>
    %1110 = vector.shape_cast %1109 : vector<32xf32> to vector<1x32xf32>
    %1111 = vector.extract_strided_slice %775 {offsets = [1, 0], sizes = [2, 32], strides = [1, 1]} : vector<3x32xf32> to vector<2x32xf32>
    %1112 = vector.broadcast %1110 : vector<1x32xf32> to vector<2x32xf32>
    %1113 = arith.mulf %1111, %1112 : vector<2x32xf32>
    %1114 = arith.addf %1107, %1113 : vector<2x32xf32>
    %1115 = vector.extract_strided_slice %2 {offsets = [8, 0], sizes = [1, 32], strides = [1, 1]} : vector<9x32xf32> to vector<1x32xf32>
    %1116 = vector.shape_cast %1115 : vector<1x32xf32> to vector<32xf32>
    %1117 = vector.shape_cast %1116 : vector<32xf32> to vector<1x32xf32>
    %1118 = vector.extract_strided_slice %902 {offsets = [1, 0], sizes = [2, 32], strides = [1, 1]} : vector<3x32xf32> to vector<2x32xf32>
    %1119 = vector.broadcast %1117 : vector<1x32xf32> to vector<2x32xf32>
    %1120 = arith.mulf %1118, %1119 : vector<2x32xf32>
    %1121 = arith.addf %1114, %1120 : vector<2x32xf32>
    %1122 = vector.broadcast %3 : vector<1x32xf32> to vector<2x32xf32>
    %1123 = arith.addf %1121, %1122 : vector<2x32xf32>
    %cst_61 = arith.constant dense<0.000000e+00> : vector<2x32xf32>
    %1124 = tpu.matmul %1123, %4, %cst_61 {dimension_numbers = #tpu.dot_dimension_numbers<[1], [0], [0], [1], [0, 0, 1, 1], [], []>} : vector<2x32xf32>, vector<32x32xf32>, vector<2x32xf32> -> vector<2x32xf32>
    %1125 = vector.broadcast %5 : vector<1x32xf32> to vector<2x32xf32>
    %1126 = arith.addf %1124, %1125 : vector<2x32xf32>
    %cst_62 = arith.constant 0.000000e+00 : f32
    %1127 = vector.broadcast %cst_62 : f32 to vector<2x32xf32>
    %1128 = arith.maximumf %1126, %1127 : vector<2x32xf32>
    %1129 = vector.extract_strided_slice %6 {offsets = [2, 0, 0], sizes = [1, 32, 32], strides = [1, 1, 1]} : vector<3x32x32xf32> to vector<1x32x32xf32>
    %1130 = vector.shape_cast %1129 : vector<1x32x32xf32> to vector<32x32xf32>
    %cst_63 = arith.constant dense<0.000000e+00> : vector<2x32xf32>
    %1131 = tpu.matmul %1128, %1130, %cst_63 {dimension_numbers = #tpu.dot_dimension_numbers<[1], [0], [0], [1], [0, 0, 1, 1], [], []>} : vector<2x32xf32>, vector<32x32xf32>, vector<2x32xf32> -> vector<2x32xf32>
    %1132 = arith.addf %1057, %1131 : vector<2x32xf32>
    %1133 = vector.broadcast %7 : vector<1x32xf32> to vector<2x32xf32>
    %1134 = arith.addf %1132, %1133 : vector<2x32xf32>
    %cst_64 = arith.constant 5.65685415 : f32
    %1135 = vector.broadcast %cst_64 : f32 to vector<2x32xf32>
    %1136 = arith.mulf %1134, %1135 : vector<2x32xf32>
    %1137 = vector.shape_cast %8 : vector<1x2x32xf32> to vector<2x32xf32>
    %1138 = arith.addf %1136, %1137 : vector<2x32xf32>
    %1139 = vector.shape_cast %1138 : vector<2x32xf32> to vector<1x1x2x32xf32>
    %c0_65 = arith.constant 0 : index
    %c0_66 = arith.constant 0 : index
    %c0_67 = arith.constant 0 : index
    %c0_68 = arith.constant 0 : index
    %1140 = vector.load %arg12[%c0_65, %c0_66, %c0_67, %c0_68] : memref<1x1x2x32xf32, #tpu.memory_space<vmem>>, vector<1x1x2x32xf32>
    tpu.vector_store %arg12[%c0_65, %c0_66, %c0_67, %c0_68], %1139 {strides = array<i32>} : memref<1x1x2x32xf32, #tpu.memory_space<vmem>>, vector<1x1x2x32xf32>,
    return
  }
  func.func @transform_0(%arg0: i32, %arg1: i32) -> (i32, i32, i32, i32, i32) {
    %c0_i32 = arith.constant 0 : i32
    %c0_i32_0 = arith.constant 0 : i32
    %c0_i32_1 = arith.constant 0 : i32
    %c0_i32_2 = arith.constant 0 : i32
    return %arg0, %arg1, %c0_i32, %c0_i32_0, %c0_i32_1 : i32, i32, i32, i32, i32
  }
  func.func @transform_1(%arg0: i32, %arg1: i32) -> (i32, i32) {
    %c0_i32 = arith.constant 0 : i32
    %c0_i32_0 = arith.constant 0 : i32
    %c0_i32_1 = arith.constant 0 : i32
    return %c0_i32, %c0_i32_0 : i32, i32
  }
  func.func @transform_2(%arg0: i32, %arg1: i32) -> (i32, i32) {
    %c0_i32 = arith.constant 0 : i32
    %c0_i32_0 = arith.constant 0 : i32
    %c0_i32_1 = arith.constant 0 : i32
    return %c0_i32, %c0_i32_0 : i32, i32
  }
  func.func @transform_3(%arg0: i32, %arg1: i32) -> (i32, i32) {
    %c0_i32 = arith.constant 0 : i32
    %c0_i32_0 = arith.constant 0 : i32
    %c0_i32_1 = arith.constant 0 : i32
    return %c0_i32, %c0_i32_0 : i32, i32
  }
  func.func @transform_4(%arg0: i32, %arg1: i32) -> (i32, i32) {
    %c0_i32 = arith.constant 0 : i32
    %c0_i32_0 = arith.constant 0 : i32
    %c0_i32_1 = arith.constant 0 : i32
    return %c0_i32, %c0_i32_0 : i32, i32
  }
  func.func @transform_5(%arg0: i32, %arg1: i32) -> (i32, i32) {
    %c0_i32 = arith.constant 0 : i32
    %c0_i32_0 = arith.constant 0 : i32
    %c0_i32_1 = arith.constant 0 : i32
    return %c0_i32, %c0_i32_0 : i32, i32
  }
  func.func @transform_6(%arg0: i32, %arg1: i32) -> (i32, i32) {
    %c0_i32 = arith.constant 0 : i32
    %c0_i32_0 = arith.constant 0 : i32
    %c0_i32_1 = arith.constant 0 : i32
    return %c0_i32, %c0_i32_0 : i32, i32
  }
  func.func @transform_7(%arg0: i32, %arg1: i32) -> (i32, i32, i32) {
    %c0_i32 = arith.constant 0 : i32
    %c0_i32_0 = arith.constant 0 : i32
    %c0_i32_1 = arith.constant 0 : i32
    %c0_i32_2 = arith.constant 0 : i32
    return %c0_i32, %c0_i32_0, %c0_i32_1 : i32, i32, i32
  }
  func.func @transform_8(%arg0: i32, %arg1: i32) -> (i32, i32) {
    %c0_i32 = arith.constant 0 : i32
    %c0_i32_0 = arith.constant 0 : i32
    %c0_i32_1 = arith.constant 0 : i32
    return %c0_i32, %c0_i32_0 : i32, i32
  }
  func.func @transform_9(%arg0: i32, %arg1: i32) -> (i32, i32, i32) {
    %c0_i32 = arith.constant 0 : i32
    %c0_i32_0 = arith.constant 0 : i32
    %c0_i32_1 = arith.constant 0 : i32
    return %arg1, %c0_i32, %c0_i32_0 : i32, i32, i32
  }
  func.func @transform_10(%arg0: i32, %arg1: i32) -> (i32, i32, i32, i32) {
    %c0_i32 = arith.constant 0 : i32
    %c0_i32_0 = arith.constant 0 : i32
    %c0_i32_1 = arith.constant 0 : i32
    return %arg0, %arg1, %c0_i32, %c0_i32_0 : i32, i32, i32, i32
  }
}

</mosaic_0001>

<llo_original>
// kernel: tpu_custom_call.1
$region0: #{tpu_custom_call.1}
  #allocation0 [shape = 'u32[]', space=smem, size = 0x4, offset = 0x4, fixed_abs, tag = 'smem constant byte address 0x4 - core index']
  #allocation1 [shape = 'u32[144,128]{1,0:T(1,128)}', space=vmem, size = 0x12000, scoped, tag = 'internal scratch']
  %s0 = inlined_call_operand.hbm [shape: f32[2,2,4,4,16], index: 0, kind: input, shape index: {}]
  %s1 = inlined_call_operand.hbm [shape: f32[9,32], index: 1, kind: input, shape index: {}]
  %s2 = inlined_call_operand.vmem [shape: f32[1,32], index: 2, kind: input, shape index: {}]
  %s3 = inlined_call_operand.hbm [shape: f32[9,32], index: 3, kind: input, shape index: {}]
  %s4 = inlined_call_operand.vmem [shape: f32[1,32], index: 4, kind: input, shape index: {}]
  %s5 = inlined_call_operand.hbm [shape: f32[32,32], index: 5, kind: input, shape index: {}]
  %s6 = inlined_call_operand.vmem [shape: f32[1,32], index: 6, kind: input, shape index: {}]
  %s7 = inlined_call_operand.hbm [shape: f32[3,32,32], index: 7, kind: input, shape index: {}]
  %s8 = inlined_call_operand.vmem [shape: f32[1,32], index: 8, kind: input, shape index: {}]
  %s9 = inlined_call_operand.vmem [shape: f32[2,2,32], index: 9, kind: input, shape index: {}]
  %s10 = inlined_call_operand.hbm [shape: f32[2,2,2,32], index: 10, kind: output, shape index: {}]
  %s11 = sld [smem:[#allocation0]]
  $region93: #{tpu_custom_call.1} parent=0
    _
  %s13 = ssub.s32 1, %s11
  %s14 = scalar_select 0, %s13, %s11
  $region1: #{tpu_custom_call.1} parent=0
    #allocation2 [shape = 'u8[16384]{0}', space=vmem, size = 0x4000, scoped, tag = 'input window, operand 0']
    #allocation3 [shape = 's32[2]{0}', space=sflag, size = 0x8, scoped, tag = 'scoped memory for tpu_custom_call.1']
    #allocation4 [shape = 's32[2]{0}', space=sflag, size = 0x8, scoped, tag = 'scoped memory for tpu_custom_call.1']
    #allocation5 [shape = 'u8[8192]{0}', space=vmem, size = 0x2000, scoped, tag = 'input window, operand 1, single buffered']
    #allocation6 [shape = 's32[1]{0}', space=sflag, size = 0x4, scoped, tag = 'scoped memory for tpu_custom_call.1']
    #allocation7 [shape = 'u8[8192]{0}', space=vmem, size = 0x2000, scoped, tag = 'input window, operand 3, single buffered']
    #allocation8 [shape = 'u8[16384]{0}', space=vmem, size = 0x4000, scoped, tag = 'input window, operand 5, single buffered']
    #allocation9 [shape = 's32[1]{0}', space=sflag, size = 0x4, scoped, tag = 'scoped memory for tpu_custom_call.1']
    #allocation10 [shape = 'u8[49152]{0}', space=vmem, size = 0xc000, scoped, tag = 'input window, operand 7, single buffered']
    #allocation11 [shape = 'u8[2048]{0}', space=vmem, size = 0x800, scoped, tag = 'output window, operand 0']
    %15 = vsyncpa [#allocation3], 0
    %s16 = scalar_lea.sflag [#allocation3], 1
    %17 = vsyncpa %s16, 0
    %18 = vsyncpa [#allocation6], 0
    %19 = vsyncpa [#allocation9], 0
    %20 = vsyncpa [#allocation4], 0
    %s21 = scalar_lea.sflag [#allocation4], 1
    %22 = vsyncpa %s21, 0
    loop: start=0, step=1, limit=6
    $region2: #{tpu_custom_call.1} parent=1 // loop_pre_header
      _
    $region3: #{tpu_custom_call.1} parent=1 // loop_header
      %s24 = sphi 0, %s28
      %p25 = scmp.ge.s32.totalorder %s24, 6
      %s31 = sphi 0, %s43
      %s32 = sphi 0, %s39
      %s33 = sphi 0, %s31
      %s34 = sphi 0, %s32
      %s35 = sphi 0, %s33
      %s36 = sphi 0, %s34
      %s48 = sphi 0, %s50
      %s51 = sphi 0, %s48
      %s52 = sphi 0, %s51
      %s68 = sphi 0, %s52
      %s72 = sphi 0, %s72
      %s74 = sphi 0, %s72
      %s75 = sphi 0, %s74
      %s89 = sphi 0, %s75
      %s93 = sphi 0, %s93
      %s95 = sphi 0, %s93
      %s96 = sphi 0, %s95
      %s110 = sphi 0, %s96
      %s114 = sphi 0, %s114
      %s116 = sphi 0, %s114
      %s117 = sphi 0, %s116
      %s131 = sphi 0, %s117
      %s135 = sphi 0, %s135
      %s137 = sphi 0, %s135
      %s138 = sphi 0, %s137
      %s152 = sphi 0, %s138
      %s156 = sphi 0, %s156
      %s158 = sphi 0, %s156
      %s159 = sphi 0, %s158
      %s173 = sphi 0, %s159
      %s177 = sphi 0, %s177
      %s179 = sphi 0, %s177
      %s180 = sphi 0, %s179
      %s194 = sphi 0, %s180
      %s198 = sphi 0, %s198
      %s200 = sphi 0, %s198
      %s201 = sphi 0, %s200
      %s215 = sphi 0, %s201
      %s219 = sphi 0, %s219
      %s221 = sphi 0, %s219
      %s222 = sphi 0, %s221
      %s236 = sphi 0, %s222
      %s242 = sphi 0, %s244
      %s245 = sphi 0, %s242
      %s246 = sphi 0, %s245
      %s262 = sphi 0, %s246
      %s270 = sphi 0, %s272
      %s273 = sphi 0, %s270
      %s274 = sphi 0, %s273
      %s290 = sphi 0, %s274
    $region4: #{tpu_custom_call.1} parent=1 // loop_header_branch
      %27 = sbr.rel (%p25) target = $region8
    $region5: #{tpu_custom_call.1} parent=1 // loop_body
      %s29 = ssub.s32 %s24, 1
      %s30 = ssub.s32 %s24, 2
      %s37 = sadd.s32 1, %s32
      %p38 = scmp.ge.s32.totalorder %s37, 2
      %s39 = scalar_select %p38, 0, %s37
      %s40 = sadd.s32 1, %s31
      %s41 = scalar_select %p38, %s40, %s31
      %p42 = scmp.ge.s32.totalorder %s41, 2
      %s43 = scalar_select %p42, 0, %s41
      %s44 = ssub.s32 %s31, %s43
      %s45 = ssub.s32 %s32, %s39
      %s46 = sor.u32 %s44, %s45
      %p47 = scmp.eq.s32.totalorder %s46, 0
      %s49 = sadd.s32 %s48, 1
      %s50 = scalar_select %p47, %s48, %s49
      %p53 = pneg %p47
      %p54 = scmp.eq.s32.totalorder %s24, 3
      %p55 = por %p53, %p54
      %p56 = scmp.ne.s32.totalorder %s48, %s51
      %p57 = scmp.eq.s32.totalorder %s24, 0
      %p58 = por %p56, %p57
      %p59 = scmp.ne.s32.totalorder %s48, %s51
      %p60 = scmp.eq.s32.totalorder %s29, 3
      %p61 = por %p59, %p60
      %p62 = scmp.ne.s32.totalorder %s51, %s52
      %p63 = scmp.eq.s32.totalorder %s29, 0
      %p64 = por %p62, %p63
      %p65 = scmp.ne.s32.totalorder %s51, %s52
      %p66 = scmp.eq.s32.totalorder %s30, 3
      %p67 = por %p65, %p66
      %p69 = scmp.ne.s32.totalorder %s52, %s68
      %p70 = scmp.eq.s32.totalorder %s30, 0
      %p71 = por %p69, %p70
      %s73 = sadd.s32 %s72, 1
      %p76 = scmp.eq.s32.totalorder %s24, 3
      %p77 = scmp.ne.s32.totalorder %s72, %s74
      %p78 = scmp.eq.s32.totalorder %s24, 0
      %p79 = por %p77, %p78
      %p80 = scmp.ne.s32.totalorder %s72, %s74
      %p81 = scmp.eq.s32.totalorder %s29, 3
      %p82 = por %p80, %p81
      %p83 = scmp.ne.s32.totalorder %s74, %s75
      %p84 = scmp.eq.s32.totalorder %s29, 0
      %p85 = por %p83, %p84
      %p86 = scmp.ne.s32.totalorder %s74, %s75
      %p87 = scmp.eq.s32.totalorder %s30, 3
      %p88 = por %p86, %p87
      %p90 = scmp.ne.s32.totalorder %s75, %s89
      %p91 = scmp.eq.s32.totalorder %s30, 0
      %p92 = por %p90, %p91
      %s94 = sadd.s32 %s93, 1
      %p97 = scmp.eq.s32.totalorder %s24, 3
      %p98 = scmp.ne.s32.totalorder %s93, %s95
      %p99 = scmp.eq.s32.totalorder %s24, 0
      %p100 = por %p98, %p99
      %p101 = scmp.ne.s32.totalorder %s93, %s95
      %p102 = scmp.eq.s32.totalorder %s29, 3
      %p103 = por %p101, %p102
      %p104 = scmp.ne.s32.totalorder %s95, %s96
      %p105 = scmp.eq.s32.totalorder %s29, 0
      %p106 = por %p104, %p105
      %p107 = scmp.ne.s32.totalorder %s95, %s96
      %p108 = scmp.eq.s32.totalorder %s30, 3
      %p109 = por %p107, %p108
      %p111 = scmp.ne.s32.totalorder %s96, %s110
      %p112 = scmp.eq.s32.totalorder %s30, 0
      %p113 = por %p111, %p112
      %s115 = sadd.s32 %s114, 1
      %p118 = scmp.eq.s32.totalorder %s24, 3
      %p119 = scmp.ne.s32.totalorder %s114, %s116
      %p120 = scmp.eq.s32.totalorder %s24, 0
      %p121 = por %p119, %p120
      %p122 = scmp.ne.s32.totalorder %s114, %s116
      %p123 = scmp.eq.s32.totalorder %s29, 3
      %p124 = por %p122, %p123
      %p125 = scmp.ne.s32.totalorder %s116, %s117
      %p126 = scmp.eq.s32.totalorder %s29, 0
      %p127 = por %p125, %p126
      %p128 = scmp.ne.s32.totalorder %s116, %s117
      %p129 = scmp.eq.s32.totalorder %s30, 3
      %p130 = por %p128, %p129
      %p132 = scmp.ne.s32.totalorder %s117, %s131
      %p133 = scmp.eq.s32.totalorder %s30, 0
      %p134 = por %p132, %p133
      %s136 = sadd.s32 %s135, 1
      %p139 = scmp.eq.s32.totalorder %s24, 3
      %p140 = scmp.ne.s32.totalorder %s135, %s137
      %p141 = scmp.eq.s32.totalorder %s24, 0
      %p142 = por %p140, %p141
      %p143 = scmp.ne.s32.totalorder %s135, %s137
      %p144 = scmp.eq.s32.totalorder %s29, 3
      %p145 = por %p143, %p144
      %p146 = scmp.ne.s32.totalorder %s137, %s138
      %p147 = scmp.eq.s32.totalorder %s29, 0
      %p148 = por %p146, %p147
      %p149 = scmp.ne.s32.totalorder %s137, %s138
      %p150 = scmp.eq.s32.totalorder %s30, 3
      %p151 = por %p149, %p150
      %p153 = scmp.ne.s32.totalorder %s138, %s152
      %p154 = scmp.eq.s32.totalorder %s30, 0
      %p155 = por %p153, %p154
      %s157 = sadd.s32 %s156, 1
      %p160 = scmp.eq.s32.totalorder %s24, 3
      %p161 = scmp.ne.s32.totalorder %s156, %s158
      %p162 = scmp.eq.s32.totalorder %s24, 0
      %p163 = por %p161, %p162
      %p164 = scmp.ne.s32.totalorder %s156, %s158
      %p165 = scmp.eq.s32.totalorder %s29, 3
      %p166 = por %p164, %p165
      %p167 = scmp.ne.s32.totalorder %s158, %s159
      %p168 = scmp.eq.s32.totalorder %s29, 0
      %p169 = por %p167, %p168
      %p170 = scmp.ne.s32.totalorder %s158, %s159
      %p171 = scmp.eq.s32.totalorder %s30, 3
      %p172 = por %p170, %p171
      %p174 = scmp.ne.s32.totalorder %s159, %s173
      %p175 = scmp.eq.s32.totalorder %s30, 0
      %p176 = por %p174, %p175
      %s178 = sadd.s32 %s177, 1
      %p181 = scmp.eq.s32.totalorder %s24, 3
      %p182 = scmp.ne.s32.totalorder %s177, %s179
      %p183 = scmp.eq.s32.totalorder %s24, 0
      %p184 = por %p182, %p183
      %p185 = scmp.ne.s32.totalorder %s177, %s179
      %p186 = scmp.eq.s32.totalorder %s29, 3
      %p187 = por %p185, %p186
      %p188 = scmp.ne.s32.totalorder %s179, %s180
      %p189 = scmp.eq.s32.totalorder %s29, 0
      %p190 = por %p188, %p189
      %p191 = scmp.ne.s32.totalorder %s179, %s180
      %p192 = scmp.eq.s32.totalorder %s30, 3
      %p193 = por %p191, %p192
      %p195 = scmp.ne.s32.totalorder %s180, %s194
      %p196 = scmp.eq.s32.totalorder %s30, 0
      %p197 = por %p195, %p196
      %s199 = sadd.s32 %s198, 1
      %p202 = scmp.eq.s32.totalorder %s24, 3
      %p203 = scmp.ne.s32.totalorder %s198, %s200
      %p204 = scmp.eq.s32.totalorder %s24, 0
      %p205 = por %p203, %p204
      %p206 = scmp.ne.s32.totalorder %s198, %s200
      %p207 = scmp.eq.s32.totalorder %s29, 3
      %p208 = por %p206, %p207
      %p209 = scmp.ne.s32.totalorder %s200, %s201
      %p210 = scmp.eq.s32.totalorder %s29, 0
      %p211 = por %p209, %p210
      %p212 = scmp.ne.s32.totalorder %s200, %s201
      %p213 = scmp.eq.s32.totalorder %s30, 3
      %p214 = por %p212, %p213
      %p216 = scmp.ne.s32.totalorder %s201, %s215
      %p217 = scmp.eq.s32.totalorder %s30, 0
      %p218 = por %p216, %p217
      %s220 = sadd.s32 %s219, 1
      %p223 = scmp.eq.s32.totalorder %s24, 3
      %p224 = scmp.ne.s32.totalorder %s219, %s221
      %p225 = scmp.eq.s32.totalorder %s24, 0
      %p226 = por %p224, %p225
      %p227 = scmp.ne.s32.totalorder %s219, %s221
      %p228 = scmp.eq.s32.totalorder %s29, 3
      %p229 = por %p227, %p228
      %p230 = scmp.ne.s32.totalorder %s221, %s222
      %p231 = scmp.eq.s32.totalorder %s29, 0
      %p232 = por %p230, %p231
      %p233 = scmp.ne.s32.totalorder %s221, %s222
      %p234 = scmp.eq.s32.totalorder %s30, 3
      %p235 = por %p233, %p234
      %p237 = scmp.ne.s32.totalorder %s222, %s236
      %p238 = scmp.eq.s32.totalorder %s30, 0
      %p239 = por %p237, %p238
      %s240 = ssub.s32 %s32, %s39
      %p241 = scmp.eq.s32.totalorder %s240, 0
      %s243 = sadd.s32 %s242, 1
      %s244 = scalar_select %p241, %s242, %s243
      %p247 = pneg %p241
      %p248 = scmp.eq.s32.totalorder %s24, 3
      %p249 = por %p247, %p248
      %p250 = scmp.ne.s32.totalorder %s242, %s245
      %p251 = scmp.eq.s32.totalorder %s24, 0
      %p252 = por %p250, %p251
      %p253 = scmp.ne.s32.totalorder %s242, %s245
      %p254 = scmp.eq.s32.totalorder %s29, 3
      %p255 = por %p253, %p254
      %p256 = scmp.ne.s32.totalorder %s245, %s246
      %p257 = scmp.eq.s32.totalorder %s29, 0
      %p258 = por %p256, %p257
      %p259 = scmp.ne.s32.totalorder %s245, %s246
      %p260 = scmp.eq.s32.totalorder %s30, 3
      %p261 = por %p259, %p260
      %p263 = scmp.ne.s32.totalorder %s246, %s262
      %p264 = scmp.eq.s32.totalorder %s30, 0
      %p265 = por %p263, %p264
      %s266 = ssub.s32 %s31, %s43
      %s267 = ssub.s32 %s32, %s39
      %s268 = sor.u32 %s266, %s267
      %p269 = scmp.eq.s32.totalorder %s268, 0
      %s271 = sadd.s32 %s270, 1
      %s272 = scalar_select %p269, %s270, %s271
      %p275 = pneg %p269
      %p276 = scmp.eq.s32.totalorder %s24, 3
      %p277 = por %p275, %p276
      %p278 = scmp.ne.s32.totalorder %s270, %s273
      %p279 = scmp.eq.s32.totalorder %s24, 0
      %p280 = por %p278, %p279
      %p281 = scmp.ne.s32.totalorder %s270, %s273
      %p282 = scmp.eq.s32.totalorder %s29, 3
      %p283 = por %p281, %p282
      %p284 = scmp.ne.s32.totalorder %s273, %s274
      %p285 = scmp.eq.s32.totalorder %s29, 0
      %p286 = por %p284, %p285
      %p287 = scmp.ne.s32.totalorder %s273, %s274
      %p288 = scmp.eq.s32.totalorder %s30, 3
      %p289 = por %p287, %p288
      %p291 = scmp.ne.s32.totalorder %s274, %s290
      %p292 = scmp.eq.s32.totalorder %s30, 0
      %p293 = por %p291, %p292
      %p294 = scmp.le.s32.totalorder 1, %s24
      %p295 = scmp.lt.s32.totalorder %s24, 5
      %p296 = pnand %p294, %p295
      %p297 = pneg %p296
      // Predicated region
      $region9: #{tpu_custom_call.1} parent=5 // pred_check
        _
      $region10: #{tpu_custom_call.1} parent=5 // pred_check_branch
        %299 = sbr.rel (%p296) target = $region12
      $region11: #{tpu_custom_call.1} parent=5 // pred_region
        %s300 = ssub.s32 %s24, 1
        // Predicated region
        $region13: #{tpu_custom_call.1} parent=11 // pred_check
          %p301 = pneg %p85
        $region14: #{tpu_custom_call.1} parent=11 // pred_check_branch
          %303 = sbr.rel (%p301) target = $region16
        $region15: #{tpu_custom_call.1} parent=11 // pred_region
          %s305 = ssub.s32 256, 256
          %306 = vsyncadd [#allocation6], %s305
          %s307 = sshll.u32 [#allocation5], 4
          %s308 = int_to_ptr.vmem [resolvable:$true] %s307
          %313 = dma.hbm_to_vmem [thread:$0]  %s1, 256, %s308, [#allocation6], 128, 128, 8
        $region16: #{tpu_custom_call.1} parent=11 // pred_fallthru
          _
        // Predicated region
        $region17: #{tpu_custom_call.1} parent=11 // pred_check
          %p314 = pneg %p106
        $region18: #{tpu_custom_call.1} parent=11 // pred_check_branch
          %316 = sbr.rel (%p314) target = $region20
        $region19: #{tpu_custom_call.1} parent=11 // pred_region
          _
        $region20: #{tpu_custom_call.1} parent=11 // pred_fallthru
          _
        // Predicated region
        $region21: #{tpu_custom_call.1} parent=11 // pred_check
          %p317 = pneg %p127
        $region22: #{tpu_custom_call.1} parent=11 // pred_check_branch
          %319 = sbr.rel (%p317) target = $region24
        $region23: #{tpu_custom_call.1} parent=11 // pred_region
          %s321 = ssub.s32 256, 256
          %322 = vsyncadd [#allocation6], %s321
          %s323 = sshll.u32 [#allocation7], 4
          %s324 = int_to_ptr.vmem [resolvable:$true] %s323
          %329 = dma.hbm_to_vmem [thread:$0]  %s3, 256, %s324, [#allocation6], 128, 128, 8
        $region24: #{tpu_custom_call.1} parent=11 // pred_fallthru
          _
        // Predicated region
        $region25: #{tpu_custom_call.1} parent=11 // pred_check
          %p330 = pneg %p148
        $region26: #{tpu_custom_call.1} parent=11 // pred_check_branch
          %332 = sbr.rel (%p330) target = $region28
        $region27: #{tpu_custom_call.1} parent=11 // pred_region
          _
        $region28: #{tpu_custom_call.1} parent=11 // pred_fallthru
          _
        // Predicated region
        $region29: #{tpu_custom_call.1} parent=11 // pred_check
          %p333 = pneg %p169
        $region30: #{tpu_custom_call.1} parent=11 // pred_check_branch
          %335 = sbr.rel (%p333) target = $region32
        $region31: #{tpu_custom_call.1} parent=11 // pred_region
          %s337 = ssub.s32 512, 512
          %338 = vsyncadd [#allocation9], %s337
          %s339 = sshll.u32 [#allocation8], 4
          %s340 = int_to_ptr.vmem [resolvable:$true] %s339
          %345 = dma.hbm_to_vmem [thread:$0]  %s5, 512, %s340, [#allocation9], 128, 128, 8
        $region32: #{tpu_custom_call.1} parent=11 // pred_fallthru
          _
        // Predicated region
        $region33: #{tpu_custom_call.1} parent=11 // pred_check
          %p346 = pneg %p190
        $region34: #{tpu_custom_call.1} parent=11 // pred_check_branch
          %348 = sbr.rel (%p346) target = $region36
        $region35: #{tpu_custom_call.1} parent=11 // pred_region
          _
        $region36: #{tpu_custom_call.1} parent=11 // pred_fallthru
          _
        // Predicated region
        $region37: #{tpu_custom_call.1} parent=11 // pred_check
          %p349 = pneg %p211
        $region38: #{tpu_custom_call.1} parent=11 // pred_check_branch
          %351 = sbr.rel (%p349) target = $region40
        $region39: #{tpu_custom_call.1} parent=11 // pred_region
          %s353 = ssub.s32 1536, 1536
          %354 = vsyncadd [#allocation9], %s353
          %s355 = sshll.u32 [#allocation10], 4
          %s356 = int_to_ptr.vmem [resolvable:$true] %s355
          %361 = dma.hbm_to_vmem [thread:$0]  %s7, 1536, %s356, [#allocation9], 128, 128, 8
        $region40: #{tpu_custom_call.1} parent=11 // pred_fallthru
          _
        // Predicated region
        $region41: #{tpu_custom_call.1} parent=11 // pred_check
          %p362 = pneg %p232
        $region42: #{tpu_custom_call.1} parent=11 // pred_check_branch
          %364 = sbr.rel (%p362) target = $region44
        $region43: #{tpu_custom_call.1} parent=11 // pred_region
          _
        $region44: #{tpu_custom_call.1} parent=11 // pred_fallthru
          _
      $region12: #{tpu_custom_call.1} parent=5 // pred_fallthru
        _
      %p365 = scmp.lt.s32.totalorder %s24, 4
      // Predicated region
      $region45: #{tpu_custom_call.1} parent=5 // pred_check
        %p366 = pneg %p365
      $region46: #{tpu_custom_call.1} parent=5 // pred_check_branch
        %368 = sbr.rel (%p366) target = $region48
      $region47: #{tpu_custom_call.1} parent=5 // pred_region
        // Predicated region
        $region49: #{tpu_custom_call.1} parent=47 // pred_check
          %p369 = pneg %p58
        $region50: #{tpu_custom_call.1} parent=47 // pred_check_branch
          %371 = sbr.rel (%p369) target = $region52
        $region51: #{tpu_custom_call.1} parent=47 // pred_region
          %s372 = sand.u32 %s48, 1
          %s373 = scalar_lea.sflag [#allocation3], %s372
          %s374 = sand.u32 %s48, 1
          %s375 = smul.addr %s374, 16
          %s376 = scalar_lea.vmem [#allocation2], %s375
          %s378 = ssub.s32 256, 256
          %379 = vsyncadd %s373, %s378
          %s380 = smul.addr %s32, 4
          %s381 = smul.addr %s31, 8
          %s382 = sadd.s32 %s380, %s381
          %s383 = smul.addr %s382, 64
          %s384 = scalar_lea.hbm %s0, %s383
          %s385 = sshll.u32 %s376, 4
          %s386 = int_to_ptr.vmem [resolvable:$true] %s385
          %391 = dma.hbm_to_vmem [thread:$0]  %s384, 256, %s386, %s373, 64, 64, 4
        $region52: #{tpu_custom_call.1} parent=47 // pred_fallthru
          _
        // Predicated region
        $region53: #{tpu_custom_call.1} parent=47 // pred_check
          %p392 = pneg %p252
        $region54: #{tpu_custom_call.1} parent=47 // pred_check_branch
          %394 = sbr.rel (%p392) target = $region56
        $region55: #{tpu_custom_call.1} parent=47 // pred_region
          %p395 = scmp.lt.s32.totalorder %s32, 1
          %s396 = scalar_select %p395, %s32, 1
          %s397 = smul.addr %s396, 2
          %s398 = scalar_lea.vmem %s9, %s397
        $region56: #{tpu_custom_call.1} parent=47 // pred_fallthru
          _
      $region48: #{tpu_custom_call.1} parent=5 // pred_fallthru
        _
      %p399 = scmp.le.s32.totalorder 1, %s24
      %p400 = scmp.lt.s32.totalorder %s24, 5
      %p401 = pnand %p399, %p400
      %p402 = pneg %p401
      // Predicated region
      $region57: #{tpu_custom_call.1} parent=5 // pred_check
        _
      $region58: #{tpu_custom_call.1} parent=5 // pred_check_branch
        %404 = sbr.rel (%p401) target = $region60
      $region59: #{tpu_custom_call.1} parent=5 // pred_region
        %s405 = ssub.s32 %s24, 1
        %s406 = sand.u32 %s51, 1
        %s407 = scalar_lea.sflag [#allocation3], %s406
        %s408 = sand.u32 %s51, 1
        %s409 = smul.addr %s408, 16
        %s410 = scalar_lea.vmem [#allocation2], %s409
        // Predicated region
        $region61: #{tpu_custom_call.1} parent=59 // pred_check
          %p411 = pneg %p64
        $region62: #{tpu_custom_call.1} parent=59 // pred_check_branch
          %413 = sbr.rel (%p411) target = $region64
        $region63: #{tpu_custom_call.1} parent=59 // pred_region
          %414 = dma.done %s407, 256
        $region64: #{tpu_custom_call.1} parent=59 // pred_fallthru
          _
        // Predicated region
        $region65: #{tpu_custom_call.1} parent=59 // pred_check
          %p415 = pneg %p85
        $region66: #{tpu_custom_call.1} parent=59 // pred_check_branch
          %417 = sbr.rel (%p415) target = $region68
        $region67: #{tpu_custom_call.1} parent=59 // pred_region
          %418 = dma.done [#allocation6], 256
        $region68: #{tpu_custom_call.1} parent=59 // pred_fallthru
          _
        // Predicated region
        $region69: #{tpu_custom_call.1} parent=59 // pred_check
          %p419 = pneg %p127
        $region70: #{tpu_custom_call.1} parent=59 // pred_check_branch
          %421 = sbr.rel (%p419) target = $region72
        $region71: #{tpu_custom_call.1} parent=59 // pred_region
          %422 = dma.done [#allocation6], 256
        $region72: #{tpu_custom_call.1} parent=59 // pred_fallthru
          _
        // Predicated region
        $region73: #{tpu_custom_call.1} parent=59 // pred_check
          %p423 = pneg %p169
        $region74: #{tpu_custom_call.1} parent=59 // pred_check_branch
          %425 = sbr.rel (%p423) target = $region76
        $region75: #{tpu_custom_call.1} parent=59 // pred_region
          %426 = dma.done [#allocation9], 512
        $region76: #{tpu_custom_call.1} parent=59 // pred_fallthru
          _
        // Predicated region
        $region77: #{tpu_custom_call.1} parent=59 // pred_check
          %p427 = pneg %p211
        $region78: #{tpu_custom_call.1} parent=59 // pred_check_branch
          %429 = sbr.rel (%p427) target = $region80
        $region79: #{tpu_custom_call.1} parent=59 // pred_region
          %430 = dma.done [#allocation9], 1536
        $region80: #{tpu_custom_call.1} parent=59 // pred_fallthru
          _
        %s431 = sand.u32 %s51, 1
        %s432 = scalar_lea.sflag [#allocation3], %s431
        %s433 = sand.u32 %s51, 1
        %s434 = smul.addr %s433, 16
        %s435 = scalar_lea.vmem [#allocation2], %s434
        %p436 = pneg %p64
        %p437 = pneg %p61
        %p438 = pneg %p85
        %p439 = pneg %p82
        %p440 = pneg %p106
        %p441 = pneg %p103
        %p442 = pneg %p127
        %p443 = pneg %p124
        %p444 = pneg %p148
        %p445 = pneg %p145
        %p446 = pneg %p169
        %p447 = pneg %p166
        %p448 = pneg %p190
        %p449 = pneg %p187
        %p450 = pneg %p211
        %p451 = pneg %p208
        %p452 = pneg %p232
        %p453 = pneg %p229
        %p454 = scmp.lt.s32.totalorder %s34, 1
        %s455 = scalar_select %p454, %s34, 1
        %s456 = smul.addr %s455, 2
        %s457 = scalar_lea.vmem %s9, %s456
        %p458 = pneg %p258
        %p459 = pneg %p255
        %p460 = pneg %p286
        %p461 = pneg %p283
        %s462 = sand.u32 %s273, 1
        %s463 = scalar_lea.sflag [#allocation4], %s462
        %s464 = sand.u32 %s273, 1
        %s465 = smul.addr %s464, 2
        %s466 = scalar_lea.vmem [#allocation11], %s465
        %p467 = scmp.lt.s32.totalorder %s34, 1
        %s468 = scalar_select %p467, %s34, 1
        %s469 = smul.addr %s468, 2
        %s470 = scalar_lea.vmem %s9, %s469
        %v471 = vld [vmem:[#allocation5] sm:$0xff]
        %v472 = vld [vmem:[#allocation5 + $0x8] sm:$0x1]
        %v473 = vld [vmem:[%s2] sm:$0x1]
        %v474 = vld [vmem:[#allocation7] sm:$0xff]
        %v475 = vld [vmem:[#allocation7 + $0x8] sm:$0x1]
        %v476 = vld [vmem:[%s4] sm:$0x1]
        %v477 = vld [vmem:[#allocation8] sm:$0xff]
        %v478 = vld [vmem:[#allocation8 + $0x8] sm:$0xff]
        %v479 = vld [vmem:[#allocation8 + $0x10] sm:$0xff]
        %v480 = vld [vmem:[#allocation8 + $0x18] sm:$0xff]
        %v481 = vld [vmem:[%s6] sm:$0x1]
        %v482 = vld [vmem:[#allocation10] sm:$0xff]
        %v483 = vld [vmem:[#allocation10 + $0x8] sm:$0xff]
        %v484 = vld [vmem:[#allocation10 + $0x10] sm:$0xff]
        %v485 = vld [vmem:[#allocation10 + $0x18] sm:$0xff]
        %v486 = vld [vmem:[#allocation10 + $0x20] sm:$0xff]
        %v487 = vld [vmem:[#allocation10 + $0x28] sm:$0xff]
        %v488 = vld [vmem:[#allocation10 + $0x30] sm:$0xff]
        %v489 = vld [vmem:[#allocation10 + $0x38] sm:$0xff]
        %v490 = vld [vmem:[#allocation10 + $0x40] sm:$0xff]
        %v491 = vld [vmem:[#allocation10 + $0x48] sm:$0xff]
        %v492 = vld [vmem:[#allocation10 + $0x50] sm:$0xff]
        %v493 = vld [vmem:[#allocation10 + $0x58] sm:$0xff]
        %v494 = vld [vmem:[%s8] sm:$0x1]
        %v495 = vld [vmem:[%s470] sm:$0x3]
        %v496 = vld [vmem:[%s410] sm:$0xf]
        %v497 = vld [vmem:[%s410 + $0x4] sm:$0xf]
        %v498 = vld [vmem:[%s410 + $0x8] sm:$0xf]
        %v499 = vld [vmem:[%s410 + $0xc] sm:$0xf]
        %501 = vset.pattern.permute.xlu0 0
        %502 = vperm.xlu0 %501, %v496
        %v503 = vpop.permute.xlu0 %502
        %v505 = vlaneseq
        %v506 = vshrl.u32 %v505, 7
        %v507 = vsub.s32 0, %v506
        %v508 = vrot.slane %v471, %v507
        %v509 = vmul.f32 %v503, %v508
        %v510 = vadd.f32 %v509, 0.0
        %512 = vset.pattern.permute.xlu0 0
        %513 = vperm.xlu0 %512, %v498
        %v514 = vpop.permute.xlu0 %513
        %v516 = vmul.f32 %v514, %v508
        %v517 = vadd.f32 %v516, 0.0
        %518 = vset.pattern.permute.xlu0 1
        %519 = vperm.xlu0 %518, %v496
        %v520 = vpop.permute.xlu0 %519
        %v522 = vlaneseq
        %v523 = vshrl.u32 %v522, 7
        %v524 = vsub.s32 1, %v523
        %v525 = vrot.slane %v471, %v524
        %v526 = vmul.f32 %v520, %v525
        %v527 = vadd.f32 %v510, %v526
        %528 = vset.pattern.permute.xlu0 1
        %529 = vperm.xlu0 %528, %v498
        %v530 = vpop.permute.xlu0 %529
        %v532 = vmul.f32 %v530, %v525
        %v533 = vadd.f32 %v517, %v532
        %534 = vset.pattern.permute.xlu0 2
        %535 = vperm.xlu0 %534, %v496
        %v536 = vpop.permute.xlu0 %535
        %v538 = vlaneseq
        %v539 = vshrl.u32 %v538, 7
        %v540 = vsub.s32 2, %v539
        %v541 = vrot.slane %v471, %v540
        %v542 = vmul.f32 %v536, %v541
        %v543 = vadd.f32 %v527, %v542
        %544 = vset.pattern.permute.xlu0 2
        %545 = vperm.xlu0 %544, %v498
        %v546 = vpop.permute.xlu0 %545
        %v548 = vmul.f32 %v546, %v541
        %v549 = vadd.f32 %v533, %v548
        %551 = vset.pattern.permute.xlu0 0
        %552 = vperm.xlu0 %551, %v497
        %v553 = vpop.permute.xlu0 %552
        %v555 = vlaneseq
        %v556 = vshrl.u32 %v555, 7
        %v557 = vsub.s32 3, %v556
        %v558 = vrot.slane %v471, %v557
        %v559 = vmul.f32 %v553, %v558
        %v560 = vadd.f32 %v543, %v559
        %562 = vset.pattern.permute.xlu0 0
        %563 = vperm.xlu0 %562, %v499
        %v564 = vpop.permute.xlu0 %563
        %v566 = vmul.f32 %v564, %v558
        %v567 = vadd.f32 %v549, %v566
        %568 = vset.pattern.permute.xlu0 1
        %569 = vperm.xlu0 %568, %v497
        %v570 = vpop.permute.xlu0 %569
        %v572 = vlaneseq
        %v573 = vshrl.u32 %v572, 7
        %v574 = vsub.s32 4, %v573
        %v575 = vrot.slane %v471, %v574
        %v576 = vmul.f32 %v570, %v575
        %v577 = vadd.f32 %v560, %v576
        %578 = vset.pattern.permute.xlu0 1
        %579 = vperm.xlu0 %578, %v499
        %v580 = vpop.permute.xlu0 %579
        %v582 = vmul.f32 %v580, %v575
        %v583 = vadd.f32 %v567, %v582
        %584 = vset.pattern.permute.xlu0 2
        %585 = vperm.xlu0 %584, %v497
        %v586 = vpop.permute.xlu0 %585
        %v588 = vlaneseq
        %v589 = vshrl.u32 %v588, 7
        %v590 = vsub.s32 5, %v589
        %v591 = vrot.slane %v471, %v590
        %v592 = vmul.f32 %v586, %v591
        %v593 = vadd.f32 %v577, %v592
        %594 = vset.pattern.permute.xlu0 2
        %595 = vperm.xlu0 %594, %v499
        %v596 = vpop.permute.xlu0 %595
        %v598 = vmul.f32 %v596, %v591
        %v599 = vadd.f32 %v583, %v598
        %v600 = vlaneseq
        %v601 = vshrl.u32 %v600, 7
        %v602 = vsub.s32 6, %v601
        %v603 = vrot.slane %v471, %v602
        %v604 = vmul.f32 %v514, %v603
        %v605 = vadd.f32 %v593, %v604
        %v606 = vmul.f32 %v503, %v603
        %v608 = vrot.slane %v606, 1
        %v610 = vadd.f32 %v599, %v608
        %v611 = vlaneseq
        %v612 = vshrl.u32 %v611, 7
        %v613 = vsub.s32 7, %v612
        %v614 = vrot.slane %v471, %v613
        %v615 = vmul.f32 %v530, %v614
        %v616 = vadd.f32 %v605, %v615
        %v617 = vmul.f32 %v520, %v614
        %v619 = vrot.slane %v617, 1
        %v621 = vadd.f32 %v610, %v619
        %v622 = vlaneseq
        %v623 = vshrl.u32 %v622, 7
        %v624 = vsub.s32 0, %v623
        %v625 = vrot.slane %v472, %v624
        %v626 = vmul.f32 %v546, %v625
        %v627 = vadd.f32 %v616, %v626
        %v628 = vmul.f32 %v536, %v625
        %v630 = vrot.slane %v628, 1
        %v632 = vadd.f32 %v621, %v630
        %v634 = vlaneseq
        %v635 = vshrl.u32 %v634, 7
        %v636 = vsub.s32 0, %v635
        %v637 = vrot.slane %v473, %v636
        %v639 = vadd.f32 %v627, %v637
        %v640 = vmax.f32 %v639, 0.0
        %v641 = vadd.f32 %v632, %v637
        %v642 = vmax.f32 %v641, 0.0
        %v643 = vmul.f32 %v536, %v508
        %v644 = vadd.f32 %v643, 0.0
        %v645 = vmul.f32 %v546, %v508
        %v646 = vadd.f32 %v645, 0.0
        %647 = vset.pattern.permute.xlu0 3
        %648 = vperm.xlu0 %647, %v496
        %v649 = vpop.permute.xlu0 %648
        %v651 = vmul.f32 %v649, %v525
        %v652 = vadd.f32 %v644, %v651
        %653 = vset.pattern.permute.xlu0 3
        %654 = vperm.xlu0 %653, %v498
        %v655 = vpop.permute.xlu0 %654
        %v657 = vmul.f32 %v655, %v525
        %v658 = vadd.f32 %v646, %v657
        %659 = vset.pattern.permute.xlu0 4
        %660 = vperm.xlu0 %659, %v496
        %v661 = vpop.permute.xlu0 %660
        %v663 = vmul.f32 %v661, %v541
        %v664 = vadd.f32 %v652, %v663
        %665 = vset.pattern.permute.xlu0 4
        %666 = vperm.xlu0 %665, %v498
        %v667 = vpop.permute.xlu0 %666
        %v669 = vmul.f32 %v667, %v541
        %v670 = vadd.f32 %v658, %v669
        %v671 = vmul.f32 %v586, %v558
        %v672 = vadd.f32 %v664, %v671
        %v673 = vmul.f32 %v596, %v558
        %v674 = vadd.f32 %v670, %v673
        %675 = vset.pattern.permute.xlu0 3
        %676 = vperm.xlu0 %675, %v497
        %v677 = vpop.permute.xlu0 %676
        %v679 = vmul.f32 %v677, %v575
        %v680 = vadd.f32 %v672, %v679
        %681 = vset.pattern.permute.xlu0 3
        %682 = vperm.xlu0 %681, %v499
        %v683 = vpop.permute.xlu0 %682
        %v685 = vmul.f32 %v683, %v575
        %v686 = vadd.f32 %v674, %v685
        %687 = vset.pattern.permute.xlu0 4
        %688 = vperm.xlu0 %687, %v497
        %v689 = vpop.permute.xlu0 %688
        %v691 = vmul.f32 %v689, %v591
        %v692 = vadd.f32 %v680, %v691
        %693 = vset.pattern.permute.xlu0 4
        %694 = vperm.xlu0 %693, %v499
        %v695 = vpop.permute.xlu0 %694
        %v697 = vmul.f32 %v695, %v591
        %v698 = vadd.f32 %v686, %v697
        %v699 = vmul.f32 %v546, %v603
        %v700 = vadd.f32 %v692, %v699
        %v701 = vmul.f32 %v536, %v603
        %v703 = vrot.slane %v701, 1
        %v705 = vadd.f32 %v698, %v703
        %v706 = vmul.f32 %v655, %v614
        %v707 = vadd.f32 %v700, %v706
        %v708 = vmul.f32 %v649, %v614
        %v710 = vrot.slane %v708, 1
        %v712 = vadd.f32 %v705, %v710
        %v713 = vmul.f32 %v667, %v625
        %v714 = vadd.f32 %v707, %v713
        %v715 = vmul.f32 %v661, %v625
        %v717 = vrot.slane %v715, 1
        %v719 = vadd.f32 %v712, %v717
        %v720 = vadd.f32 %v714, %v637
        %v721 = vmax.f32 %v720, 0.0
        %v722 = vadd.f32 %v719, %v637
        %v723 = vmax.f32 %v722, 0.0
        %v724 = vmul.f32 %v661, %v508
        %v725 = vadd.f32 %v724, 0.0
        %v726 = vmul.f32 %v667, %v508
        %v727 = vadd.f32 %v726, 0.0
        %728 = vset.pattern.permute.xlu0 5
        %729 = vperm.xlu0 %728, %v496
        %v730 = vpop.permute.xlu0 %729
        %v732 = vmul.f32 %v730, %v525
        %v733 = vadd.f32 %v725, %v732
        %734 = vset.pattern.permute.xlu0 5
        %735 = vperm.xlu0 %734, %v498
        %v736 = vpop.permute.xlu0 %735
        %v738 = vmul.f32 %v736, %v525
        %v739 = vadd.f32 %v727, %v738
        %740 = vset.pattern.permute.xlu0 6
        %741 = vperm.xlu0 %740, %v496
        %v742 = vpop.permute.xlu0 %741
        %v744 = vmul.f32 %v742, %v541
        %v745 = vadd.f32 %v733, %v744
        %746 = vset.pattern.permute.xlu0 6
        %747 = vperm.xlu0 %746, %v498
        %v748 = vpop.permute.xlu0 %747
        %v750 = vmul.f32 %v748, %v541
        %v751 = vadd.f32 %v739, %v750
        %v752 = vmul.f32 %v689, %v558
        %v753 = vadd.f32 %v745, %v752
        %v754 = vmul.f32 %v695, %v558
        %v755 = vadd.f32 %v751, %v754
        %756 = vset.pattern.permute.xlu0 5
        %757 = vperm.xlu0 %756, %v497
        %v758 = vpop.permute.xlu0 %757
        %v760 = vmul.f32 %v758, %v575
        %v761 = vadd.f32 %v753, %v760
        %762 = vset.pattern.permute.xlu0 5
        %763 = vperm.xlu0 %762, %v499
        %v764 = vpop.permute.xlu0 %763
        %v766 = vmul.f32 %v764, %v575
        %v767 = vadd.f32 %v755, %v766
        %768 = vset.pattern.permute.xlu0 6
        %769 = vperm.xlu0 %768, %v497
        %v770 = vpop.permute.xlu0 %769
        %v772 = vmul.f32 %v770, %v591
        %v773 = vadd.f32 %v761, %v772
        %774 = vset.pattern.permute.xlu0 6
        %775 = vperm.xlu0 %774, %v499
        %v776 = vpop.permute.xlu0 %775
        %v778 = vmul.f32 %v776, %v591
        %v779 = vadd.f32 %v767, %v778
        %v780 = vmul.f32 %v667, %v603
        %v781 = vadd.f32 %v773, %v780
        %v782 = vmul.f32 %v661, %v603
        %v784 = vrot.slane %v782, 1
        %v786 = vadd.f32 %v779, %v784
        %v787 = vmul.f32 %v736, %v614
        %v788 = vadd.f32 %v781, %v787
        %v789 = vmul.f32 %v730, %v614
        %v791 = vrot.slane %v789, 1
        %v793 = vadd.f32 %v786, %v791
        %v794 = vmul.f32 %v748, %v625
        %v795 = vadd.f32 %v788, %v794
        %v796 = vmul.f32 %v742, %v625
        %v798 = vrot.slane %v796, 1
        %v800 = vadd.f32 %v793, %v798
        %v801 = vadd.f32 %v795, %v637
        %v802 = vmax.f32 %v801, 0.0
        %v803 = vadd.f32 %v800, %v637
        %v804 = vmax.f32 %v803, 0.0
        %v805 = vmul.f32 %v742, %v508
        %v806 = vadd.f32 %v805, 0.0
        %v807 = vmul.f32 %v748, %v508
        %v808 = vadd.f32 %v807, 0.0
        %809 = vset.pattern.permute.xlu0 7
        %810 = vperm.xlu0 %809, %v496
        %v811 = vpop.permute.xlu0 %810
        %v813 = vmul.f32 %v811, %v525
        %v814 = vadd.f32 %v806, %v813
        %815 = vset.pattern.permute.xlu0 7
        %816 = vperm.xlu0 %815, %v498
        %v817 = vpop.permute.xlu0 %816
        %v819 = vmul.f32 %v817, %v525
        %v820 = vadd.f32 %v808, %v819
        %821 = vset.pattern.permute.xlu0 8
        %822 = vperm.xlu0 %821, %v496
        %v823 = vpop.permute.xlu0 %822
        %v825 = vmul.f32 %v823, %v541
        %v826 = vadd.f32 %v814, %v825
        %827 = vset.pattern.permute.xlu0 8
        %828 = vperm.xlu0 %827, %v498
        %v829 = vpop.permute.xlu0 %828
        %v831 = vmul.f32 %v829, %v541
        %v832 = vadd.f32 %v820, %v831
        %v833 = vmul.f32 %v770, %v558
        %v834 = vadd.f32 %v826, %v833
        %v835 = vmul.f32 %v776, %v558
        %v836 = vadd.f32 %v832, %v835
        %837 = vset.pattern.permute.xlu0 7
        %838 = vperm.xlu0 %837, %v497
        %v839 = vpop.permute.xlu0 %838
        %v841 = vmul.f32 %v839, %v575
        %v842 = vadd.f32 %v834, %v841
        %843 = vset.pattern.permute.xlu0 7
        %844 = vperm.xlu0 %843, %v499
        %v845 = vpop.permute.xlu0 %844
        %v847 = vmul.f32 %v845, %v575
        %v848 = vadd.f32 %v836, %v847
        %849 = vset.pattern.permute.xlu0 8
        %850 = vperm.xlu0 %849, %v497
        %v851 = vpop.permute.xlu0 %850
        %v853 = vmul.f32 %v851, %v591
        %v854 = vadd.f32 %v842, %v853
        %855 = vset.pattern.permute.xlu0 8
        %856 = vperm.xlu0 %855, %v499
        %v857 = vpop.permute.xlu0 %856
        %v859 = vmul.f32 %v857, %v591
        %v860 = vadd.f32 %v848, %v859
        %v861 = vmul.f32 %v748, %v603
        %v862 = vadd.f32 %v854, %v861
        %v863 = vmul.f32 %v742, %v603
        %v865 = vrot.slane %v863, 1
        %v867 = vadd.f32 %v860, %v865
        %v868 = vmul.f32 %v817, %v614
        %v869 = vadd.f32 %v862, %v868
        %v870 = vmul.f32 %v811, %v614
        %v872 = vrot.slane %v870, 1
        %v874 = vadd.f32 %v867, %v872
        %v875 = vmul.f32 %v829, %v625
        %v876 = vadd.f32 %v869, %v875
        %v877 = vmul.f32 %v823, %v625
        %v879 = vrot.slane %v877, 1
        %v881 = vadd.f32 %v874, %v879
        %v882 = vadd.f32 %v876, %v637
        %v883 = vmax.f32 %v882, 0.0
        %v884 = vadd.f32 %v881, %v637
        %v885 = vmax.f32 %v884, 0.0
        %v886 = vmul.f32 %v823, %v508
        %v887 = vadd.f32 %v886, 0.0
        %v888 = vmul.f32 %v829, %v508
        %v889 = vadd.f32 %v888, 0.0
        %890 = vset.pattern.permute.xlu0 9
        %891 = vperm.xlu0 %890, %v496
        %v892 = vpop.permute.xlu0 %891
        %v894 = vmul.f32 %v892, %v525
        %v895 = vadd.f32 %v887, %v894
        %896 = vset.pattern.permute.xlu0 9
        %897 = vperm.xlu0 %896, %v498
        %v898 = vpop.permute.xlu0 %897
        %v900 = vmul.f32 %v898, %v525
        %v901 = vadd.f32 %v889, %v900
        %902 = vset.pattern.permute.xlu0 10
        %903 = vperm.xlu0 %902, %v496
        %v904 = vpop.permute.xlu0 %903
        %v906 = vmul.f32 %v904, %v541
        %v907 = vadd.f32 %v895, %v906
        %908 = vset.pattern.permute.xlu0 10
        %909 = vperm.xlu0 %908, %v498
        %v910 = vpop.permute.xlu0 %909
        %v912 = vmul.f32 %v910, %v541
        %v913 = vadd.f32 %v901, %v912
        %v914 = vmul.f32 %v851, %v558
        %v915 = vadd.f32 %v907, %v914
        %v916 = vmul.f32 %v857, %v558
        %v917 = vadd.f32 %v913, %v916
        %918 = vset.pattern.permute.xlu0 9
        %919 = vperm.xlu0 %918, %v497
        %v920 = vpop.permute.xlu0 %919
        %v922 = vmul.f32 %v920, %v575
        %v923 = vadd.f32 %v915, %v922
        %924 = vset.pattern.permute.xlu0 9
        %925 = vperm.xlu0 %924, %v499
        %v926 = vpop.permute.xlu0 %925
        %v928 = vmul.f32 %v926, %v575
        %v929 = vadd.f32 %v917, %v928
        %930 = vset.pattern.permute.xlu0 10
        %931 = vperm.xlu0 %930, %v497
        %v932 = vpop.permute.xlu0 %931
        %v934 = vmul.f32 %v932, %v591
        %v935 = vadd.f32 %v923, %v934
        %936 = vset.pattern.permute.xlu0 10
        %937 = vperm.xlu0 %936, %v499
        %v938 = vpop.permute.xlu0 %937
        %v940 = vmul.f32 %v938, %v591
        %v941 = vadd.f32 %v929, %v940
        %v942 = vmul.f32 %v829, %v603
        %v943 = vadd.f32 %v935, %v942
        %v944 = vmul.f32 %v823, %v603
        %v946 = vrot.slane %v944, 1
        %v948 = vadd.f32 %v941, %v946
        %v949 = vmul.f32 %v898, %v614
        %v950 = vadd.f32 %v943, %v949
        %v951 = vmul.f32 %v892, %v614
        %v953 = vrot.slane %v951, 1
        %v955 = vadd.f32 %v948, %v953
        %v956 = vmul.f32 %v910, %v625
        %v957 = vadd.f32 %v950, %v956
        %v958 = vmul.f32 %v904, %v625
        %v960 = vrot.slane %v958, 1
        %v962 = vadd.f32 %v955, %v960
        %v963 = vadd.f32 %v957, %v637
        %v964 = vmax.f32 %v963, 0.0
        %v965 = vadd.f32 %v962, %v637
        %v966 = vmax.f32 %v965, 0.0
        %v967 = vmul.f32 %v904, %v508
        %v968 = vadd.f32 %v967, 0.0
        %v969 = vmul.f32 %v910, %v508
        %v970 = vadd.f32 %v969, 0.0
        %971 = vset.pattern.permute.xlu0 11
        %972 = vperm.xlu0 %971, %v496
        %v973 = vpop.permute.xlu0 %972
        %v975 = vmul.f32 %v973, %v525
        %v976 = vadd.f32 %v968, %v975
        %977 = vset.pattern.permute.xlu0 11
        %978 = vperm.xlu0 %977, %v498
        %v979 = vpop.permute.xlu0 %978
        %v981 = vmul.f32 %v979, %v525
        %v982 = vadd.f32 %v970, %v981
        %983 = vset.pattern.permute.xlu0 12
        %984 = vperm.xlu0 %983, %v496
        %v985 = vpop.permute.xlu0 %984
        %v987 = vmul.f32 %v985, %v541
        %v988 = vadd.f32 %v976, %v987
        %989 = vset.pattern.permute.xlu0 12
        %990 = vperm.xlu0 %989, %v498
        %v991 = vpop.permute.xlu0 %990
        %v993 = vmul.f32 %v991, %v541
        %v994 = vadd.f32 %v982, %v993
        %v995 = vmul.f32 %v932, %v558
        %v996 = vadd.f32 %v988, %v995
        %v997 = vmul.f32 %v938, %v558
        %v998 = vadd.f32 %v994, %v997
        %999 = vset.pattern.permute.xlu0 11
        %1000 = vperm.xlu0 %999, %v497
        %v1001 = vpop.permute.xlu0 %1000
        %v1003 = vmul.f32 %v1001, %v575
        %v1004 = vadd.f32 %v996, %v1003
        %1005 = vset.pattern.permute.xlu0 11
        %1006 = vperm.xlu0 %1005, %v499
        %v1007 = vpop.permute.xlu0 %1006
        %v1009 = vmul.f32 %v1007, %v575
        %v1010 = vadd.f32 %v998, %v1009
        %1011 = vset.pattern.permute.xlu0 12
        %1012 = vperm.xlu0 %1011, %v497
        %v1013 = vpop.permute.xlu0 %1012
        %v1015 = vmul.f32 %v1013, %v591
        %v1016 = vadd.f32 %v1004, %v1015
        %1017 = vset.pattern.permute.xlu0 12
        %1018 = vperm.xlu0 %1017, %v499
        %v1019 = vpop.permute.xlu0 %1018
        %v1021 = vmul.f32 %v1019, %v591
        %v1022 = vadd.f32 %v1010, %v1021
        %v1023 = vmul.f32 %v910, %v603
        %v1024 = vadd.f32 %v1016, %v1023
        %v1025 = vmul.f32 %v904, %v603
        %v1027 = vrot.slane %v1025, 1
        %v1029 = vadd.f32 %v1022, %v1027
        %v1030 = vmul.f32 %v979, %v614
        %v1031 = vadd.f32 %v1024, %v1030
        %v1032 = vmul.f32 %v973, %v614
        %v1034 = vrot.slane %v1032, 1
        %v1036 = vadd.f32 %v1029, %v1034
        %v1037 = vmul.f32 %v991, %v625
        %v1038 = vadd.f32 %v1031, %v1037
        %v1039 = vmul.f32 %v985, %v625
        %v1041 = vrot.slane %v1039, 1
        %v1043 = vadd.f32 %v1036, %v1041
        %v1044 = vadd.f32 %v1038, %v637
        %v1045 = vmax.f32 %v1044, 0.0
        %v1046 = vadd.f32 %v1043, %v637
        %v1047 = vmax.f32 %v1046, 0.0
        %v1048 = vmul.f32 %v985, %v508
        %v1049 = vadd.f32 %v1048, 0.0
        %v1050 = vmul.f32 %v991, %v508
        %v1051 = vadd.f32 %v1050, 0.0
        %1052 = vset.pattern.permute.xlu0 13
        %1053 = vperm.xlu0 %1052, %v496
        %v1054 = vpop.permute.xlu0 %1053
        %v1056 = vmul.f32 %v1054, %v525
        %v1057 = vadd.f32 %v1049, %v1056
        %1058 = vset.pattern.permute.xlu0 13
        %1059 = vperm.xlu0 %1058, %v498
        %v1060 = vpop.permute.xlu0 %1059
        %v1062 = vmul.f32 %v1060, %v525
        %v1063 = vadd.f32 %v1051, %v1062
        %1064 = vset.pattern.permute.xlu0 14
        %1065 = vperm.xlu0 %1064, %v496
        %v1066 = vpop.permute.xlu0 %1065
        %v1068 = vmul.f32 %v1066, %v541
        %v1069 = vadd.f32 %v1057, %v1068
        %1070 = vset.pattern.permute.xlu0 14
        %1071 = vperm.xlu0 %1070, %v498
        %v1072 = vpop.permute.xlu0 %1071
        %v1074 = vmul.f32 %v1072, %v541
        %v1075 = vadd.f32 %v1063, %v1074
        %v1076 = vmul.f32 %v1013, %v558
        %v1077 = vadd.f32 %v1069, %v1076
        %v1078 = vmul.f32 %v1019, %v558
        %v1079 = vadd.f32 %v1075, %v1078
        %1080 = vset.pattern.permute.xlu0 13
        %1081 = vperm.xlu0 %1080, %v497
        %v1082 = vpop.permute.xlu0 %1081
        %v1084 = vmul.f32 %v1082, %v575
        %v1085 = vadd.f32 %v1077, %v1084
        %1086 = vset.pattern.permute.xlu0 13
        %1087 = vperm.xlu0 %1086, %v499
        %v1088 = vpop.permute.xlu0 %1087
        %v1090 = vmul.f32 %v1088, %v575
        %v1091 = vadd.f32 %v1079, %v1090
        %1092 = vset.pattern.permute.xlu0 14
        %1093 = vperm.xlu0 %1092, %v497
        %v1094 = vpop.permute.xlu0 %1093
        %v1096 = vmul.f32 %v1094, %v591
        %v1097 = vadd.f32 %v1085, %v1096
        %1098 = vset.pattern.permute.xlu0 14
        %1099 = vperm.xlu0 %1098, %v499
        %v1100 = vpop.permute.xlu0 %1099
        %v1102 = vmul.f32 %v1100, %v591
        %v1103 = vadd.f32 %v1091, %v1102
        %v1104 = vmul.f32 %v991, %v603
        %v1105 = vadd.f32 %v1097, %v1104
        %v1106 = vmul.f32 %v985, %v603
        %v1108 = vrot.slane %v1106, 1
        %v1110 = vadd.f32 %v1103, %v1108
        %v1111 = vmul.f32 %v1060, %v614
        %v1112 = vadd.f32 %v1105, %v1111
        %v1113 = vmul.f32 %v1054, %v614
        %v1115 = vrot.slane %v1113, 1
        %v1117 = vadd.f32 %v1110, %v1115
        %v1118 = vmul.f32 %v1072, %v625
        %v1119 = vadd.f32 %v1112, %v1118
        %v1120 = vmul.f32 %v1066, %v625
        %v1122 = vrot.slane %v1120, 1
        %v1124 = vadd.f32 %v1117, %v1122
        %v1125 = vadd.f32 %v1119, %v637
        %v1126 = vmax.f32 %v1125, 0.0
        %v1127 = vadd.f32 %v1124, %v637
        %v1128 = vmax.f32 %v1127, 0.0
        %v1129 = vlaneseq
        %v1130 = vshrl.u32 %v1129, 7
        %v1131 = vsub.s32 0, %v1130
        %v1132 = vrot.slane %v474, %v1131
        %v1133 = vmul.f32 %v640, %v1132
        %v1134 = vadd.f32 %v1133, 0.0
        %v1135 = vlaneseq
        %v1136 = vshrl.u32 %v1135, 7
        %v1137 = vsub.s32 1, %v1136
        %v1138 = vrot.slane %v474, %v1137
        %v1139 = vmul.f32 %v721, %v1138
        %v1140 = vadd.f32 %v1134, %v1139
        %v1141 = vlaneseq
        %v1142 = vshrl.u32 %v1141, 7
        %v1143 = vsub.s32 2, %v1142
        %v1144 = vrot.slane %v474, %v1143
        %v1145 = vmul.f32 %v802, %v1144
        %v1146 = vadd.f32 %v1140, %v1145
        %v1147 = vlaneseq
        %v1148 = vshrl.u32 %v1147, 7
        %v1149 = vsub.s32 3, %v1148
        %v1150 = vrot.slane %v474, %v1149
        %v1151 = vmul.f32 %v642, %v1150
        %v1152 = vadd.f32 %v1146, %v1151
        %v1153 = vlaneseq
        %v1154 = vshrl.u32 %v1153, 7
        %v1155 = vsub.s32 4, %v1154
        %v1156 = vrot.slane %v474, %v1155
        %v1157 = vmul.f32 %v723, %v1156
        %v1158 = vadd.f32 %v1152, %v1157
        %v1159 = vlaneseq
        %v1160 = vshrl.u32 %v1159, 7
        %v1161 = vsub.s32 5, %v1160
        %v1162 = vrot.slane %v474, %v1161
        %v1163 = vmul.f32 %v804, %v1162
        %v1164 = vadd.f32 %v1158, %v1163
        %v1165 = vlaneseq
        %v1166 = vshrl.u32 %v1165, 7
        %v1167 = vsub.s32 6, %v1166
        %v1168 = vrot.slane %v474, %v1167
        %v1169 = vmul.f32 %v640, %v1168
        %v1171 = vrot.slane %v1169, 1
        %v1173 = vadd.f32 %v1164, %v1171
        %v1174 = vlaneseq
        %v1175 = vshrl.u32 %v1174, 7
        %v1176 = vsub.s32 7, %v1175
        %v1177 = vrot.slane %v474, %v1176
        %v1178 = vmul.f32 %v721, %v1177
        %v1180 = vrot.slane %v1178, 1
        %v1182 = vadd.f32 %v1173, %v1180
        %v1183 = vlaneseq
        %v1184 = vshrl.u32 %v1183, 7
        %v1185 = vsub.s32 0, %v1184
        %v1186 = vrot.slane %v475, %v1185
        %v1187 = vmul.f32 %v802, %v1186
        %v1189 = vrot.slane %v1187, 1
        %v1191 = vadd.f32 %v1182, %v1189
        %v1193 = vlaneseq
        %v1194 = vshrl.u32 %v1193, 7
        %v1195 = vsub.s32 0, %v1194
        %v1196 = vrot.slane %v476, %v1195
        %v1198 = vadd.f32 %v1191, %v1196
        %v1200 = vlaneseq
        %v1201 = vshrl.u32 %v1200, 7
        %v1202 = vsub.s32 0, %v1201
        %v1203 = vrot.slane %v481, %v1202
        %vm1205 = vcmask 261120
        %v1207 = vsel %vm1205, %v1198, 0
        %1209 = vmatprep.subr.mxu0 0.0
        %1210 = vmatpush1.msra.mxu0 0.0
        %1211 = vmatprep.subr.mxu0 0.0
        %1212 = vmatpush1.msra.mxu0 0.0
        %1213 = vmatprep.subr.mxu0 0.0
        %1214 = vmatpush1.msra.mxu0 0.0
        %1215 = vmatprep.subr.mxu0 0.0
        %1216 = vmatpush1.msra.mxu0 0.0
        %1217 = vmatprep.subr.mxu0 0.0
        %1218 = vmatpush1.msra.mxu0 0.0
        %1219 = vmatprep.subr.mxu0 0.0
        %1220 = vmatpush1.msra.mxu0 0.0
        %1221 = vmatprep.subr.mxu0 0.0
        %1222 = vmatpush1.msra.mxu0 0.0
        %1223 = vmatprep.subr.mxu0 0.0
        %1224 = vmatpush1.msra.mxu0 0.0
        %1225 = vmatprep.subr.mxu0 0.0
        %1226 = vmatpush1.msra.mxu0 0.0
        %1227 = vmatprep.subr.mxu0 0.0
        %1228 = vmatpush1.msra.mxu0 0.0
        %1229 = vmatprep.subr.mxu0 0.0
        %1230 = vmatpush1.msra.mxu0 0.0
        %1231 = vmatprep.subr.mxu0 0.0
        %1232 = vmatpush1.msra.mxu0 0.0
        %1233 = vmatprep.subr.mxu0 0.0
        %1234 = vmatpush1.msra.mxu0 %v480
        %1235 = vmatprep.subr.mxu0 0.0
        %1236 = vmatpush1.msra.mxu0 %v479
        %1237 = vmatprep.subr.mxu0 0.0
        %1238 = vmatpush1.msra.mxu0 %v478
        %1239 = vmatprep.subr.mxu0 0.0
        %1240 = vmatpush1.msra.mxu0 %v477
        %1241 = vmatprep.subr.mxu0 0.0
        %1242 = vmatpush2.msra.mxu0 0.0
        %1243 = vmatprep.subr.mxu0 0.0
        %1244 = vmatpush2.msra.mxu0 0.0
        %1245 = vmatprep.subr.mxu0 0.0
        %1246 = vmatpush2.msra.mxu0 0.0
        %1247 = vmatprep.subr.mxu0 0.0
        %1248 = vmatpush2.msra.mxu0 0.0
        %1249 = vmatprep.subr.mxu0 0.0
        %1250 = vmatpush2.msra.mxu0 0.0
        %1251 = vmatprep.subr.mxu0 0.0
        %1252 = vmatpush2.msra.mxu0 0.0
        %1253 = vmatprep.subr.mxu0 0.0
        %1254 = vmatpush2.msra.mxu0 0.0
        %1255 = vmatprep.subr.mxu0 0.0
        %1256 = vmatpush2.msra.mxu0 0.0
        %1257 = vmatprep.subr.mxu0 0.0
        %1258 = vmatpush2.msra.mxu0 0.0
        %1259 = vmatprep.subr.mxu0 0.0
        %1260 = vmatpush2.msra.mxu0 0.0
        %1261 = vmatprep.subr.mxu0 0.0
        %1262 = vmatpush2.msra.mxu0 0.0
        %1263 = vmatprep.subr.mxu0 0.0
        %1264 = vmatpush2.msra.mxu0 0.0
        %1265 = vmatprep.subr.mxu0 0.0
        %1266 = vmatpush2.msra.mxu0 0.0
        %1267 = vmatprep.subr.mxu0 0.0
        %1268 = vmatpush2.msra.mxu0 0.0
        %1269 = vmatprep.subr.mxu0 0.0
        %1270 = vmatpush2.msra.mxu0 0.0
        %1271 = vmatprep.subr.mxu0 0.0
        %1272 = vmatpush2.msra.mxu0 0.0
        %1273 = vmatprep.mubr.f32.mxu0 0.0
        %1274 = vmatmul.mubr.f32.gmra.mxu0 %v1207
        %v1275 = vpop.f32.mrf.mxu0
        %v1276 = vadd.f32 %v1203, %v1275
        %v1277 = vpop.f32.mrf.mxu0
        %1278 = vdwg.mxu0
        %v1279 = vmax.f32 %v1276, 0.0
        %v1280 = vmul.f32 %v802, %v1132
        %v1281 = vadd.f32 %v1280, 0.0
        %v1282 = vmul.f32 %v883, %v1138
        %v1283 = vadd.f32 %v1281, %v1282
        %v1284 = vmul.f32 %v964, %v1144
        %v1285 = vadd.f32 %v1283, %v1284
        %v1286 = vmul.f32 %v804, %v1150
        %v1287 = vadd.f32 %v1285, %v1286
        %v1288 = vmul.f32 %v885, %v1156
        %v1289 = vadd.f32 %v1287, %v1288
        %v1290 = vmul.f32 %v966, %v1162
        %v1291 = vadd.f32 %v1289, %v1290
        %v1292 = vmul.f32 %v802, %v1168
        %v1294 = vrot.slane %v1292, 1
        %v1296 = vadd.f32 %v1291, %v1294
        %v1297 = vmul.f32 %v883, %v1177
        %v1299 = vrot.slane %v1297, 1
        %v1301 = vadd.f32 %v1296, %v1299
        %v1302 = vmul.f32 %v964, %v1186
        %v1304 = vrot.slane %v1302, 1
        %v1306 = vadd.f32 %v1301, %v1304
        %v1307 = vadd.f32 %v1306, %v1196
        %v1309 = vsel %vm1205, %v1307, 0
        %1311 = vmatprep.subr.mxu0 0.0
        %1312 = vmatpush1.msra.mxu0 0.0
        %1313 = vmatprep.subr.mxu0 0.0
        %1314 = vmatpush1.msra.mxu0 0.0
        %1315 = vmatprep.subr.mxu0 0.0
        %1316 = vmatpush1.msra.mxu0 0.0
        %1317 = vmatprep.subr.mxu0 0.0
        %1318 = vmatpush1.msra.mxu0 0.0
        %1319 = vmatprep.subr.mxu0 0.0
        %1320 = vmatpush1.msra.mxu0 0.0
        %1321 = vmatprep.subr.mxu0 0.0
        %1322 = vmatpush1.msra.mxu0 0.0
        %1323 = vmatprep.subr.mxu0 0.0
        %1324 = vmatpush1.msra.mxu0 0.0
        %1325 = vmatprep.subr.mxu0 0.0
        %1326 = vmatpush1.msra.mxu0 0.0
        %1327 = vmatprep.subr.mxu0 0.0
        %1328 = vmatpush1.msra.mxu0 0.0
        %1329 = vmatprep.subr.mxu0 0.0
        %1330 = vmatpush1.msra.mxu0 0.0
        %1331 = vmatprep.subr.mxu0 0.0
        %1332 = vmatpush1.msra.mxu0 0.0
        %1333 = vmatprep.subr.mxu0 0.0
        %1334 = vmatpush1.msra.mxu0 0.0
        %1335 = vmatprep.subr.mxu0 0.0
        %1336 = vmatpush1.msra.mxu0 %v480
        %1337 = vmatprep.subr.mxu0 0.0
        %1338 = vmatpush1.msra.mxu0 %v479
        %1339 = vmatprep.subr.mxu0 0.0
        %1340 = vmatpush1.msra.mxu0 %v478
        %1341 = vmatprep.subr.mxu0 0.0
        %1342 = vmatpush1.msra.mxu0 %v477
        %1343 = vmatprep.subr.mxu0 0.0
        %1344 = vmatpush2.msra.mxu0 0.0
        %1345 = vmatprep.subr.mxu0 0.0
        %1346 = vmatpush2.msra.mxu0 0.0
        %1347 = vmatprep.subr.mxu0 0.0
        %1348 = vmatpush2.msra.mxu0 0.0
        %1349 = vmatprep.subr.mxu0 0.0
        %1350 = vmatpush2.msra.mxu0 0.0
        %1351 = vmatprep.subr.mxu0 0.0
        %1352 = vmatpush2.msra.mxu0 0.0
        %1353 = vmatprep.subr.mxu0 0.0
        %1354 = vmatpush2.msra.mxu0 0.0
        %1355 = vmatprep.subr.mxu0 0.0
        %1356 = vmatpush2.msra.mxu0 0.0
        %1357 = vmatprep.subr.mxu0 0.0
        %1358 = vmatpush2.msra.mxu0 0.0
        %1359 = vmatprep.subr.mxu0 0.0
        %1360 = vmatpush2.msra.mxu0 0.0
        %1361 = vmatprep.subr.mxu0 0.0
        %1362 = vmatpush2.msra.mxu0 0.0
        %1363 = vmatprep.subr.mxu0 0.0
        %1364 = vmatpush2.msra.mxu0 0.0
        %1365 = vmatprep.subr.mxu0 0.0
        %1366 = vmatpush2.msra.mxu0 0.0
        %1367 = vmatprep.subr.mxu0 0.0
        %1368 = vmatpush2.msra.mxu0 0.0
        %1369 = vmatprep.subr.mxu0 0.0
        %1370 = vmatpush2.msra.mxu0 0.0
        %1371 = vmatprep.subr.mxu0 0.0
        %1372 = vmatpush2.msra.mxu0 0.0
        %1373 = vmatprep.subr.mxu0 0.0
        %1374 = vmatpush2.msra.mxu0 0.0
        %1375 = vmatprep.mubr.f32.mxu0 0.0
        %1376 = vmatmul.mubr.f32.gmra.mxu0 %v1309
        %v1377 = vpop.f32.mrf.mxu0
        %v1378 = vadd.f32 %v1203, %v1377
        %v1379 = vpop.f32.mrf.mxu0
        %1380 = vdwg.mxu0
        %v1381 = vmax.f32 %v1378, 0.0
        %v1383 = vsel %vm1205, %v1381, 0
        %1385 = vmatprep.subr.mxu0 0.0
        %1386 = vmatpush1.msra.mxu0 0.0
        %1387 = vmatprep.subr.mxu0 0.0
        %1388 = vmatpush1.msra.mxu0 0.0
        %1389 = vmatprep.subr.mxu0 0.0
        %1390 = vmatpush1.msra.mxu0 0.0
        %1391 = vmatprep.subr.mxu0 0.0
        %1392 = vmatpush1.msra.mxu0 0.0
        %1393 = vmatprep.subr.mxu0 0.0
        %1394 = vmatpush1.msra.mxu0 0.0
        %1395 = vmatprep.subr.mxu0 0.0
        %1396 = vmatpush1.msra.mxu0 0.0
        %1397 = vmatprep.subr.mxu0 0.0
        %1398 = vmatpush1.msra.mxu0 0.0
        %1399 = vmatprep.subr.mxu0 0.0
        %1400 = vmatpush1.msra.mxu0 0.0
        %1401 = vmatprep.subr.mxu0 0.0
        %1402 = vmatpush1.msra.mxu0 0.0
        %1403 = vmatprep.subr.mxu0 0.0
        %1404 = vmatpush1.msra.mxu0 0.0
        %1405 = vmatprep.subr.mxu0 0.0
        %1406 = vmatpush1.msra.mxu0 0.0
        %1407 = vmatprep.subr.mxu0 0.0
        %1408 = vmatpush1.msra.mxu0 0.0
        %1409 = vmatprep.subr.mxu0 0.0
        %1410 = vmatpush1.msra.mxu0 %v489
        %1411 = vmatprep.subr.mxu0 0.0
        %1412 = vmatpush1.msra.mxu0 %v488
        %1413 = vmatprep.subr.mxu0 0.0
        %1414 = vmatpush1.msra.mxu0 %v487
        %1415 = vmatprep.subr.mxu0 0.0
        %1416 = vmatpush1.msra.mxu0 %v486
        %1417 = vmatprep.subr.mxu0 0.0
        %1418 = vmatpush2.msra.mxu0 0.0
        %1419 = vmatprep.subr.mxu0 0.0
        %1420 = vmatpush2.msra.mxu0 0.0
        %1421 = vmatprep.subr.mxu0 0.0
        %1422 = vmatpush2.msra.mxu0 0.0
        %1423 = vmatprep.subr.mxu0 0.0
        %1424 = vmatpush2.msra.mxu0 0.0
        %1425 = vmatprep.subr.mxu0 0.0
        %1426 = vmatpush2.msra.mxu0 0.0
        %1427 = vmatprep.subr.mxu0 0.0
        %1428 = vmatpush2.msra.mxu0 0.0
        %1429 = vmatprep.subr.mxu0 0.0
        %1430 = vmatpush2.msra.mxu0 0.0
        %1431 = vmatprep.subr.mxu0 0.0
        %1432 = vmatpush2.msra.mxu0 0.0
        %1433 = vmatprep.subr.mxu0 0.0
        %1434 = vmatpush2.msra.mxu0 0.0
        %1435 = vmatprep.subr.mxu0 0.0
        %1436 = vmatpush2.msra.mxu0 0.0
        %1437 = vmatprep.subr.mxu0 0.0
        %1438 = vmatpush2.msra.mxu0 0.0
        %1439 = vmatprep.subr.mxu0 0.0
        %1440 = vmatpush2.msra.mxu0 0.0
        %1441 = vmatprep.subr.mxu0 0.0
        %1442 = vmatpush2.msra.mxu0 0.0
        %1443 = vmatprep.subr.mxu0 0.0
        %1444 = vmatpush2.msra.mxu0 0.0
        %1445 = vmatprep.subr.mxu0 0.0
        %1446 = vmatpush2.msra.mxu0 0.0
        %1447 = vmatprep.subr.mxu0 0.0
        %1448 = vmatpush2.msra.mxu0 0.0
        %1449 = vmatprep.mubr.f32.mxu0 0.0
        %1450 = vmatmul.mubr.f32.gmra.mxu0 %v1383
        %v1451 = vpop.f32.mrf.mxu0
        %v1452 = vadd.f32 0.0, %v1451
        %v1453 = vpop.f32.mrf.mxu0
        %1454 = vdwg.mxu0
        %v1456 = vsel %vm1205, %v1279, 0
        %1458 = vmatprep.subr.mxu0 0.0
        %1459 = vmatpush1.msra.mxu0 0.0
        %1460 = vmatprep.subr.mxu0 0.0
        %1461 = vmatpush1.msra.mxu0 0.0
        %1462 = vmatprep.subr.mxu0 0.0
        %1463 = vmatpush1.msra.mxu0 0.0
        %1464 = vmatprep.subr.mxu0 0.0
        %1465 = vmatpush1.msra.mxu0 0.0
        %1466 = vmatprep.subr.mxu0 0.0
        %1467 = vmatpush1.msra.mxu0 0.0
        %1468 = vmatprep.subr.mxu0 0.0
        %1469 = vmatpush1.msra.mxu0 0.0
        %1470 = vmatprep.subr.mxu0 0.0
        %1471 = vmatpush1.msra.mxu0 0.0
        %1472 = vmatprep.subr.mxu0 0.0
        %1473 = vmatpush1.msra.mxu0 0.0
        %1474 = vmatprep.subr.mxu0 0.0
        %1475 = vmatpush1.msra.mxu0 0.0
        %1476 = vmatprep.subr.mxu0 0.0
        %1477 = vmatpush1.msra.mxu0 0.0
        %1478 = vmatprep.subr.mxu0 0.0
        %1479 = vmatpush1.msra.mxu0 0.0
        %1480 = vmatprep.subr.mxu0 0.0
        %1481 = vmatpush1.msra.mxu0 0.0
        %1482 = vmatprep.subr.mxu0 0.0
        %1483 = vmatpush1.msra.mxu0 %v485
        %1484 = vmatprep.subr.mxu0 0.0
        %1485 = vmatpush1.msra.mxu0 %v484
        %1486 = vmatprep.subr.mxu0 0.0
        %1487 = vmatpush1.msra.mxu0 %v483
        %1488 = vmatprep.subr.mxu0 0.0
        %1489 = vmatpush1.msra.mxu0 %v482
        %1490 = vmatprep.subr.mxu0 0.0
        %1491 = vmatpush2.msra.mxu0 0.0
        %1492 = vmatprep.subr.mxu0 0.0
        %1493 = vmatpush2.msra.mxu0 0.0
        %1494 = vmatprep.subr.mxu0 0.0
        %1495 = vmatpush2.msra.mxu0 0.0
        %1496 = vmatprep.subr.mxu0 0.0
        %1497 = vmatpush2.msra.mxu0 0.0
        %1498 = vmatprep.subr.mxu0 0.0
        %1499 = vmatpush2.msra.mxu0 0.0
        %1500 = vmatprep.subr.mxu0 0.0
        %1501 = vmatpush2.msra.mxu0 0.0
        %1502 = vmatprep.subr.mxu0 0.0
        %1503 = vmatpush2.msra.mxu0 0.0
        %1504 = vmatprep.subr.mxu0 0.0
        %1505 = vmatpush2.msra.mxu0 0.0
        %1506 = vmatprep.subr.mxu0 0.0
        %1507 = vmatpush2.msra.mxu0 0.0
        %1508 = vmatprep.subr.mxu0 0.0
        %1509 = vmatpush2.msra.mxu0 0.0
        %1510 = vmatprep.subr.mxu0 0.0
        %1511 = vmatpush2.msra.mxu0 0.0
        %1512 = vmatprep.subr.mxu0 0.0
        %1513 = vmatpush2.msra.mxu0 0.0
        %1514 = vmatprep.subr.mxu0 0.0
        %1515 = vmatpush2.msra.mxu0 0.0
        %1516 = vmatprep.subr.mxu0 0.0
        %1517 = vmatpush2.msra.mxu0 0.0
        %1518 = vmatprep.subr.mxu0 0.0
        %1519 = vmatpush2.msra.mxu0 0.0
        %1520 = vmatprep.subr.mxu0 0.0
        %1521 = vmatpush2.msra.mxu0 0.0
        %1522 = vmatprep.mubr.f32.mxu0 0.0
        %1523 = vmatmul.mubr.f32.gmra.mxu0 %v1456
        %v1524 = vpop.f32.mrf.mxu0
        %v1525 = vadd.f32 %v1452, %v1524
        %v1526 = vpop.f32.mrf.mxu0
        %1527 = vdwg.mxu0
        %v1528 = vmul.f32 %v964, %v1132
        %v1529 = vadd.f32 %v1528, 0.0
        %v1530 = vmul.f32 %v1045, %v1138
        %v1531 = vadd.f32 %v1529, %v1530
        %v1532 = vmul.f32 %v1126, %v1144
        %v1533 = vadd.f32 %v1531, %v1532
        %v1534 = vmul.f32 %v966, %v1150
        %v1535 = vadd.f32 %v1533, %v1534
        %v1536 = vmul.f32 %v1047, %v1156
        %v1537 = vadd.f32 %v1535, %v1536
        %v1538 = vmul.f32 %v1128, %v1162
        %v1539 = vadd.f32 %v1537, %v1538
        %v1540 = vmul.f32 %v964, %v1168
        %v1542 = vrot.slane %v1540, 1
        %v1544 = vadd.f32 %v1539, %v1542
        %v1545 = vmul.f32 %v1045, %v1177
        %v1547 = vrot.slane %v1545, 1
        %v1549 = vadd.f32 %v1544, %v1547
        %v1550 = vmul.f32 %v1126, %v1186
        %v1552 = vrot.slane %v1550, 1
        %v1554 = vadd.f32 %v1549, %v1552
        %v1555 = vadd.f32 %v1554, %v1196
        %v1557 = vsel %vm1205, %v1555, 0
        %1559 = vmatprep.subr.mxu0 0.0
        %1560 = vmatpush1.msra.mxu0 0.0
        %1561 = vmatprep.subr.mxu0 0.0
        %1562 = vmatpush1.msra.mxu0 0.0
        %1563 = vmatprep.subr.mxu0 0.0
        %1564 = vmatpush1.msra.mxu0 0.0
        %1565 = vmatprep.subr.mxu0 0.0
        %1566 = vmatpush1.msra.mxu0 0.0
        %1567 = vmatprep.subr.mxu0 0.0
        %1568 = vmatpush1.msra.mxu0 0.0
        %1569 = vmatprep.subr.mxu0 0.0
        %1570 = vmatpush1.msra.mxu0 0.0
        %1571 = vmatprep.subr.mxu0 0.0
        %1572 = vmatpush1.msra.mxu0 0.0
        %1573 = vmatprep.subr.mxu0 0.0
        %1574 = vmatpush1.msra.mxu0 0.0
        %1575 = vmatprep.subr.mxu0 0.0
        %1576 = vmatpush1.msra.mxu0 0.0
        %1577 = vmatprep.subr.mxu0 0.0
        %1578 = vmatpush1.msra.mxu0 0.0
        %1579 = vmatprep.subr.mxu0 0.0
        %1580 = vmatpush1.msra.mxu0 0.0
        %1581 = vmatprep.subr.mxu0 0.0
        %1582 = vmatpush1.msra.mxu0 0.0
        %1583 = vmatprep.subr.mxu0 0.0
        %1584 = vmatpush1.msra.mxu0 %v480
        %1585 = vmatprep.subr.mxu0 0.0
        %1586 = vmatpush1.msra.mxu0 %v479
        %1587 = vmatprep.subr.mxu0 0.0
        %1588 = vmatpush1.msra.mxu0 %v478
        %1589 = vmatprep.subr.mxu0 0.0
        %1590 = vmatpush1.msra.mxu0 %v477
        %1591 = vmatprep.subr.mxu0 0.0
        %1592 = vmatpush2.msra.mxu0 0.0
        %1593 = vmatprep.subr.mxu0 0.0
        %1594 = vmatpush2.msra.mxu0 0.0
        %1595 = vmatprep.subr.mxu0 0.0
        %1596 = vmatpush2.msra.mxu0 0.0
        %1597 = vmatprep.subr.mxu0 0.0
        %1598 = vmatpush2.msra.mxu0 0.0
        %1599 = vmatprep.subr.mxu0 0.0
        %1600 = vmatpush2.msra.mxu0 0.0
        %1601 = vmatprep.subr.mxu0 0.0
        %1602 = vmatpush2.msra.mxu0 0.0
        %1603 = vmatprep.subr.mxu0 0.0
        %1604 = vmatpush2.msra.mxu0 0.0
        %1605 = vmatprep.subr.mxu0 0.0
        %1606 = vmatpush2.msra.mxu0 0.0
        %1607 = vmatprep.subr.mxu0 0.0
        %1608 = vmatpush2.msra.mxu0 0.0
        %1609 = vmatprep.subr.mxu0 0.0
        %1610 = vmatpush2.msra.mxu0 0.0
        %1611 = vmatprep.subr.mxu0 0.0
        %1612 = vmatpush2.msra.mxu0 0.0
        %1613 = vmatprep.subr.mxu0 0.0
        %1614 = vmatpush2.msra.mxu0 0.0
        %1615 = vmatprep.subr.mxu0 0.0
        %1616 = vmatpush2.msra.mxu0 0.0
        %1617 = vmatprep.subr.mxu0 0.0
        %1618 = vmatpush2.msra.mxu0 0.0
        %1619 = vmatprep.subr.mxu0 0.0
        %1620 = vmatpush2.msra.mxu0 0.0
        %1621 = vmatprep.subr.mxu0 0.0
        %1622 = vmatpush2.msra.mxu0 0.0
        %1623 = vmatprep.mubr.f32.mxu0 0.0
        %1624 = vmatmul.mubr.f32.gmra.mxu0 %v1557
        %v1625 = vpop.f32.mrf.mxu0
        %v1626 = vadd.f32 %v1203, %v1625
        %v1627 = vpop.f32.mrf.mxu0
        %1628 = vdwg.mxu0
        %v1629 = vmax.f32 %v1626, 0.0
        %v1631 = vsel %vm1205, %v1629, 0
        %1633 = vmatprep.subr.mxu0 0.0
        %1634 = vmatpush1.msra.mxu0 0.0
        %1635 = vmatprep.subr.mxu0 0.0
        %1636 = vmatpush1.msra.mxu0 0.0
        %1637 = vmatprep.subr.mxu0 0.0
        %1638 = vmatpush1.msra.mxu0 0.0
        %1639 = vmatprep.subr.mxu0 0.0
        %1640 = vmatpush1.msra.mxu0 0.0
        %1641 = vmatprep.subr.mxu0 0.0
        %1642 = vmatpush1.msra.mxu0 0.0
        %1643 = vmatprep.subr.mxu0 0.0
        %1644 = vmatpush1.msra.mxu0 0.0
        %1645 = vmatprep.subr.mxu0 0.0
        %1646 = vmatpush1.msra.mxu0 0.0
        %1647 = vmatprep.subr.mxu0 0.0
        %1648 = vmatpush1.msra.mxu0 0.0
        %1649 = vmatprep.subr.mxu0 0.0
        %1650 = vmatpush1.msra.mxu0 0.0
        %1651 = vmatprep.subr.mxu0 0.0
        %1652 = vmatpush1.msra.mxu0 0.0
        %1653 = vmatprep.subr.mxu0 0.0
        %1654 = vmatpush1.msra.mxu0 0.0
        %1655 = vmatprep.subr.mxu0 0.0
        %1656 = vmatpush1.msra.mxu0 0.0
        %1657 = vmatprep.subr.mxu0 0.0
        %1658 = vmatpush1.msra.mxu0 %v493
        %1659 = vmatprep.subr.mxu0 0.0
        %1660 = vmatpush1.msra.mxu0 %v492
        %1661 = vmatprep.subr.mxu0 0.0
        %1662 = vmatpush1.msra.mxu0 %v491
        %1663 = vmatprep.subr.mxu0 0.0
        %1664 = vmatpush1.msra.mxu0 %v490
        %1665 = vmatprep.subr.mxu0 0.0
        %1666 = vmatpush2.msra.mxu0 0.0
        %1667 = vmatprep.subr.mxu0 0.0
        %1668 = vmatpush2.msra.mxu0 0.0
        %1669 = vmatprep.subr.mxu0 0.0
        %1670 = vmatpush2.msra.mxu0 0.0
        %1671 = vmatprep.subr.mxu0 0.0
        %1672 = vmatpush2.msra.mxu0 0.0
        %1673 = vmatprep.subr.mxu0 0.0
        %1674 = vmatpush2.msra.mxu0 0.0
        %1675 = vmatprep.subr.mxu0 0.0
        %1676 = vmatpush2.msra.mxu0 0.0
        %1677 = vmatprep.subr.mxu0 0.0
        %1678 = vmatpush2.msra.mxu0 0.0
        %1679 = vmatprep.subr.mxu0 0.0
        %1680 = vmatpush2.msra.mxu0 0.0
        %1681 = vmatprep.subr.mxu0 0.0
        %1682 = vmatpush2.msra.mxu0 0.0
        %1683 = vmatprep.subr.mxu0 0.0
        %1684 = vmatpush2.msra.mxu0 0.0
        %1685 = vmatprep.subr.mxu0 0.0
        %1686 = vmatpush2.msra.mxu0 0.0
        %1687 = vmatprep.subr.mxu0 0.0
        %1688 = vmatpush2.msra.mxu0 0.0
        %1689 = vmatprep.subr.mxu0 0.0
        %1690 = vmatpush2.msra.mxu0 0.0
        %1691 = vmatprep.subr.mxu0 0.0
        %1692 = vmatpush2.msra.mxu0 0.0
        %1693 = vmatprep.subr.mxu0 0.0
        %1694 = vmatpush2.msra.mxu0 0.0
        %1695 = vmatprep.subr.mxu0 0.0
        %1696 = vmatpush2.msra.mxu0 0.0
        %1697 = vmatprep.mubr.f32.mxu0 0.0
        %1698 = vmatmul.mubr.f32.gmra.mxu0 %v1631
        %v1699 = vpop.f32.mrf.mxu0
        %v1700 = vadd.f32 0.0, %v1699
        %v1701 = vpop.f32.mrf.mxu0
        %1702 = vdwg.mxu0
        %v1703 = vadd.f32 %v1525, %v1700
        %v1705 = vlaneseq
        %v1706 = vshrl.u32 %v1705, 7
        %v1707 = vsub.s32 0, %v1706
        %v1708 = vrot.slane %v494, %v1707
        %v1710 = vadd.f32 %v1703, %v1708
        %v1711 = vmul.f32 %v1710, 5.656854
        %v1712 = vadd.f32 %v1711, %v495
        %vm1713 = vcmask 254976
        %1714 = vst.msk [vmem:[%s466] sm:$0x3] %vm1713, %v1712
        %s1715 = sand.u32 %s273, 1
        %s1716 = scalar_lea.sflag [#allocation4], %s1715
        %s1717 = sand.u32 %s273, 1
        %s1718 = smul.addr %s1717, 2
        %s1719 = scalar_lea.vmem [#allocation11], %s1718
        // Predicated region
        $region81: #{tpu_custom_call.1} parent=59 // pred_check
          %p1720 = pneg %p283
        $region82: #{tpu_custom_call.1} parent=59 // pred_check_branch
          %1722 = sbr.rel (%p1720) target = $region84
        $region83: #{tpu_custom_call.1} parent=59 // pred_region
          %s1724 = ssub.s32 32, 32
          %1725 = vsyncadd %s1716, %s1724
          %s1726 = smul.addr %s33, 2
          %s1727 = sadd.s32 %s34, %s1726
          %s1728 = smul.addr %s1727, 32
          %s1729 = scalar_lea.hbm %s10, %s1728
          %s1731 = sshll.u32 %s1719, 4
          %s1732 = int_to_ptr.vmem [resolvable:$true] %s1731
          %1734 = dma.vmem_to_hbm [thread:$0]  %s1732, 32, %s1729, %s1716
        $region84: #{tpu_custom_call.1} parent=59 // pred_fallthru
          _
      $region60: #{tpu_custom_call.1} parent=5 // pred_fallthru
        _
      %p1735 = scmp.le.s32.totalorder 2, %s24
      // Predicated region
      $region85: #{tpu_custom_call.1} parent=5 // pred_check
        %p1736 = pneg %p1735
      $region86: #{tpu_custom_call.1} parent=5 // pred_check_branch
        %1738 = sbr.rel (%p1736) target = $region88
      $region87: #{tpu_custom_call.1} parent=5 // pred_region
        %s1739 = ssub.s32 %s24, 2
        // Predicated region
        $region89: #{tpu_custom_call.1} parent=87 // pred_check
          %p1740 = pneg %p289
        $region90: #{tpu_custom_call.1} parent=87 // pred_check_branch
          %1742 = sbr.rel (%p1740) target = $region92
        $region91: #{tpu_custom_call.1} parent=87 // pred_region
          %s1743 = sand.u32 %s274, 1
          %s1744 = scalar_lea.sflag [#allocation4], %s1743
          %s1745 = sand.u32 %s274, 1
          %s1746 = smul.addr %s1745, 2
          %s1747 = scalar_lea.vmem [#allocation11], %s1746
          %1748 = dma.done %s1744, 32
        $region92: #{tpu_custom_call.1} parent=87 // pred_fallthru
          _
      $region88: #{tpu_custom_call.1} parent=5 // pred_fallthru
        _
    $region6: #{tpu_custom_call.1} parent=1 // loop_footer
      %s28 = sadd.s32 1, %s24
    $region7: #{tpu_custom_call.1} parent=1 // loop_footer_branch
      %23 = sbr.rel target = $region3
    $region8: #{tpu_custom_call.1} parent=1 // loop_exit
      _
    %1749 = vsyncpa [#allocation3], 1
    %s1750 = scalar_lea.sflag [#allocation3], 1
    %1751 = vsyncpa %s1750, 1
    %1752 = vsyncpa [#allocation6], 1
    %1753 = vsyncpa [#allocation9], 1
    %1754 = vsyncpa [#allocation4], 1
    %s1755 = scalar_lea.sflag [#allocation4], 1
    %1756 = vsyncpa %s1755, 1

</llo_original>
